<compile_context>
chip_gen: v7x
topology: tpu7x:2x2x1
jax: 0.10.0
libtpu: 0.0.40
codegen_flags: <defaults>
</compile_context>

<pallas_src>
import functools

import numpy as np
import jax
import jax.numpy as jnp
from jax import lax
from jax.experimental import pallas as pl
from jax.experimental.pallas import tpu as pltpu


# ----------------------------------------------------------------------------
# Fused Pallas kernel: all conv layers, all (batch * period) columns at once.
# ----------------------------------------------------------------------------
def _fused_disc_kernel(*refs, cfg):
    """Fused forward of all conv layers.

    refs = [x2d, (w_l, b_l) for each layer, o_0..o_{L-1}, stage buffers]
      x2d     : (H, N*Cin0) f32     folded input (T already padded, no H pad)
      w_l     : (K_l, N*Cin_l, N*Cout_l) bf16 block-diag (kron over columns)
      b_l     : (1, N*Cout_l) f32   column-tiled bias
      o_l     : (Hout_l + 2*opad_l, N*Cout_l) f32 per-layer output; when the
                next layer has stride 1 it is emitted zero-padded (opad_l>0)
                so that layer reads taps from it directly.
      stage_* : f32 VMEM scratch: layer-0 reflect-padded input, plus one
                phase-split zero-padded buffer per strided layer.
    """
    L = len(cfg)
    x2d = refs[0]
    w = [refs[1 + 2 * l] for l in range(L)]
    b = [refs[2 + 2 * l] for l in range(L)]
    o = list(refs[1 + 2 * L:1 + 3 * L])
    stages = list(refs[1 + 3 * L:])

    def conv_layer(l, src):
        c = cfg[l]
        K, S, Hout, rpp = c["K"], c["S"], c["Hout"], c["rpp"]
        acc = None
        for k in range(K):                        # static unroll over taps
            # phase-major row offset (== k when S == 1): contiguous slice
            row0 = (k % S) * rpp + (k // S)
            xk = src[pl.ds(row0, Hout), :].astype(jnp.bfloat16)
            part = jnp.dot(xk, w[l][k], preferred_element_type=jnp.float32)
            acc = part if acc is None else acc + part
        acc = acc + b[l][...]                     # bias folded into epilogue
        if c["leaky"]:
            acc = jnp.maximum(acc, 0.2 * acc)     # LeakyReLU(0.2) as one max
        opad = c["opad"]
        if opad:
            # next layer is stride-1: emit the activation already zero-padded
            # along H so it can read taps directly (no staging / readback).
            zeros = jnp.zeros((opad, c["Wout"]), jnp.float32)
            o[l][pl.ds(0, opad), :] = zeros
            o[l][pl.ds(opad + Hout, opad), :] = zeros
            o[l][pl.ds(opad, Hout), :] = acc
        else:
            o[l][...] = acc

    # -------- layer 0: reflection pad along H done in VMEM ------------------
    c0 = cfg[0]
    pad0, H0 = c0["pad"], c0["Hin"]
    s0 = stages[c0["stage_idx"]]
    s0[pl.ds(pad0, H0), :] = x2d[...]
    for j in range(pad0):                         # reflect rows (static)
        s0[pl.ds(pad0 - 1 - j, 1), :] = x2d[pl.ds(j + 1, 1), :]
        s0[pl.ds(pad0 + H0 + j, 1), :] = x2d[pl.ds(H0 - 2 - j, 1), :]
    conv_layer(0, s0)

    # -------- remaining layers ----------------------------------------------
    for l in range(1, L):
        c = cfg[l]
        si = c["stage_idx"]
        if si is None:
            # stride-1 layer: previous output is already zero-padded along H
            conv_layer(l, o[l - 1])
        else:
            # strided layer: phase-split zero-padded staging (only the pad /
            # tail rows that are actually read as zeros get zero-filled)
            S, pad, Hin, rpp, Win = c["S"], c["pad"], c["Hin"], c["rpp"], c["Win"]
            scr = stages[si]
            lead = pad // S
            prev = o[l - 1]
            for p in range(S):
                cnt = (Hin - p + S - 1) // S
                tail = rpp - lead - cnt
                if lead > 0:
                    scr[pl.ds(p * rpp, lead), :] = (
                        jnp.zeros((lead, Win), jnp.float32))
                if tail > 0:
                    scr[pl.ds(p * rpp + lead + cnt, tail), :] = (
                        jnp.zeros((tail, Win), jnp.float32))
                # de-interleave once per phase so every tap read above is a
                # contiguous slice (strided f32 ref read: proven lowering)
                scr[pl.ds(p * rpp + lead, cnt), :] = prev[pl.ds(p, cnt, stride=S), :]
            conv_layer(l, scr)


# ----------------------------------------------------------------------------
# Parameter construction (deterministic, matches PyTorch __init__ shapes)
# ----------------------------------------------------------------------------
def to_full_weight(wt, groups):
    """(Cout, Cin_g, K, 1) torch-layout grouped weight -> block-diag (K, Cin, Cout)."""
    wt = np.asarray(wt)
    Cout, Cin_g, K, _ = wt.shape
    Cin = Cin_g * groups
    Cout_g = Cout // groups
    w_full = np.zeros((K, Cin, Cout), np.float32)
    for g in range(groups):
        blk = wt[g * Cout_g:(g + 1) * Cout_g, :, :, 0]  # (Cout_g, Cin_g, K)
        w_full[:, g * Cin_g:(g + 1) * Cin_g,
               g * Cout_g:(g + 1) * Cout_g] = blk.transpose(2, 1, 0)
    return jnp.asarray(w_full)


def build_layers(key, in_channels=1, out_channels=1, kernel_sizes=(5, 3),
                 channels=4, max_downsample_channels=16,
                 downsample_scales=(2, 2)):
    assert kernel_sizes[0] % 2 == 1 and kernel_sizes[1] % 2 == 1
    keys = jax.random.split(key, 2 * (len(downsample_scales) + 3))
    ki = [0]

    def draw(shape):
        w = 0.1 * jax.random.normal(keys[ki[0]], shape, jnp.float32)
        ki[0] += 1
        return w

    layers = []
    k_first = int(np.prod(kernel_sizes))

    # layer 0: ReflectionPad2d((0,0,p,p)) + Conv2d(in, channels, (k_first,1)) + LeakyReLU
    wt = draw((channels, in_channels, k_first, 1))
    bt = draw((channels,))
    layers.append(dict(w=to_full_weight(wt, 1), b=bt, wt=wt, groups=1,
                       stride=1, pad=(k_first - 1) // 2, pad_mode="reflect",
                       leaky=True))

    # downsample layers
    in_chs = channels
    for ds in downsample_scales:
        out_chs = min(in_chs * ds, max_downsample_channels)
        group = in_chs // 4
        kk, ss, pp = ds * 10 + 1, ds, ds * 5
        wt = draw((out_chs, in_chs // group, kk, 1))
        bt = draw((out_chs,))
        layers.append(dict(w=to_full_weight(wt, group), b=bt, wt=wt,
                           groups=group, stride=ss, pad=pp,
                           pad_mode="constant", leaky=True))
        in_chs = out_chs

    # second-to-last layer: Conv2d(out_chs, out_chs, (k0,1), pad) + LeakyReLU
    wt = draw((in_chs, in_chs, kernel_sizes[0], 1))
    bt = draw((in_chs,))
    layers.append(dict(w=to_full_weight(wt, 1), b=bt, wt=wt, groups=1,
                       stride=1, pad=(kernel_sizes[0] - 1) // 2,
                       pad_mode="constant", leaky=True))

    # last layer: Conv2d(out_chs, out_channels, (k1,1), pad), no activation
    wt = draw((out_channels, in_chs, kernel_sizes[1], 1))
    bt = draw((out_channels,))
    layers.append(dict(w=to_full_weight(wt, 1), b=bt, wt=wt, groups=1,
                       stride=1, pad=(kernel_sizes[1] - 1) // 2,
                       pad_mode="constant", leaky=False))
    return layers


# ----------------------------------------------------------------------------
# Fused forward builder -> jitted fn returning PyTorch-style flattened outputs
# ----------------------------------------------------------------------------
# TODO(synk): use_cond speaker-conditioning concat path not implemented
# (module default is use_cond=False, dim_spk=0).
def build_forward(layers, period, x_shape):
    B, ch, T = x_shape
    n_pad_t = 0 if T % period == 0 else period - T % period
    H = (T + n_pad_t) // period
    N = B * period

    assert layers[0]["pad_mode"] == "reflect" and layers[0]["stride"] == 1
    for lyr in layers[1:]:
        assert lyr["pad_mode"] == "constant"

    # static per-layer geometry
    cfg = []
    Hin, Cin = H, ch
    for lyr in layers:
        K, _, Cout = lyr["w"].shape
        S, pad = lyr["stride"], lyr["pad"]
        Hp = Hin + 2 * pad
        Hout = (Hp - K) // S + 1
        rpp = -(-Hp // S)  # rows per phase in a phase-split staged buffer
        cfg.append(dict(K=K, S=S, pad=pad, Hin=Hin, Hp=Hp, Hout=Hout, rpp=rpp,
                        Win=N * Cin, Wout=N * Cout, leaky=lyr["leaky"]))
        Hin, Cin = Hout, Cout

    # staging / padded-output plan
    #  * layer 0: always staged (in-kernel reflect pad)
    #  * stride>1 layers: phase-split staging (pad % stride == 0 assumed, holds
    #    structurally since pad = 5*ds and stride = ds)
    #  * stride==1 layers: read directly from the previous layer's output,
    #    which is emitted zero-padded (opad rows) by its producer
    stage_count = 0
    for l, c in enumerate(cfg):
        c["opad"] = 0
    for l, c in enumerate(cfg):
        if l == 0:
            assert c["pad"] <= c["Hin"] - 1, "reflection pad requires pad < H"
            c["stage_idx"] = stage_count
            c["stage_rows"] = c["Hp"]
            stage_count += 1
        elif c["S"] > 1:
            assert c["pad"] % c["S"] == 0, \
                "phase-split staging assumes pad % stride == 0"
            c["stage_idx"] = stage_count
            c["stage_rows"] = c["S"] * c["rpp"]
            stage_count += 1
        else:
            c["stage_idx"] = None
            c["stage_rows"] = 0
            cfg[l - 1]["opad"] = c["pad"]

    # host-side weight expansion: block-diagonal kron over the N folded
    # (batch*period) columns, stored in bf16 (halves VMEM + DMA + per-tap vld).
    wbig, bbig = [], []
    for lyr in layers:
        wf = np.asarray(lyr["w"], np.float32)            # (K, Cin, Cout)
        K, Ci, Co = wf.shape
        wb = np.zeros((K, N * Ci, N * Co), np.float32)
        for n in range(N):
            wb[:, n * Ci:(n + 1) * Ci, n * Co:(n + 1) * Co] = wf
        wbig.append(jnp.asarray(wb, dtype=jnp.bfloat16))
        bbig.append(jnp.asarray(
            np.tile(np.asarray(lyr["b"], np.float32), N).reshape(1, N * Co)))

    # kron(I_N, W) grows as N^2: guard the VMEM budget explicitly.
    w_bytes = sum(int(w.size) * 2 for w in wbig)
    assert w_bytes < 24 * 2 ** 20, (
        "kron(I_N, W) weights too large for VMEM; "
        "TODO(synk): tile the batch*period column dim with a parallel grid axis")

    L = len(cfg)
    vmem = pltpu.MemorySpace.VMEM

    out_shapes = tuple(
        jax.ShapeDtypeStruct((c["Hout"] + 2 * c["opad"], c["Wout"]), jnp.float32)
        for c in cfg)
    scratch_shapes = [pltpu.VMEM((c["stage_rows"], c["Win"]), jnp.float32)
                      for c in cfg if c["stage_idx"] is not None]

    # advisory cost estimate + explicit scoped-VMEM limit
    flops = sum(2 * c["K"] * c["Hout"] * c["Win"] * c["Wout"] for c in cfg)
    out_bytes = sum((c["Hout"] + 2 * c["opad"]) * c["Wout"] * 4 for c in cfg)
    in_bytes = (H * N * ch * 4 + w_bytes
                + sum(int(b.size) * 4 for b in bbig))
    stage_bytes = sum(c["stage_rows"] * c["Win"] * 4 for c in cfg)
    vmem_need = in_bytes + out_bytes + stage_bytes
    vmem_limit = int(min(96 * 2 ** 20, max(16 * 2 ** 20, 4 * vmem_need)))

    fused = pl.pallas_call(
        functools.partial(_fused_disc_kernel, cfg=cfg),
        out_shape=out_shapes,
        in_specs=[pl.BlockSpec(memory_space=vmem)] * (1 + 2 * L),
        out_specs=tuple(pl.BlockSpec(memory_space=vmem) for _ in range(L)),
        scratch_shapes=scratch_shapes,
        compiler_params=pltpu.CompilerParams(vmem_limit_bytes=vmem_limit),
        cost_estimate=pl.CostEstimate(flops=flops, transcendentals=0,
                                      bytes_accessed=in_bytes + out_bytes),
    )

    def forward(x):
        # TODO(synk): the conditional T-reflect pad and the (B,ch,T)->(H,N*ch)
        # fold still run as (jit-fused) wrapper ops; the H reflect pad is now
        # done inside the kernel.
        if n_pad_t:
            x = jnp.pad(x, ((0, 0), (0, 0), (0, n_pad_t)), mode="reflect")
        # (B, ch, H*P) -> (B, ch, H, P) -> (H, B, P, ch) -> (H, N*ch)
        x2d = jnp.transpose(x.reshape(B, ch, H, period),
                            (2, 0, 3, 1)).reshape(H, N * ch)
        args = [x2d]
        for wl, bl in zip(wbig, bbig):
            args += [wl, bl]
        outs2d = fused(*args)
        # back to PyTorch flatten(1, -1) order: (B, C, H, P) -> (B, C*H*P)
        outs = []
        for ol, c in zip(outs2d, cfg):
            if c["opad"]:
                ol = ol[c["opad"]:c["opad"] + c["Hout"]]
            Co = c["Wout"] // N
            o4 = ol.reshape(c["Hout"], B, period, Co)
            outs.append(jnp.transpose(o4, (1, 3, 0, 2)).reshape(B, -1))
        return outs

    return jax.jit(forward)


# ----------------------------------------------------------------------------
# Pure-JAX reference (NCHW, lax.conv) for correctness verification
# ----------------------------------------------------------------------------
def reference_forward(x, layers, period):
    B, ch, T = x.shape
    if T % period != 0:
        n_pad = period - T % period
        x = jnp.pad(x, ((0, 0), (0, 0), (0, n_pad)), mode="reflect")
        T = T + n_pad
    x = x.reshape(B, ch, T // period, period)
    outs = []
    for lyr in layers:
        pp = lyr["pad"]
        if lyr["pad_mode"] == "reflect":
            x = jnp.pad(x, ((0, 0), (0, 0), (pp, pp), (0, 0)), mode="reflect")
            pad_arg = ((0, 0), (0, 0))
        else:
            pad_arg = ((pp, pp), (0, 0))
        x = lax.conv_general_dilated(
            x, lyr["wt"], window_strides=(lyr["stride"], 1), padding=pad_arg,
            dimension_numbers=("NCHW", "OIHW", "NCHW"),
            feature_group_count=lyr["groups"],
            precision=jax.lax.Precision.HIGHEST)
        x = x + lyr["b"].reshape(1, -1, 1, 1)
        if lyr["leaky"]:
            x = jnp.where(x >= 0.0, x, 0.2 * x)
        outs.append(x.reshape(B, -1))
    return outs


if __name__ == "__main__":
    period = 4
    B, T = 2, 62  # T % period != 0 -> exercises the initial reflect-pad path
    key = jax.random.PRNGKey(0)
    kx, kp = jax.random.split(key)
    x = jax.random.normal(kx, (B, 1, T), jnp.float32)

    layers = build_layers(kp, in_channels=1, out_channels=1,
                          kernel_sizes=(5, 3), channels=4,
                          max_downsample_channels=16,
                          downsample_scales=(2, 2))

    forward = build_forward(layers, period, x.shape)
    outs = forward(x)
    outs = [jax.block_until_ready(o) for o in outs]

    refs = reference_forward(x, layers, period)
    for o, r in zip(outs, refs):
        # bf16 kron weights + bf16 MXU operands (f32 accumulate) vs f32 HIGHEST
        # reference: tolerance widened accordingly (per the perf review).
        np.testing.assert_allclose(np.asarray(o), np.asarray(r),
                                   rtol=2e-2, atol=2e-2)

    print("KERNEL_OK")
</pallas_src>

<mosaic_0001>
module attributes {stable_mosaic.version = 11 : i64} {
  func.func @_fused_disc_kernel(%arg0: memref<16x8xf32, #tpu.memory_space<vmem>>, %arg1: memref<15x8x32xbf16, #tpu.memory_space<vmem>>, %arg2: memref<1x32xf32, #tpu.memory_space<vmem>>, %arg3: memref<21x32x64xbf16, #tpu.memory_space<vmem>>, %arg4: memref<1x64xf32, #tpu.memory_space<vmem>>, %arg5: memref<21x64x128xbf16, #tpu.memory_space<vmem>>, %arg6: memref<1x128xf32, #tpu.memory_space<vmem>>, %arg7: memref<5x128x128xbf16, #tpu.memory_space<vmem>>, %arg8: memref<1x128xf32, #tpu.memory_space<vmem>>, %arg9: memref<3x128x8xbf16, #tpu.memory_space<vmem>>, %arg10: memref<1x8xf32, #tpu.memory_space<vmem>>, %arg11: memref<16x32xf32, #tpu.memory_space<vmem>>, %arg12: memref<8x64xf32, #tpu.memory_space<vmem>>, %arg13: memref<8x128xf32, #tpu.memory_space<vmem>>, %arg14: memref<6x128xf32, #tpu.memory_space<vmem>>, %arg15: memref<4x8xf32, #tpu.memory_space<vmem>>, %arg16: memref<30x8xf32, #tpu.memory_space<vmem>>, %arg17: memref<36x32xf32, #tpu.memory_space<vmem>>, %arg18: memref<28x64xf32, #tpu.memory_space<vmem>>) attributes {dimension_semantics = [], scalar_prefetch = 0 : i64, scratch_operands = 3 : i64, tpu.core_type = #tpu.core_type<tc>} {
    %c0 = arith.constant 0 : index
    %c0_0 = arith.constant 0 : index
    %0 = vector.load %arg0[%c0, %c0_0] : memref<16x8xf32, #tpu.memory_space<vmem>>, vector<16x8xf32>
    %c7 = arith.constant 7 : index
    %c0_1 = arith.constant 0 : index
    %1 = vector.load %arg16[%c7, %c0_1] : memref<30x8xf32, #tpu.memory_space<vmem>>, vector<16x8xf32>
    tpu.vector_store %arg16[%c7, %c0_1], %0 {strides = array<i32>} : memref<30x8xf32, #tpu.memory_space<vmem>>, vector<16x8xf32>,
    %c1 = arith.constant 1 : index
    %c0_2 = arith.constant 0 : index
    %2 = vector.load %arg0[%c1, %c0_2] : memref<16x8xf32, #tpu.memory_space<vmem>>, vector<1x8xf32>
    %c6 = arith.constant 6 : index
    %c0_3 = arith.constant 0 : index
    %3 = vector.load %arg16[%c6, %c0_3] : memref<30x8xf32, #tpu.memory_space<vmem>>, vector<1x8xf32>
    tpu.vector_store %arg16[%c6, %c0_3], %2 {strides = array<i32>} : memref<30x8xf32, #tpu.memory_space<vmem>>, vector<1x8xf32>,
    %c14 = arith.constant 14 : index
    %c0_4 = arith.constant 0 : index
    %4 = vector.load %arg0[%c14, %c0_4] : memref<16x8xf32, #tpu.memory_space<vmem>>, vector<1x8xf32>
    %c23 = arith.constant 23 : index
    %c0_5 = arith.constant 0 : index
    %5 = vector.load %arg16[%c23, %c0_5] : memref<30x8xf32, #tpu.memory_space<vmem>>, vector<1x8xf32>
    tpu.vector_store %arg16[%c23, %c0_5], %4 {strides = array<i32>} : memref<30x8xf32, #tpu.memory_space<vmem>>, vector<1x8xf32>,
    %c2 = arith.constant 2 : index
    %c0_6 = arith.constant 0 : index
    %6 = vector.load %arg0[%c2, %c0_6] : memref<16x8xf32, #tpu.memory_space<vmem>>, vector<1x8xf32>
    %c5 = arith.constant 5 : index
    %c0_7 = arith.constant 0 : index
    %7 = vector.load %arg16[%c5, %c0_7] : memref<30x8xf32, #tpu.memory_space<vmem>>, vector<1x8xf32>
    tpu.vector_store %arg16[%c5, %c0_7], %6 {strides = array<i32>} : memref<30x8xf32, #tpu.memory_space<vmem>>, vector<1x8xf32>,
    %c13 = arith.constant 13 : index
    %c0_8 = arith.constant 0 : index
    %8 = vector.load %arg0[%c13, %c0_8] : memref<16x8xf32, #tpu.memory_space<vmem>>, vector<1x8xf32>
    %c24 = arith.constant 24 : index
    %c0_9 = arith.constant 0 : index
    %9 = vector.load %arg16[%c24, %c0_9] : memref<30x8xf32, #tpu.memory_space<vmem>>, vector<1x8xf32>
    tpu.vector_store %arg16[%c24, %c0_9], %8 {strides = array<i32>} : memref<30x8xf32, #tpu.memory_space<vmem>>, vector<1x8xf32>,
    %c3 = arith.constant 3 : index
    %c0_10 = arith.constant 0 : index
    %10 = vector.load %arg0[%c3, %c0_10] : memref<16x8xf32, #tpu.memory_space<vmem>>, vector<1x8xf32>
    %c4 = arith.constant 4 : index
    %c0_11 = arith.constant 0 : index
    %11 = vector.load %arg16[%c4, %c0_11] : memref<30x8xf32, #tpu.memory_space<vmem>>, vector<1x8xf32>
    tpu.vector_store %arg16[%c4, %c0_11], %10 {strides = array<i32>} : memref<30x8xf32, #tpu.memory_space<vmem>>, vector<1x8xf32>,
    %c12 = arith.constant 12 : index
    %c0_12 = arith.constant 0 : index
    %12 = vector.load %arg0[%c12, %c0_12] : memref<16x8xf32, #tpu.memory_space<vmem>>, vector<1x8xf32>
    %c25 = arith.constant 25 : index
    %c0_13 = arith.constant 0 : index
    %13 = vector.load %arg16[%c25, %c0_13] : memref<30x8xf32, #tpu.memory_space<vmem>>, vector<1x8xf32>
    tpu.vector_store %arg16[%c25, %c0_13], %12 {strides = array<i32>} : memref<30x8xf32, #tpu.memory_space<vmem>>, vector<1x8xf32>,
    %c4_14 = arith.constant 4 : index
    %c0_15 = arith.constant 0 : index
    %14 = vector.load %arg0[%c4_14, %c0_15] : memref<16x8xf32, #tpu.memory_space<vmem>>, vector<1x8xf32>
    %c3_16 = arith.constant 3 : index
    %c0_17 = arith.constant 0 : index
    %15 = vector.load %arg16[%c3_16, %c0_17] : memref<30x8xf32, #tpu.memory_space<vmem>>, vector<1x8xf32>
    tpu.vector_store %arg16[%c3_16, %c0_17], %14 {strides = array<i32>} : memref<30x8xf32, #tpu.memory_space<vmem>>, vector<1x8xf32>,
    %c11 = arith.constant 11 : index
    %c0_18 = arith.constant 0 : index
    %16 = vector.load %arg0[%c11, %c0_18] : memref<16x8xf32, #tpu.memory_space<vmem>>, vector<1x8xf32>
    %c26 = arith.constant 26 : index
    %c0_19 = arith.constant 0 : index
    %17 = vector.load %arg16[%c26, %c0_19] : memref<30x8xf32, #tpu.memory_space<vmem>>, vector<1x8xf32>
    tpu.vector_store %arg16[%c26, %c0_19], %16 {strides = array<i32>} : memref<30x8xf32, #tpu.memory_space<vmem>>, vector<1x8xf32>,
    %c5_20 = arith.constant 5 : index
    %c0_21 = arith.constant 0 : index
    %18 = vector.load %arg0[%c5_20, %c0_21] : memref<16x8xf32, #tpu.memory_space<vmem>>, vector<1x8xf32>
    %c2_22 = arith.constant 2 : index
    %c0_23 = arith.constant 0 : index
    %19 = vector.load %arg16[%c2_22, %c0_23] : memref<30x8xf32, #tpu.memory_space<vmem>>, vector<1x8xf32>
    tpu.vector_store %arg16[%c2_22, %c0_23], %18 {strides = array<i32>} : memref<30x8xf32, #tpu.memory_space<vmem>>, vector<1x8xf32>,
    %c10 = arith.constant 10 : index
    %c0_24 = arith.constant 0 : index
    %20 = vector.load %arg0[%c10, %c0_24] : memref<16x8xf32, #tpu.memory_space<vmem>>, vector<1x8xf32>
    %c27 = arith.constant 27 : index
    %c0_25 = arith.constant 0 : index
    %21 = vector.load %arg16[%c27, %c0_25] : memref<30x8xf32, #tpu.memory_space<vmem>>, vector<1x8xf32>
    tpu.vector_store %arg16[%c27, %c0_25], %20 {strides = array<i32>} : memref<30x8xf32, #tpu.memory_space<vmem>>, vector<1x8xf32>,
    %c6_26 = arith.constant 6 : index
    %c0_27 = arith.constant 0 : index
    %22 = vector.load %arg0[%c6_26, %c0_27] : memref<16x8xf32, #tpu.memory_space<vmem>>, vector<1x8xf32>
    %c1_28 = arith.constant 1 : index
    %c0_29 = arith.constant 0 : index
    %23 = vector.load %arg16[%c1_28, %c0_29] : memref<30x8xf32, #tpu.memory_space<vmem>>, vector<1x8xf32>
    tpu.vector_store %arg16[%c1_28, %c0_29], %22 {strides = array<i32>} : memref<30x8xf32, #tpu.memory_space<vmem>>, vector<1x8xf32>,
    %c9 = arith.constant 9 : index
    %c0_30 = arith.constant 0 : index
    %24 = vector.load %arg0[%c9, %c0_30] : memref<16x8xf32, #tpu.memory_space<vmem>>, vector<1x8xf32>
    %c28 = arith.constant 28 : index
    %c0_31 = arith.constant 0 : index
    %25 = vector.load %arg16[%c28, %c0_31] : memref<30x8xf32, #tpu.memory_space<vmem>>, vector<1x8xf32>
    tpu.vector_store %arg16[%c28, %c0_31], %24 {strides = array<i32>} : memref<30x8xf32, #tpu.memory_space<vmem>>, vector<1x8xf32>,
    %c7_32 = arith.constant 7 : index
    %c0_33 = arith.constant 0 : index
    %26 = vector.load %arg0[%c7_32, %c0_33] : memref<16x8xf32, #tpu.memory_space<vmem>>, vector<1x8xf32>
    %c0_34 = arith.constant 0 : index
    %c0_35 = arith.constant 0 : index
    %27 = vector.load %arg16[%c0_34, %c0_35] : memref<30x8xf32, #tpu.memory_space<vmem>>, vector<1x8xf32>
    tpu.vector_store %arg16[%c0_34, %c0_35], %26 {strides = array<i32>} : memref<30x8xf32, #tpu.memory_space<vmem>>, vector<1x8xf32>,
    %c8 = arith.constant 8 : index
    %c0_36 = arith.constant 0 : index
    %28 = vector.load %arg0[%c8, %c0_36] : memref<16x8xf32, #tpu.memory_space<vmem>>, vector<1x8xf32>
    %c29 = arith.constant 29 : index
    %c0_37 = arith.constant 0 : index
    %29 = vector.load %arg16[%c29, %c0_37] : memref<30x8xf32, #tpu.memory_space<vmem>>, vector<1x8xf32>
    tpu.vector_store %arg16[%c29, %c0_37], %28 {strides = array<i32>} : memref<30x8xf32, #tpu.memory_space<vmem>>, vector<1x8xf32>,
    %c0_38 = arith.constant 0 : index
    %c0_39 = arith.constant 0 : index
    %30 = vector.load %arg16[%c0_38, %c0_39] : memref<30x8xf32, #tpu.memory_space<vmem>>, vector<16x8xf32>
    %31 = arith.truncf %30 : vector<16x8xf32> to vector<16x8xbf16>
    %c0_40 = arith.constant 0 : index
    %c0_41 = arith.constant 0 : index
    %c0_42 = arith.constant 0 : index
    %32 = vector.load %arg1[%c0_40, %c0_41, %c0_42] : memref<15x8x32xbf16, #tpu.memory_space<vmem>>, vector<1x8x32xbf16>
    %33 = vector.shape_cast %32 : vector<1x8x32xbf16> to vector<8x32xbf16>
    %cst = arith.constant dense<0.000000e+00> : vector<16x32xf32>
    %34 = tpu.matmul %31, %33, %cst {dimension_numbers = #tpu.dot_dimension_numbers<[1], [0], [0], [1], [0, 0, 1, 1], [], []>} : vector<16x8xbf16>, vector<8x32xbf16>, vector<16x32xf32> -> vector<16x32xf32>
    %c1_43 = arith.constant 1 : index
    %c0_44 = arith.constant 0 : index
    %35 = vector.load %arg16[%c1_43, %c0_44] : memref<30x8xf32, #tpu.memory_space<vmem>>, vector<16x8xf32>
    %36 = arith.truncf %35 : vector<16x8xf32> to vector<16x8xbf16>
    %c1_45 = arith.constant 1 : index
    %c0_46 = arith.constant 0 : index
    %c0_47 = arith.constant 0 : index
    %37 = vector.load %arg1[%c1_45, %c0_46, %c0_47] : memref<15x8x32xbf16, #tpu.memory_space<vmem>>, vector<1x8x32xbf16>
    %38 = vector.shape_cast %37 : vector<1x8x32xbf16> to vector<8x32xbf16>
    %cst_48 = arith.constant dense<0.000000e+00> : vector<16x32xf32>
    %39 = tpu.matmul %36, %38, %cst_48 {dimension_numbers = #tpu.dot_dimension_numbers<[1], [0], [0], [1], [0, 0, 1, 1], [], []>} : vector<16x8xbf16>, vector<8x32xbf16>, vector<16x32xf32> -> vector<16x32xf32>
    %40 = arith.addf %34, %39 : vector<16x32xf32>
    %c2_49 = arith.constant 2 : index
    %c0_50 = arith.constant 0 : index
    %41 = vector.load %arg16[%c2_49, %c0_50] : memref<30x8xf32, #tpu.memory_space<vmem>>, vector<16x8xf32>
    %42 = arith.truncf %41 : vector<16x8xf32> to vector<16x8xbf16>
    %c2_51 = arith.constant 2 : index
    %c0_52 = arith.constant 0 : index
    %c0_53 = arith.constant 0 : index
    %43 = vector.load %arg1[%c2_51, %c0_52, %c0_53] : memref<15x8x32xbf16, #tpu.memory_space<vmem>>, vector<1x8x32xbf16>
    %44 = vector.shape_cast %43 : vector<1x8x32xbf16> to vector<8x32xbf16>
    %cst_54 = arith.constant dense<0.000000e+00> : vector<16x32xf32>
    %45 = tpu.matmul %42, %44, %cst_54 {dimension_numbers = #tpu.dot_dimension_numbers<[1], [0], [0], [1], [0, 0, 1, 1], [], []>} : vector<16x8xbf16>, vector<8x32xbf16>, vector<16x32xf32> -> vector<16x32xf32>
    %46 = arith.addf %40, %45 : vector<16x32xf32>
    %c3_55 = arith.constant 3 : index
    %c0_56 = arith.constant 0 : index
    %47 = vector.load %arg16[%c3_55, %c0_56] : memref<30x8xf32, #tpu.memory_space<vmem>>, vector<16x8xf32>
    %48 = arith.truncf %47 : vector<16x8xf32> to vector<16x8xbf16>
    %c3_57 = arith.constant 3 : index
    %c0_58 = arith.constant 0 : index
    %c0_59 = arith.constant 0 : index
    %49 = vector.load %arg1[%c3_57, %c0_58, %c0_59] : memref<15x8x32xbf16, #tpu.memory_space<vmem>>, vector<1x8x32xbf16>
    %50 = vector.shape_cast %49 : vector<1x8x32xbf16> to vector<8x32xbf16>
    %cst_60 = arith.constant dense<0.000000e+00> : vector<16x32xf32>
    %51 = tpu.matmul %48, %50, %cst_60 {dimension_numbers = #tpu.dot_dimension_numbers<[1], [0], [0], [1], [0, 0, 1, 1], [], []>} : vector<16x8xbf16>, vector<8x32xbf16>, vector<16x32xf32> -> vector<16x32xf32>
    %52 = arith.addf %46, %51 : vector<16x32xf32>
    %c4_61 = arith.constant 4 : index
    %c0_62 = arith.constant 0 : index
    %53 = vector.load %arg16[%c4_61, %c0_62] : memref<30x8xf32, #tpu.memory_space<vmem>>, vector<16x8xf32>
    %54 = arith.truncf %53 : vector<16x8xf32> to vector<16x8xbf16>
    %c4_63 = arith.constant 4 : index
    %c0_64 = arith.constant 0 : index
    %c0_65 = arith.constant 0 : index
    %55 = vector.load %arg1[%c4_63, %c0_64, %c0_65] : memref<15x8x32xbf16, #tpu.memory_space<vmem>>, vector<1x8x32xbf16>
    %56 = vector.shape_cast %55 : vector<1x8x32xbf16> to vector<8x32xbf16>
    %cst_66 = arith.constant dense<0.000000e+00> : vector<16x32xf32>
    %57 = tpu.matmul %54, %56, %cst_66 {dimension_numbers = #tpu.dot_dimension_numbers<[1], [0], [0], [1], [0, 0, 1, 1], [], []>} : vector<16x8xbf16>, vector<8x32xbf16>, vector<16x32xf32> -> vector<16x32xf32>
    %58 = arith.addf %52, %57 : vector<16x32xf32>
    %c5_67 = arith.constant 5 : index
    %c0_68 = arith.constant 0 : index
    %59 = vector.load %arg16[%c5_67, %c0_68] : memref<30x8xf32, #tpu.memory_space<vmem>>, vector<16x8xf32>
    %60 = arith.truncf %59 : vector<16x8xf32> to vector<16x8xbf16>
    %c5_69 = arith.constant 5 : index
    %c0_70 = arith.constant 0 : index
    %c0_71 = arith.constant 0 : index
    %61 = vector.load %arg1[%c5_69, %c0_70, %c0_71] : memref<15x8x32xbf16, #tpu.memory_space<vmem>>, vector<1x8x32xbf16>
    %62 = vector.shape_cast %61 : vector<1x8x32xbf16> to vector<8x32xbf16>
    %cst_72 = arith.constant dense<0.000000e+00> : vector<16x32xf32>
    %63 = tpu.matmul %60, %62, %cst_72 {dimension_numbers = #tpu.dot_dimension_numbers<[1], [0], [0], [1], [0, 0, 1, 1], [], []>} : vector<16x8xbf16>, vector<8x32xbf16>, vector<16x32xf32> -> vector<16x32xf32>
    %64 = arith.addf %58, %63 : vector<16x32xf32>
    %c6_73 = arith.constant 6 : index
    %c0_74 = arith.constant 0 : index
    %65 = vector.load %arg16[%c6_73, %c0_74] : memref<30x8xf32, #tpu.memory_space<vmem>>, vector<16x8xf32>
    %66 = arith.truncf %65 : vector<16x8xf32> to vector<16x8xbf16>
    %c6_75 = arith.constant 6 : index
    %c0_76 = arith.constant 0 : index
    %c0_77 = arith.constant 0 : index
    %67 = vector.load %arg1[%c6_75, %c0_76, %c0_77] : memref<15x8x32xbf16, #tpu.memory_space<vmem>>, vector<1x8x32xbf16>
    %68 = vector.shape_cast %67 : vector<1x8x32xbf16> to vector<8x32xbf16>
    %cst_78 = arith.constant dense<0.000000e+00> : vector<16x32xf32>
    %69 = tpu.matmul %66, %68, %cst_78 {dimension_numbers = #tpu.dot_dimension_numbers<[1], [0], [0], [1], [0, 0, 1, 1], [], []>} : vector<16x8xbf16>, vector<8x32xbf16>, vector<16x32xf32> -> vector<16x32xf32>
    %70 = arith.addf %64, %69 : vector<16x32xf32>
    %c7_79 = arith.constant 7 : index
    %c0_80 = arith.constant 0 : index
    %71 = vector.load %arg16[%c7_79, %c0_80] : memref<30x8xf32, #tpu.memory_space<vmem>>, vector<16x8xf32>
    %72 = arith.truncf %71 : vector<16x8xf32> to vector<16x8xbf16>
    %c7_81 = arith.constant 7 : index
    %c0_82 = arith.constant 0 : index
    %c0_83 = arith.constant 0 : index
    %73 = vector.load %arg1[%c7_81, %c0_82, %c0_83] : memref<15x8x32xbf16, #tpu.memory_space<vmem>>, vector<1x8x32xbf16>
    %74 = vector.shape_cast %73 : vector<1x8x32xbf16> to vector<8x32xbf16>
    %cst_84 = arith.constant dense<0.000000e+00> : vector<16x32xf32>
    %75 = tpu.matmul %72, %74, %cst_84 {dimension_numbers = #tpu.dot_dimension_numbers<[1], [0], [0], [1], [0, 0, 1, 1], [], []>} : vector<16x8xbf16>, vector<8x32xbf16>, vector<16x32xf32> -> vector<16x32xf32>
    %76 = arith.addf %70, %75 : vector<16x32xf32>
    %c8_85 = arith.constant 8 : index
    %c0_86 = arith.constant 0 : index
    %77 = vector.load %arg16[%c8_85, %c0_86] : memref<30x8xf32, #tpu.memory_space<vmem>>, vector<16x8xf32>
    %78 = arith.truncf %77 : vector<16x8xf32> to vector<16x8xbf16>
    %c8_87 = arith.constant 8 : index
    %c0_88 = arith.constant 0 : index
    %c0_89 = arith.constant 0 : index
    %79 = vector.load %arg1[%c8_87, %c0_88, %c0_89] : memref<15x8x32xbf16, #tpu.memory_space<vmem>>, vector<1x8x32xbf16>
    %80 = vector.shape_cast %79 : vector<1x8x32xbf16> to vector<8x32xbf16>
    %cst_90 = arith.constant dense<0.000000e+00> : vector<16x32xf32>
    %81 = tpu.matmul %78, %80, %cst_90 {dimension_numbers = #tpu.dot_dimension_numbers<[1], [0], [0], [1], [0, 0, 1, 1], [], []>} : vector<16x8xbf16>, vector<8x32xbf16>, vector<16x32xf32> -> vector<16x32xf32>
    %82 = arith.addf %76, %81 : vector<16x32xf32>
    %c9_91 = arith.constant 9 : index
    %c0_92 = arith.constant 0 : index
    %83 = vector.load %arg16[%c9_91, %c0_92] : memref<30x8xf32, #tpu.memory_space<vmem>>, vector<16x8xf32>
    %84 = arith.truncf %83 : vector<16x8xf32> to vector<16x8xbf16>
    %c9_93 = arith.constant 9 : index
    %c0_94 = arith.constant 0 : index
    %c0_95 = arith.constant 0 : index
    %85 = vector.load %arg1[%c9_93, %c0_94, %c0_95] : memref<15x8x32xbf16, #tpu.memory_space<vmem>>, vector<1x8x32xbf16>
    %86 = vector.shape_cast %85 : vector<1x8x32xbf16> to vector<8x32xbf16>
    %cst_96 = arith.constant dense<0.000000e+00> : vector<16x32xf32>
    %87 = tpu.matmul %84, %86, %cst_96 {dimension_numbers = #tpu.dot_dimension_numbers<[1], [0], [0], [1], [0, 0, 1, 1], [], []>} : vector<16x8xbf16>, vector<8x32xbf16>, vector<16x32xf32> -> vector<16x32xf32>
    %88 = arith.addf %82, %87 : vector<16x32xf32>
    %c10_97 = arith.constant 10 : index
    %c0_98 = arith.constant 0 : index
    %89 = vector.load %arg16[%c10_97, %c0_98] : memref<30x8xf32, #tpu.memory_space<vmem>>, vector<16x8xf32>
    %90 = arith.truncf %89 : vector<16x8xf32> to vector<16x8xbf16>
    %c10_99 = arith.constant 10 : index
    %c0_100 = arith.constant 0 : index
    %c0_101 = arith.constant 0 : index
    %91 = vector.load %arg1[%c10_99, %c0_100, %c0_101] : memref<15x8x32xbf16, #tpu.memory_space<vmem>>, vector<1x8x32xbf16>
    %92 = vector.shape_cast %91 : vector<1x8x32xbf16> to vector<8x32xbf16>
    %cst_102 = arith.constant dense<0.000000e+00> : vector<16x32xf32>
    %93 = tpu.matmul %90, %92, %cst_102 {dimension_numbers = #tpu.dot_dimension_numbers<[1], [0], [0], [1], [0, 0, 1, 1], [], []>} : vector<16x8xbf16>, vector<8x32xbf16>, vector<16x32xf32> -> vector<16x32xf32>
    %94 = arith.addf %88, %93 : vector<16x32xf32>
    %c11_103 = arith.constant 11 : index
    %c0_104 = arith.constant 0 : index
    %95 = vector.load %arg16[%c11_103, %c0_104] : memref<30x8xf32, #tpu.memory_space<vmem>>, vector<16x8xf32>
    %96 = arith.truncf %95 : vector<16x8xf32> to vector<16x8xbf16>
    %c11_105 = arith.constant 11 : index
    %c0_106 = arith.constant 0 : index
    %c0_107 = arith.constant 0 : index
    %97 = vector.load %arg1[%c11_105, %c0_106, %c0_107] : memref<15x8x32xbf16, #tpu.memory_space<vmem>>, vector<1x8x32xbf16>
    %98 = vector.shape_cast %97 : vector<1x8x32xbf16> to vector<8x32xbf16>
    %cst_108 = arith.constant dense<0.000000e+00> : vector<16x32xf32>
    %99 = tpu.matmul %96, %98, %cst_108 {dimension_numbers = #tpu.dot_dimension_numbers<[1], [0], [0], [1], [0, 0, 1, 1], [], []>} : vector<16x8xbf16>, vector<8x32xbf16>, vector<16x32xf32> -> vector<16x32xf32>
    %100 = arith.addf %94, %99 : vector<16x32xf32>
    %c12_109 = arith.constant 12 : index
    %c0_110 = arith.constant 0 : index
    %101 = vector.load %arg16[%c12_109, %c0_110] : memref<30x8xf32, #tpu.memory_space<vmem>>, vector<16x8xf32>
    %102 = arith.truncf %101 : vector<16x8xf32> to vector<16x8xbf16>
    %c12_111 = arith.constant 12 : index
    %c0_112 = arith.constant 0 : index
    %c0_113 = arith.constant 0 : index
    %103 = vector.load %arg1[%c12_111, %c0_112, %c0_113] : memref<15x8x32xbf16, #tpu.memory_space<vmem>>, vector<1x8x32xbf16>
    %104 = vector.shape_cast %103 : vector<1x8x32xbf16> to vector<8x32xbf16>
    %cst_114 = arith.constant dense<0.000000e+00> : vector<16x32xf32>
    %105 = tpu.matmul %102, %104, %cst_114 {dimension_numbers = #tpu.dot_dimension_numbers<[1], [0], [0], [1], [0, 0, 1, 1], [], []>} : vector<16x8xbf16>, vector<8x32xbf16>, vector<16x32xf32> -> vector<16x32xf32>
    %106 = arith.addf %100, %105 : vector<16x32xf32>
    %c13_115 = arith.constant 13 : index
    %c0_116 = arith.constant 0 : index
    %107 = vector.load %arg16[%c13_115, %c0_116] : memref<30x8xf32, #tpu.memory_space<vmem>>, vector<16x8xf32>
    %108 = arith.truncf %107 : vector<16x8xf32> to vector<16x8xbf16>
    %c13_117 = arith.constant 13 : index
    %c0_118 = arith.constant 0 : index
    %c0_119 = arith.constant 0 : index
    %109 = vector.load %arg1[%c13_117, %c0_118, %c0_119] : memref<15x8x32xbf16, #tpu.memory_space<vmem>>, vector<1x8x32xbf16>
    %110 = vector.shape_cast %109 : vector<1x8x32xbf16> to vector<8x32xbf16>
    %cst_120 = arith.constant dense<0.000000e+00> : vector<16x32xf32>
    %111 = tpu.matmul %108, %110, %cst_120 {dimension_numbers = #tpu.dot_dimension_numbers<[1], [0], [0], [1], [0, 0, 1, 1], [], []>} : vector<16x8xbf16>, vector<8x32xbf16>, vector<16x32xf32> -> vector<16x32xf32>
    %112 = arith.addf %106, %111 : vector<16x32xf32>
    %c14_121 = arith.constant 14 : index
    %c0_122 = arith.constant 0 : index
    %113 = vector.load %arg16[%c14_121, %c0_122] : memref<30x8xf32, #tpu.memory_space<vmem>>, vector<16x8xf32>
    %114 = arith.truncf %113 : vector<16x8xf32> to vector<16x8xbf16>
    %c14_123 = arith.constant 14 : index
    %c0_124 = arith.constant 0 : index
    %c0_125 = arith.constant 0 : index
    %115 = vector.load %arg1[%c14_123, %c0_124, %c0_125] : memref<15x8x32xbf16, #tpu.memory_space<vmem>>, vector<1x8x32xbf16>
    %116 = vector.shape_cast %115 : vector<1x8x32xbf16> to vector<8x32xbf16>
    %cst_126 = arith.constant dense<0.000000e+00> : vector<16x32xf32>
    %117 = tpu.matmul %114, %116, %cst_126 {dimension_numbers = #tpu.dot_dimension_numbers<[1], [0], [0], [1], [0, 0, 1, 1], [], []>} : vector<16x8xbf16>, vector<8x32xbf16>, vector<16x32xf32> -> vector<16x32xf32>
    %118 = arith.addf %112, %117 : vector<16x32xf32>
    %c0_127 = arith.constant 0 : index
    %c0_128 = arith.constant 0 : index
    %119 = vector.load %arg2[%c0_127, %c0_128] : memref<1x32xf32, #tpu.memory_space<vmem>>, vector<1x32xf32>
    %120 = vector.broadcast %119 : vector<1x32xf32> to vector<16x32xf32>
    %121 = arith.addf %118, %120 : vector<16x32xf32>
    %cst_129 = arith.constant 2.000000e-01 : f32
    %122 = vector.broadcast %cst_129 : f32 to vector<16x32xf32>
    %123 = arith.mulf %122, %121 : vector<16x32xf32>
    %124 = arith.maximumf %121, %123 : vector<16x32xf32>
    %c0_130 = arith.constant 0 : index
    %c0_131 = arith.constant 0 : index
    %125 = vector.load %arg11[%c0_130, %c0_131] : memref<16x32xf32, #tpu.memory_space<vmem>>, vector<16x32xf32>
    tpu.vector_store %arg11[%c0_130, %c0_131], %124 {strides = array<i32>} : memref<16x32xf32, #tpu.memory_space<vmem>>, vector<16x32xf32>,
    %cst_132 = arith.constant 0.000000e+00 : f32
    %126 = vector.broadcast %cst_132 : f32 to vector<5x32xf32>
    %c0_133 = arith.constant 0 : index
    %c0_134 = arith.constant 0 : index
    %127 = vector.load %arg17[%c0_133, %c0_134] : memref<36x32xf32, #tpu.memory_space<vmem>>, vector<5x32xf32>
    tpu.vector_store %arg17[%c0_133, %c0_134], %126 {strides = array<i32>} : memref<36x32xf32, #tpu.memory_space<vmem>>, vector<5x32xf32>,
    %cst_135 = arith.constant 0.000000e+00 : f32
    %128 = vector.broadcast %cst_135 : f32 to vector<5x32xf32>
    %c13_136 = arith.constant 13 : index
    %c0_137 = arith.constant 0 : index
    %129 = vector.load %arg17[%c13_136, %c0_137] : memref<36x32xf32, #tpu.memory_space<vmem>>, vector<5x32xf32>
    tpu.vector_store %arg17[%c13_136, %c0_137], %128 {strides = array<i32>} : memref<36x32xf32, #tpu.memory_space<vmem>>, vector<5x32xf32>,
    %c0_138 = arith.constant 0 : index
    %c0_139 = arith.constant 0 : index
    %130 = tpu.strided_load %arg11[%c0_138, %c0_139] {strides = array<i32: 2, 1>} : memref<16x32xf32, #tpu.memory_space<vmem>>, vector<8x32xf32>
    %c5_140 = arith.constant 5 : index
    %c0_141 = arith.constant 0 : index
    %131 = vector.load %arg17[%c5_140, %c0_141] : memref<36x32xf32, #tpu.memory_space<vmem>>, vector<8x32xf32>
    tpu.vector_store %arg17[%c5_140, %c0_141], %130 {strides = array<i32>} : memref<36x32xf32, #tpu.memory_space<vmem>>, vector<8x32xf32>,
    %cst_142 = arith.constant 0.000000e+00 : f32
    %132 = vector.broadcast %cst_142 : f32 to vector<5x32xf32>
    %c18 = arith.constant 18 : index
    %c0_143 = arith.constant 0 : index
    %133 = vector.load %arg17[%c18, %c0_143] : memref<36x32xf32, #tpu.memory_space<vmem>>, vector<5x32xf32>
    tpu.vector_store %arg17[%c18, %c0_143], %132 {strides = array<i32>} : memref<36x32xf32, #tpu.memory_space<vmem>>, vector<5x32xf32>,
    %cst_144 = arith.constant 0.000000e+00 : f32
    %134 = vector.broadcast %cst_144 : f32 to vector<5x32xf32>
    %c31 = arith.constant 31 : index
    %c0_145 = arith.constant 0 : index
    %135 = vector.load %arg17[%c31, %c0_145] : memref<36x32xf32, #tpu.memory_space<vmem>>, vector<5x32xf32>
    tpu.vector_store %arg17[%c31, %c0_145], %134 {strides = array<i32>} : memref<36x32xf32, #tpu.memory_space<vmem>>, vector<5x32xf32>,
    %c1_146 = arith.constant 1 : index
    %c0_147 = arith.constant 0 : index
    %136 = tpu.strided_load %arg11[%c1_146, %c0_147] {strides = array<i32: 2, 1>} : memref<16x32xf32, #tpu.memory_space<vmem>>, vector<8x32xf32>
    %c23_148 = arith.constant 23 : index
    %c0_149 = arith.constant 0 : index
    %137 = vector.load %arg17[%c23_148, %c0_149] : memref<36x32xf32, #tpu.memory_space<vmem>>, vector<8x32xf32>
    tpu.vector_store %arg17[%c23_148, %c0_149], %136 {strides = array<i32>} : memref<36x32xf32, #tpu.memory_space<vmem>>, vector<8x32xf32>,
    %c0_150 = arith.constant 0 : index
    %c0_151 = arith.constant 0 : index
    %138 = vector.load %arg17[%c0_150, %c0_151] : memref<36x32xf32, #tpu.memory_space<vmem>>, vector<8x32xf32>
    %139 = arith.truncf %138 : vector<8x32xf32> to vector<8x32xbf16>
    %c0_152 = arith.constant 0 : index
    %c0_153 = arith.constant 0 : index
    %c0_154 = arith.constant 0 : index
    %140 = vector.load %arg3[%c0_152, %c0_153, %c0_154] : memref<21x32x64xbf16, #tpu.memory_space<vmem>>, vector<1x32x64xbf16>
    %141 = vector.shape_cast %140 : vector<1x32x64xbf16> to vector<32x64xbf16>
    %cst_155 = arith.constant dense<0.000000e+00> : vector<8x64xf32>
    %142 = tpu.matmul %139, %141, %cst_155 {dimension_numbers = #tpu.dot_dimension_numbers<[1], [0], [0], [1], [0, 0, 1, 1], [], []>} : vector<8x32xbf16>, vector<32x64xbf16>, vector<8x64xf32> -> vector<8x64xf32>
    %c18_156 = arith.constant 18 : index
    %c0_157 = arith.constant 0 : index
    %143 = vector.load %arg17[%c18_156, %c0_157] : memref<36x32xf32, #tpu.memory_space<vmem>>, vector<8x32xf32>
    %144 = arith.truncf %143 : vector<8x32xf32> to vector<8x32xbf16>
    %c1_158 = arith.constant 1 : index
    %c0_159 = arith.constant 0 : index
    %c0_160 = arith.constant 0 : index
    %145 = vector.load %arg3[%c1_158, %c0_159, %c0_160] : memref<21x32x64xbf16, #tpu.memory_space<vmem>>, vector<1x32x64xbf16>
    %146 = vector.shape_cast %145 : vector<1x32x64xbf16> to vector<32x64xbf16>
    %cst_161 = arith.constant dense<0.000000e+00> : vector<8x64xf32>
    %147 = tpu.matmul %144, %146, %cst_161 {dimension_numbers = #tpu.dot_dimension_numbers<[1], [0], [0], [1], [0, 0, 1, 1], [], []>} : vector<8x32xbf16>, vector<32x64xbf16>, vector<8x64xf32> -> vector<8x64xf32>
    %148 = arith.addf %142, %147 : vector<8x64xf32>
    %c1_162 = arith.constant 1 : index
    %c0_163 = arith.constant 0 : index
    %149 = vector.load %arg17[%c1_162, %c0_163] : memref<36x32xf32, #tpu.memory_space<vmem>>, vector<8x32xf32>
    %150 = arith.truncf %149 : vector<8x32xf32> to vector<8x32xbf16>
    %c2_164 = arith.constant 2 : index
    %c0_165 = arith.constant 0 : index
    %c0_166 = arith.constant 0 : index
    %151 = vector.load %arg3[%c2_164, %c0_165, %c0_166] : memref<21x32x64xbf16, #tpu.memory_space<vmem>>, vector<1x32x64xbf16>
    %152 = vector.shape_cast %151 : vector<1x32x64xbf16> to vector<32x64xbf16>
    %cst_167 = arith.constant dense<0.000000e+00> : vector<8x64xf32>
    %153 = tpu.matmul %150, %152, %cst_167 {dimension_numbers = #tpu.dot_dimension_numbers<[1], [0], [0], [1], [0, 0, 1, 1], [], []>} : vector<8x32xbf16>, vector<32x64xbf16>, vector<8x64xf32> -> vector<8x64xf32>
    %154 = arith.addf %148, %153 : vector<8x64xf32>
    %c19 = arith.constant 19 : index
    %c0_168 = arith.constant 0 : index
    %155 = vector.load %arg17[%c19, %c0_168] : memref<36x32xf32, #tpu.memory_space<vmem>>, vector<8x32xf32>
    %156 = arith.truncf %155 : vector<8x32xf32> to vector<8x32xbf16>
    %c3_169 = arith.constant 3 : index
    %c0_170 = arith.constant 0 : index
    %c0_171 = arith.constant 0 : index
    %157 = vector.load %arg3[%c3_169, %c0_170, %c0_171] : memref<21x32x64xbf16, #tpu.memory_space<vmem>>, vector<1x32x64xbf16>
    %158 = vector.shape_cast %157 : vector<1x32x64xbf16> to vector<32x64xbf16>
    %cst_172 = arith.constant dense<0.000000e+00> : vector<8x64xf32>
    %159 = tpu.matmul %156, %158, %cst_172 {dimension_numbers = #tpu.dot_dimension_numbers<[1], [0], [0], [1], [0, 0, 1, 1], [], []>} : vector<8x32xbf16>, vector<32x64xbf16>, vector<8x64xf32> -> vector<8x64xf32>
    %160 = arith.addf %154, %159 : vector<8x64xf32>
    %c2_173 = arith.constant 2 : index
    %c0_174 = arith.constant 0 : index
    %161 = vector.load %arg17[%c2_173, %c0_174] : memref<36x32xf32, #tpu.memory_space<vmem>>, vector<8x32xf32>
    %162 = arith.truncf %161 : vector<8x32xf32> to vector<8x32xbf16>
    %c4_175 = arith.constant 4 : index
    %c0_176 = arith.constant 0 : index
    %c0_177 = arith.constant 0 : index
    %163 = vector.load %arg3[%c4_175, %c0_176, %c0_177] : memref<21x32x64xbf16, #tpu.memory_space<vmem>>, vector<1x32x64xbf16>
    %164 = vector.shape_cast %163 : vector<1x32x64xbf16> to vector<32x64xbf16>
    %cst_178 = arith.constant dense<0.000000e+00> : vector<8x64xf32>
    %165 = tpu.matmul %162, %164, %cst_178 {dimension_numbers = #tpu.dot_dimension_numbers<[1], [0], [0], [1], [0, 0, 1, 1], [], []>} : vector<8x32xbf16>, vector<32x64xbf16>, vector<8x64xf32> -> vector<8x64xf32>
    %166 = arith.addf %160, %165 : vector<8x64xf32>
    %c20 = arith.constant 20 : index
    %c0_179 = arith.constant 0 : index
    %167 = vector.load %arg17[%c20, %c0_179] : memref<36x32xf32, #tpu.memory_space<vmem>>, vector<8x32xf32>
    %168 = arith.truncf %167 : vector<8x32xf32> to vector<8x32xbf16>
    %c5_180 = arith.constant 5 : index
    %c0_181 = arith.constant 0 : index
    %c0_182 = arith.constant 0 : index
    %169 = vector.load %arg3[%c5_180, %c0_181, %c0_182] : memref<21x32x64xbf16, #tpu.memory_space<vmem>>, vector<1x32x64xbf16>
    %170 = vector.shape_cast %169 : vector<1x32x64xbf16> to vector<32x64xbf16>
    %cst_183 = arith.constant dense<0.000000e+00> : vector<8x64xf32>
    %171 = tpu.matmul %168, %170, %cst_183 {dimension_numbers = #tpu.dot_dimension_numbers<[1], [0], [0], [1], [0, 0, 1, 1], [], []>} : vector<8x32xbf16>, vector<32x64xbf16>, vector<8x64xf32> -> vector<8x64xf32>
    %172 = arith.addf %166, %171 : vector<8x64xf32>
    %c3_184 = arith.constant 3 : index
    %c0_185 = arith.constant 0 : index
    %173 = vector.load %arg17[%c3_184, %c0_185] : memref<36x32xf32, #tpu.memory_space<vmem>>, vector<8x32xf32>
    %174 = arith.truncf %173 : vector<8x32xf32> to vector<8x32xbf16>
    %c6_186 = arith.constant 6 : index
    %c0_187 = arith.constant 0 : index
    %c0_188 = arith.constant 0 : index
    %175 = vector.load %arg3[%c6_186, %c0_187, %c0_188] : memref<21x32x64xbf16, #tpu.memory_space<vmem>>, vector<1x32x64xbf16>
    %176 = vector.shape_cast %175 : vector<1x32x64xbf16> to vector<32x64xbf16>
    %cst_189 = arith.constant dense<0.000000e+00> : vector<8x64xf32>
    %177 = tpu.matmul %174, %176, %cst_189 {dimension_numbers = #tpu.dot_dimension_numbers<[1], [0], [0], [1], [0, 0, 1, 1], [], []>} : vector<8x32xbf16>, vector<32x64xbf16>, vector<8x64xf32> -> vector<8x64xf32>
    %178 = arith.addf %172, %177 : vector<8x64xf32>
    %c21 = arith.constant 21 : index
    %c0_190 = arith.constant 0 : index
    %179 = vector.load %arg17[%c21, %c0_190] : memref<36x32xf32, #tpu.memory_space<vmem>>, vector<8x32xf32>
    %180 = arith.truncf %179 : vector<8x32xf32> to vector<8x32xbf16>
    %c7_191 = arith.constant 7 : index
    %c0_192 = arith.constant 0 : index
    %c0_193 = arith.constant 0 : index
    %181 = vector.load %arg3[%c7_191, %c0_192, %c0_193] : memref<21x32x64xbf16, #tpu.memory_space<vmem>>, vector<1x32x64xbf16>
    %182 = vector.shape_cast %181 : vector<1x32x64xbf16> to vector<32x64xbf16>
    %cst_194 = arith.constant dense<0.000000e+00> : vector<8x64xf32>
    %183 = tpu.matmul %180, %182, %cst_194 {dimension_numbers = #tpu.dot_dimension_numbers<[1], [0], [0], [1], [0, 0, 1, 1], [], []>} : vector<8x32xbf16>, vector<32x64xbf16>, vector<8x64xf32> -> vector<8x64xf32>
    %184 = arith.addf %178, %183 : vector<8x64xf32>
    %c4_195 = arith.constant 4 : index
    %c0_196 = arith.constant 0 : index
    %185 = vector.load %arg17[%c4_195, %c0_196] : memref<36x32xf32, #tpu.memory_space<vmem>>, vector<8x32xf32>
    %186 = arith.truncf %185 : vector<8x32xf32> to vector<8x32xbf16>
    %c8_197 = arith.constant 8 : index
    %c0_198 = arith.constant 0 : index
    %c0_199 = arith.constant 0 : index
    %187 = vector.load %arg3[%c8_197, %c0_198, %c0_199] : memref<21x32x64xbf16, #tpu.memory_space<vmem>>, vector<1x32x64xbf16>
    %188 = vector.shape_cast %187 : vector<1x32x64xbf16> to vector<32x64xbf16>
    %cst_200 = arith.constant dense<0.000000e+00> : vector<8x64xf32>
    %189 = tpu.matmul %186, %188, %cst_200 {dimension_numbers = #tpu.dot_dimension_numbers<[1], [0], [0], [1], [0, 0, 1, 1], [], []>} : vector<8x32xbf16>, vector<32x64xbf16>, vector<8x64xf32> -> vector<8x64xf32>
    %190 = arith.addf %184, %189 : vector<8x64xf32>
    %c22 = arith.constant 22 : index
    %c0_201 = arith.constant 0 : index
    %191 = vector.load %arg17[%c22, %c0_201] : memref<36x32xf32, #tpu.memory_space<vmem>>, vector<8x32xf32>
    %192 = arith.truncf %191 : vector<8x32xf32> to vector<8x32xbf16>
    %c9_202 = arith.constant 9 : index
    %c0_203 = arith.constant 0 : index
    %c0_204 = arith.constant 0 : index
    %193 = vector.load %arg3[%c9_202, %c0_203, %c0_204] : memref<21x32x64xbf16, #tpu.memory_space<vmem>>, vector<1x32x64xbf16>
    %194 = vector.shape_cast %193 : vector<1x32x64xbf16> to vector<32x64xbf16>
    %cst_205 = arith.constant dense<0.000000e+00> : vector<8x64xf32>
    %195 = tpu.matmul %192, %194, %cst_205 {dimension_numbers = #tpu.dot_dimension_numbers<[1], [0], [0], [1], [0, 0, 1, 1], [], []>} : vector<8x32xbf16>, vector<32x64xbf16>, vector<8x64xf32> -> vector<8x64xf32>
    %196 = arith.addf %190, %195 : vector<8x64xf32>
    %c5_206 = arith.constant 5 : index
    %c0_207 = arith.constant 0 : index
    %197 = vector.load %arg17[%c5_206, %c0_207] : memref<36x32xf32, #tpu.memory_space<vmem>>, vector<8x32xf32>
    %198 = arith.truncf %197 : vector<8x32xf32> to vector<8x32xbf16>
    %c10_208 = arith.constant 10 : index
    %c0_209 = arith.constant 0 : index
    %c0_210 = arith.constant 0 : index
    %199 = vector.load %arg3[%c10_208, %c0_209, %c0_210] : memref<21x32x64xbf16, #tpu.memory_space<vmem>>, vector<1x32x64xbf16>
    %200 = vector.shape_cast %199 : vector<1x32x64xbf16> to vector<32x64xbf16>
    %cst_211 = arith.constant dense<0.000000e+00> : vector<8x64xf32>
    %201 = tpu.matmul %198, %200, %cst_211 {dimension_numbers = #tpu.dot_dimension_numbers<[1], [0], [0], [1], [0, 0, 1, 1], [], []>} : vector<8x32xbf16>, vector<32x64xbf16>, vector<8x64xf32> -> vector<8x64xf32>
    %202 = arith.addf %196, %201 : vector<8x64xf32>
    %c23_212 = arith.constant 23 : index
    %c0_213 = arith.constant 0 : index
    %203 = vector.load %arg17[%c23_212, %c0_213] : memref<36x32xf32, #tpu.memory_space<vmem>>, vector<8x32xf32>
    %204 = arith.truncf %203 : vector<8x32xf32> to vector<8x32xbf16>
    %c11_214 = arith.constant 11 : index
    %c0_215 = arith.constant 0 : index
    %c0_216 = arith.constant 0 : index
    %205 = vector.load %arg3[%c11_214, %c0_215, %c0_216] : memref<21x32x64xbf16, #tpu.memory_space<vmem>>, vector<1x32x64xbf16>
    %206 = vector.shape_cast %205 : vector<1x32x64xbf16> to vector<32x64xbf16>
    %cst_217 = arith.constant dense<0.000000e+00> : vector<8x64xf32>
    %207 = tpu.matmul %204, %206, %cst_217 {dimension_numbers = #tpu.dot_dimension_numbers<[1], [0], [0], [1], [0, 0, 1, 1], [], []>} : vector<8x32xbf16>, vector<32x64xbf16>, vector<8x64xf32> -> vector<8x64xf32>
    %208 = arith.addf %202, %207 : vector<8x64xf32>
    %c6_218 = arith.constant 6 : index
    %c0_219 = arith.constant 0 : index
    %209 = vector.load %arg17[%c6_218, %c0_219] : memref<36x32xf32, #tpu.memory_space<vmem>>, vector<8x32xf32>
    %210 = arith.truncf %209 : vector<8x32xf32> to vector<8x32xbf16>
    %c12_220 = arith.constant 12 : index
    %c0_221 = arith.constant 0 : index
    %c0_222 = arith.constant 0 : index
    %211 = vector.load %arg3[%c12_220, %c0_221, %c0_222] : memref<21x32x64xbf16, #tpu.memory_space<vmem>>, vector<1x32x64xbf16>
    %212 = vector.shape_cast %211 : vector<1x32x64xbf16> to vector<32x64xbf16>
    %cst_223 = arith.constant dense<0.000000e+00> : vector<8x64xf32>
    %213 = tpu.matmul %210, %212, %cst_223 {dimension_numbers = #tpu.dot_dimension_numbers<[1], [0], [0], [1], [0, 0, 1, 1], [], []>} : vector<8x32xbf16>, vector<32x64xbf16>, vector<8x64xf32> -> vector<8x64xf32>
    %214 = arith.addf %208, %213 : vector<8x64xf32>
    %c24_224 = arith.constant 24 : index
    %c0_225 = arith.constant 0 : index
    %215 = vector.load %arg17[%c24_224, %c0_225] : memref<36x32xf32, #tpu.memory_space<vmem>>, vector<8x32xf32>
    %216 = arith.truncf %215 : vector<8x32xf32> to vector<8x32xbf16>
    %c13_226 = arith.constant 13 : index
    %c0_227 = arith.constant 0 : index
    %c0_228 = arith.constant 0 : index
    %217 = vector.load %arg3[%c13_226, %c0_227, %c0_228] : memref<21x32x64xbf16, #tpu.memory_space<vmem>>, vector<1x32x64xbf16>
    %218 = vector.shape_cast %217 : vector<1x32x64xbf16> to vector<32x64xbf16>
    %cst_229 = arith.constant dense<0.000000e+00> : vector<8x64xf32>
    %219 = tpu.matmul %216, %218, %cst_229 {dimension_numbers = #tpu.dot_dimension_numbers<[1], [0], [0], [1], [0, 0, 1, 1], [], []>} : vector<8x32xbf16>, vector<32x64xbf16>, vector<8x64xf32> -> vector<8x64xf32>
    %220 = arith.addf %214, %219 : vector<8x64xf32>
    %c7_230 = arith.constant 7 : index
    %c0_231 = arith.constant 0 : index
    %221 = vector.load %arg17[%c7_230, %c0_231] : memref<36x32xf32, #tpu.memory_space<vmem>>, vector<8x32xf32>
    %222 = arith.truncf %221 : vector<8x32xf32> to vector<8x32xbf16>
    %c14_232 = arith.constant 14 : index
    %c0_233 = arith.constant 0 : index
    %c0_234 = arith.constant 0 : index
    %223 = vector.load %arg3[%c14_232, %c0_233, %c0_234] : memref<21x32x64xbf16, #tpu.memory_space<vmem>>, vector<1x32x64xbf16>
    %224 = vector.shape_cast %223 : vector<1x32x64xbf16> to vector<32x64xbf16>
    %cst_235 = arith.constant dense<0.000000e+00> : vector<8x64xf32>
    %225 = tpu.matmul %222, %224, %cst_235 {dimension_numbers = #tpu.dot_dimension_numbers<[1], [0], [0], [1], [0, 0, 1, 1], [], []>} : vector<8x32xbf16>, vector<32x64xbf16>, vector<8x64xf32> -> vector<8x64xf32>
    %226 = arith.addf %220, %225 : vector<8x64xf32>
    %c25_236 = arith.constant 25 : index
    %c0_237 = arith.constant 0 : index
    %227 = vector.load %arg17[%c25_236, %c0_237] : memref<36x32xf32, #tpu.memory_space<vmem>>, vector<8x32xf32>
    %228 = arith.truncf %227 : vector<8x32xf32> to vector<8x32xbf16>
    %c15 = arith.constant 15 : index
    %c0_238 = arith.constant 0 : index
    %c0_239 = arith.constant 0 : index
    %229 = vector.load %arg3[%c15, %c0_238, %c0_239] : memref<21x32x64xbf16, #tpu.memory_space<vmem>>, vector<1x32x64xbf16>
    %230 = vector.shape_cast %229 : vector<1x32x64xbf16> to vector<32x64xbf16>
    %cst_240 = arith.constant dense<0.000000e+00> : vector<8x64xf32>
    %231 = tpu.matmul %228, %230, %cst_240 {dimension_numbers = #tpu.dot_dimension_numbers<[1], [0], [0], [1], [0, 0, 1, 1], [], []>} : vector<8x32xbf16>, vector<32x64xbf16>, vector<8x64xf32> -> vector<8x64xf32>
    %232 = arith.addf %226, %231 : vector<8x64xf32>
    %c8_241 = arith.constant 8 : index
    %c0_242 = arith.constant 0 : index
    %233 = vector.load %arg17[%c8_241, %c0_242] : memref<36x32xf32, #tpu.memory_space<vmem>>, vector<8x32xf32>
    %234 = arith.truncf %233 : vector<8x32xf32> to vector<8x32xbf16>
    %c16 = arith.constant 16 : index
    %c0_243 = arith.constant 0 : index
    %c0_244 = arith.constant 0 : index
    %235 = vector.load %arg3[%c16, %c0_243, %c0_244] : memref<21x32x64xbf16, #tpu.memory_space<vmem>>, vector<1x32x64xbf16>
    %236 = vector.shape_cast %235 : vector<1x32x64xbf16> to vector<32x64xbf16>
    %cst_245 = arith.constant dense<0.000000e+00> : vector<8x64xf32>
    %237 = tpu.matmul %234, %236, %cst_245 {dimension_numbers = #tpu.dot_dimension_numbers<[1], [0], [0], [1], [0, 0, 1, 1], [], []>} : vector<8x32xbf16>, vector<32x64xbf16>, vector<8x64xf32> -> vector<8x64xf32>
    %238 = arith.addf %232, %237 : vector<8x64xf32>
    %c26_246 = arith.constant 26 : index
    %c0_247 = arith.constant 0 : index
    %239 = vector.load %arg17[%c26_246, %c0_247] : memref<36x32xf32, #tpu.memory_space<vmem>>, vector<8x32xf32>
    %240 = arith.truncf %239 : vector<8x32xf32> to vector<8x32xbf16>
    %c17 = arith.constant 17 : index
    %c0_248 = arith.constant 0 : index
    %c0_249 = arith.constant 0 : index
    %241 = vector.load %arg3[%c17, %c0_248, %c0_249] : memref<21x32x64xbf16, #tpu.memory_space<vmem>>, vector<1x32x64xbf16>
    %242 = vector.shape_cast %241 : vector<1x32x64xbf16> to vector<32x64xbf16>
    %cst_250 = arith.constant dense<0.000000e+00> : vector<8x64xf32>
    %243 = tpu.matmul %240, %242, %cst_250 {dimension_numbers = #tpu.dot_dimension_numbers<[1], [0], [0], [1], [0, 0, 1, 1], [], []>} : vector<8x32xbf16>, vector<32x64xbf16>, vector<8x64xf32> -> vector<8x64xf32>
    %244 = arith.addf %238, %243 : vector<8x64xf32>
    %c9_251 = arith.constant 9 : index
    %c0_252 = arith.constant 0 : index
    %245 = vector.load %arg17[%c9_251, %c0_252] : memref<36x32xf32, #tpu.memory_space<vmem>>, vector<8x32xf32>
    %246 = arith.truncf %245 : vector<8x32xf32> to vector<8x32xbf16>
    %c18_253 = arith.constant 18 : index
    %c0_254 = arith.constant 0 : index
    %c0_255 = arith.constant 0 : index
    %247 = vector.load %arg3[%c18_253, %c0_254, %c0_255] : memref<21x32x64xbf16, #tpu.memory_space<vmem>>, vector<1x32x64xbf16>
    %248 = vector.shape_cast %247 : vector<1x32x64xbf16> to vector<32x64xbf16>
    %cst_256 = arith.constant dense<0.000000e+00> : vector<8x64xf32>
    %249 = tpu.matmul %246, %248, %cst_256 {dimension_numbers = #tpu.dot_dimension_numbers<[1], [0], [0], [1], [0, 0, 1, 1], [], []>} : vector<8x32xbf16>, vector<32x64xbf16>, vector<8x64xf32> -> vector<8x64xf32>
    %250 = arith.addf %244, %249 : vector<8x64xf32>
    %c27_257 = arith.constant 27 : index
    %c0_258 = arith.constant 0 : index
    %251 = vector.load %arg17[%c27_257, %c0_258] : memref<36x32xf32, #tpu.memory_space<vmem>>, vector<8x32xf32>
    %252 = arith.truncf %251 : vector<8x32xf32> to vector<8x32xbf16>
    %c19_259 = arith.constant 19 : index
    %c0_260 = arith.constant 0 : index
    %c0_261 = arith.constant 0 : index
    %253 = vector.load %arg3[%c19_259, %c0_260, %c0_261] : memref<21x32x64xbf16, #tpu.memory_space<vmem>>, vector<1x32x64xbf16>
    %254 = vector.shape_cast %253 : vector<1x32x64xbf16> to vector<32x64xbf16>
    %cst_262 = arith.constant dense<0.000000e+00> : vector<8x64xf32>
    %255 = tpu.matmul %252, %254, %cst_262 {dimension_numbers = #tpu.dot_dimension_numbers<[1], [0], [0], [1], [0, 0, 1, 1], [], []>} : vector<8x32xbf16>, vector<32x64xbf16>, vector<8x64xf32> -> vector<8x64xf32>
    %256 = arith.addf %250, %255 : vector<8x64xf32>
    %c10_263 = arith.constant 10 : index
    %c0_264 = arith.constant 0 : index
    %257 = vector.load %arg17[%c10_263, %c0_264] : memref<36x32xf32, #tpu.memory_space<vmem>>, vector<8x32xf32>
    %258 = arith.truncf %257 : vector<8x32xf32> to vector<8x32xbf16>
    %c20_265 = arith.constant 20 : index
    %c0_266 = arith.constant 0 : index
    %c0_267 = arith.constant 0 : index
    %259 = vector.load %arg3[%c20_265, %c0_266, %c0_267] : memref<21x32x64xbf16, #tpu.memory_space<vmem>>, vector<1x32x64xbf16>
    %260 = vector.shape_cast %259 : vector<1x32x64xbf16> to vector<32x64xbf16>
    %cst_268 = arith.constant dense<0.000000e+00> : vector<8x64xf32>
    %261 = tpu.matmul %258, %260, %cst_268 {dimension_numbers = #tpu.dot_dimension_numbers<[1], [0], [0], [1], [0, 0, 1, 1], [], []>} : vector<8x32xbf16>, vector<32x64xbf16>, vector<8x64xf32> -> vector<8x64xf32>
    %262 = arith.addf %256, %261 : vector<8x64xf32>
    %c0_269 = arith.constant 0 : index
    %c0_270 = arith.constant 0 : index
    %263 = vector.load %arg4[%c0_269, %c0_270] : memref<1x64xf32, #tpu.memory_space<vmem>>, vector<1x64xf32>
    %264 = vector.broadcast %263 : vector<1x64xf32> to vector<8x64xf32>
    %265 = arith.addf %262, %264 : vector<8x64xf32>
    %cst_271 = arith.constant 2.000000e-01 : f32
    %266 = vector.broadcast %cst_271 : f32 to vector<8x64xf32>
    %267 = arith.mulf %266, %265 : vector<8x64xf32>
    %268 = arith.maximumf %265, %267 : vector<8x64xf32>
    %c0_272 = arith.constant 0 : index
    %c0_273 = arith.constant 0 : index
    %269 = vector.load %arg12[%c0_272, %c0_273] : memref<8x64xf32, #tpu.memory_space<vmem>>, vector<8x64xf32>
    tpu.vector_store %arg12[%c0_272, %c0_273], %268 {strides = array<i32>} : memref<8x64xf32, #tpu.memory_space<vmem>>, vector<8x64xf32>,
    %cst_274 = arith.constant 0.000000e+00 : f32
    %270 = vector.broadcast %cst_274 : f32 to vector<5x64xf32>
    %c0_275 = arith.constant 0 : index
    %c0_276 = arith.constant 0 : index
    %271 = vector.load %arg18[%c0_275, %c0_276] : memref<28x64xf32, #tpu.memory_space<vmem>>, vector<5x64xf32>
    tpu.vector_store %arg18[%c0_275, %c0_276], %270 {strides = array<i32>} : memref<28x64xf32, #tpu.memory_space<vmem>>, vector<5x64xf32>,
    %cst_277 = arith.constant 0.000000e+00 : f32
    %272 = vector.broadcast %cst_277 : f32 to vector<5x64xf32>
    %c9_278 = arith.constant 9 : index
    %c0_279 = arith.constant 0 : index
    %273 = vector.load %arg18[%c9_278, %c0_279] : memref<28x64xf32, #tpu.memory_space<vmem>>, vector<5x64xf32>
    tpu.vector_store %arg18[%c9_278, %c0_279], %272 {strides = array<i32>} : memref<28x64xf32, #tpu.memory_space<vmem>>, vector<5x64xf32>,
    %c0_280 = arith.constant 0 : index
    %c0_281 = arith.constant 0 : index
    %274 = tpu.strided_load %arg12[%c0_280, %c0_281] {strides = array<i32: 2, 1>} : memref<8x64xf32, #tpu.memory_space<vmem>>, vector<4x64xf32>
    %c5_282 = arith.constant 5 : index
    %c0_283 = arith.constant 0 : index
    %275 = vector.load %arg18[%c5_282, %c0_283] : memref<28x64xf32, #tpu.memory_space<vmem>>, vector<4x64xf32>
    tpu.vector_store %arg18[%c5_282, %c0_283], %274 {strides = array<i32>} : memref<28x64xf32, #tpu.memory_space<vmem>>, vector<4x64xf32>,
    %cst_284 = arith.constant 0.000000e+00 : f32
    %276 = vector.broadcast %cst_284 : f32 to vector<5x64xf32>
    %c14_285 = arith.constant 14 : index
    %c0_286 = arith.constant 0 : index
    %277 = vector.load %arg18[%c14_285, %c0_286] : memref<28x64xf32, #tpu.memory_space<vmem>>, vector<5x64xf32>
    tpu.vector_store %arg18[%c14_285, %c0_286], %276 {strides = array<i32>} : memref<28x64xf32, #tpu.memory_space<vmem>>, vector<5x64xf32>,
    %cst_287 = arith.constant 0.000000e+00 : f32
    %278 = vector.broadcast %cst_287 : f32 to vector<5x64xf32>
    %c23_288 = arith.constant 23 : index
    %c0_289 = arith.constant 0 : index
    %279 = vector.load %arg18[%c23_288, %c0_289] : memref<28x64xf32, #tpu.memory_space<vmem>>, vector<5x64xf32>
    tpu.vector_store %arg18[%c23_288, %c0_289], %278 {strides = array<i32>} : memref<28x64xf32, #tpu.memory_space<vmem>>, vector<5x64xf32>,
    %c1_290 = arith.constant 1 : index
    %c0_291 = arith.constant 0 : index
    %280 = tpu.strided_load %arg12[%c1_290, %c0_291] {strides = array<i32: 2, 1>} : memref<8x64xf32, #tpu.memory_space<vmem>>, vector<4x64xf32>
    %c19_292 = arith.constant 19 : index
    %c0_293 = arith.constant 0 : index
    %281 = vector.load %arg18[%c19_292, %c0_293] : memref<28x64xf32, #tpu.memory_space<vmem>>, vector<4x64xf32>
    tpu.vector_store %arg18[%c19_292, %c0_293], %280 {strides = array<i32>} : memref<28x64xf32, #tpu.memory_space<vmem>>, vector<4x64xf32>,
    %c0_294 = arith.constant 0 : index
    %c0_295 = arith.constant 0 : index
    %282 = vector.load %arg18[%c0_294, %c0_295] : memref<28x64xf32, #tpu.memory_space<vmem>>, vector<4x64xf32>
    %283 = arith.truncf %282 : vector<4x64xf32> to vector<4x64xbf16>
    %c0_296 = arith.constant 0 : index
    %c0_297 = arith.constant 0 : index
    %c0_298 = arith.constant 0 : index
    %284 = vector.load %arg5[%c0_296, %c0_297, %c0_298] : memref<21x64x128xbf16, #tpu.memory_space<vmem>>, vector<1x64x128xbf16>
    %285 = vector.shape_cast %284 : vector<1x64x128xbf16> to vector<64x128xbf16>
    %cst_299 = arith.constant dense<0.000000e+00> : vector<4x128xf32>
    %286 = tpu.matmul %283, %285, %cst_299 {dimension_numbers = #tpu.dot_dimension_numbers<[1], [0], [0], [1], [0, 0, 1, 1], [], []>} : vector<4x64xbf16>, vector<64x128xbf16>, vector<4x128xf32> -> vector<4x128xf32>
    %c14_300 = arith.constant 14 : index
    %c0_301 = arith.constant 0 : index
    %287 = vector.load %arg18[%c14_300, %c0_301] : memref<28x64xf32, #tpu.memory_space<vmem>>, vector<4x64xf32>
    %288 = arith.truncf %287 : vector<4x64xf32> to vector<4x64xbf16>
    %c1_302 = arith.constant 1 : index
    %c0_303 = arith.constant 0 : index
    %c0_304 = arith.constant 0 : index
    %289 = vector.load %arg5[%c1_302, %c0_303, %c0_304] : memref<21x64x128xbf16, #tpu.memory_space<vmem>>, vector<1x64x128xbf16>
    %290 = vector.shape_cast %289 : vector<1x64x128xbf16> to vector<64x128xbf16>
    %cst_305 = arith.constant dense<0.000000e+00> : vector<4x128xf32>
    %291 = tpu.matmul %288, %290, %cst_305 {dimension_numbers = #tpu.dot_dimension_numbers<[1], [0], [0], [1], [0, 0, 1, 1], [], []>} : vector<4x64xbf16>, vector<64x128xbf16>, vector<4x128xf32> -> vector<4x128xf32>
    %292 = arith.addf %286, %291 : vector<4x128xf32>
    %c1_306 = arith.constant 1 : index
    %c0_307 = arith.constant 0 : index
    %293 = vector.load %arg18[%c1_306, %c0_307] : memref<28x64xf32, #tpu.memory_space<vmem>>, vector<4x64xf32>
    %294 = arith.truncf %293 : vector<4x64xf32> to vector<4x64xbf16>
    %c2_308 = arith.constant 2 : index
    %c0_309 = arith.constant 0 : index
    %c0_310 = arith.constant 0 : index
    %295 = vector.load %arg5[%c2_308, %c0_309, %c0_310] : memref<21x64x128xbf16, #tpu.memory_space<vmem>>, vector<1x64x128xbf16>
    %296 = vector.shape_cast %295 : vector<1x64x128xbf16> to vector<64x128xbf16>
    %cst_311 = arith.constant dense<0.000000e+00> : vector<4x128xf32>
    %297 = tpu.matmul %294, %296, %cst_311 {dimension_numbers = #tpu.dot_dimension_numbers<[1], [0], [0], [1], [0, 0, 1, 1], [], []>} : vector<4x64xbf16>, vector<64x128xbf16>, vector<4x128xf32> -> vector<4x128xf32>
    %298 = arith.addf %292, %297 : vector<4x128xf32>
    %c15_312 = arith.constant 15 : index
    %c0_313 = arith.constant 0 : index
    %299 = vector.load %arg18[%c15_312, %c0_313] : memref<28x64xf32, #tpu.memory_space<vmem>>, vector<4x64xf32>
    %300 = arith.truncf %299 : vector<4x64xf32> to vector<4x64xbf16>
    %c3_314 = arith.constant 3 : index
    %c0_315 = arith.constant 0 : index
    %c0_316 = arith.constant 0 : index
    %301 = vector.load %arg5[%c3_314, %c0_315, %c0_316] : memref<21x64x128xbf16, #tpu.memory_space<vmem>>, vector<1x64x128xbf16>
    %302 = vector.shape_cast %301 : vector<1x64x128xbf16> to vector<64x128xbf16>
    %cst_317 = arith.constant dense<0.000000e+00> : vector<4x128xf32>
    %303 = tpu.matmul %300, %302, %cst_317 {dimension_numbers = #tpu.dot_dimension_numbers<[1], [0], [0], [1], [0, 0, 1, 1], [], []>} : vector<4x64xbf16>, vector<64x128xbf16>, vector<4x128xf32> -> vector<4x128xf32>
    %304 = arith.addf %298, %303 : vector<4x128xf32>
    %c2_318 = arith.constant 2 : index
    %c0_319 = arith.constant 0 : index
    %305 = vector.load %arg18[%c2_318, %c0_319] : memref<28x64xf32, #tpu.memory_space<vmem>>, vector<4x64xf32>
    %306 = arith.truncf %305 : vector<4x64xf32> to vector<4x64xbf16>
    %c4_320 = arith.constant 4 : index
    %c0_321 = arith.constant 0 : index
    %c0_322 = arith.constant 0 : index
    %307 = vector.load %arg5[%c4_320, %c0_321, %c0_322] : memref<21x64x128xbf16, #tpu.memory_space<vmem>>, vector<1x64x128xbf16>
    %308 = vector.shape_cast %307 : vector<1x64x128xbf16> to vector<64x128xbf16>
    %cst_323 = arith.constant dense<0.000000e+00> : vector<4x128xf32>
    %309 = tpu.matmul %306, %308, %cst_323 {dimension_numbers = #tpu.dot_dimension_numbers<[1], [0], [0], [1], [0, 0, 1, 1], [], []>} : vector<4x64xbf16>, vector<64x128xbf16>, vector<4x128xf32> -> vector<4x128xf32>
    %310 = arith.addf %304, %309 : vector<4x128xf32>
    %c16_324 = arith.constant 16 : index
    %c0_325 = arith.constant 0 : index
    %311 = vector.load %arg18[%c16_324, %c0_325] : memref<28x64xf32, #tpu.memory_space<vmem>>, vector<4x64xf32>
    %312 = arith.truncf %311 : vector<4x64xf32> to vector<4x64xbf16>
    %c5_326 = arith.constant 5 : index
    %c0_327 = arith.constant 0 : index
    %c0_328 = arith.constant 0 : index
    %313 = vector.load %arg5[%c5_326, %c0_327, %c0_328] : memref<21x64x128xbf16, #tpu.memory_space<vmem>>, vector<1x64x128xbf16>
    %314 = vector.shape_cast %313 : vector<1x64x128xbf16> to vector<64x128xbf16>
    %cst_329 = arith.constant dense<0.000000e+00> : vector<4x128xf32>
    %315 = tpu.matmul %312, %314, %cst_329 {dimension_numbers = #tpu.dot_dimension_numbers<[1], [0], [0], [1], [0, 0, 1, 1], [], []>} : vector<4x64xbf16>, vector<64x128xbf16>, vector<4x128xf32> -> vector<4x128xf32>
    %316 = arith.addf %310, %315 : vector<4x128xf32>
    %c3_330 = arith.constant 3 : index
    %c0_331 = arith.constant 0 : index
    %317 = vector.load %arg18[%c3_330, %c0_331] : memref<28x64xf32, #tpu.memory_space<vmem>>, vector<4x64xf32>
    %318 = arith.truncf %317 : vector<4x64xf32> to vector<4x64xbf16>
    %c6_332 = arith.constant 6 : index
    %c0_333 = arith.constant 0 : index
    %c0_334 = arith.constant 0 : index
    %319 = vector.load %arg5[%c6_332, %c0_333, %c0_334] : memref<21x64x128xbf16, #tpu.memory_space<vmem>>, vector<1x64x128xbf16>
    %320 = vector.shape_cast %319 : vector<1x64x128xbf16> to vector<64x128xbf16>
    %cst_335 = arith.constant dense<0.000000e+00> : vector<4x128xf32>
    %321 = tpu.matmul %318, %320, %cst_335 {dimension_numbers = #tpu.dot_dimension_numbers<[1], [0], [0], [1], [0, 0, 1, 1], [], []>} : vector<4x64xbf16>, vector<64x128xbf16>, vector<4x128xf32> -> vector<4x128xf32>
    %322 = arith.addf %316, %321 : vector<4x128xf32>
    %c17_336 = arith.constant 17 : index
    %c0_337 = arith.constant 0 : index
    %323 = vector.load %arg18[%c17_336, %c0_337] : memref<28x64xf32, #tpu.memory_space<vmem>>, vector<4x64xf32>
    %324 = arith.truncf %323 : vector<4x64xf32> to vector<4x64xbf16>
    %c7_338 = arith.constant 7 : index
    %c0_339 = arith.constant 0 : index
    %c0_340 = arith.constant 0 : index
    %325 = vector.load %arg5[%c7_338, %c0_339, %c0_340] : memref<21x64x128xbf16, #tpu.memory_space<vmem>>, vector<1x64x128xbf16>
    %326 = vector.shape_cast %325 : vector<1x64x128xbf16> to vector<64x128xbf16>
    %cst_341 = arith.constant dense<0.000000e+00> : vector<4x128xf32>
    %327 = tpu.matmul %324, %326, %cst_341 {dimension_numbers = #tpu.dot_dimension_numbers<[1], [0], [0], [1], [0, 0, 1, 1], [], []>} : vector<4x64xbf16>, vector<64x128xbf16>, vector<4x128xf32> -> vector<4x128xf32>
    %328 = arith.addf %322, %327 : vector<4x128xf32>
    %c4_342 = arith.constant 4 : index
    %c0_343 = arith.constant 0 : index
    %329 = vector.load %arg18[%c4_342, %c0_343] : memref<28x64xf32, #tpu.memory_space<vmem>>, vector<4x64xf32>
    %330 = arith.truncf %329 : vector<4x64xf32> to vector<4x64xbf16>
    %c8_344 = arith.constant 8 : index
    %c0_345 = arith.constant 0 : index
    %c0_346 = arith.constant 0 : index
    %331 = vector.load %arg5[%c8_344, %c0_345, %c0_346] : memref<21x64x128xbf16, #tpu.memory_space<vmem>>, vector<1x64x128xbf16>
    %332 = vector.shape_cast %331 : vector<1x64x128xbf16> to vector<64x128xbf16>
    %cst_347 = arith.constant dense<0.000000e+00> : vector<4x128xf32>
    %333 = tpu.matmul %330, %332, %cst_347 {dimension_numbers = #tpu.dot_dimension_numbers<[1], [0], [0], [1], [0, 0, 1, 1], [], []>} : vector<4x64xbf16>, vector<64x128xbf16>, vector<4x128xf32> -> vector<4x128xf32>
    %334 = arith.addf %328, %333 : vector<4x128xf32>
    %c18_348 = arith.constant 18 : index
    %c0_349 = arith.constant 0 : index
    %335 = vector.load %arg18[%c18_348, %c0_349] : memref<28x64xf32, #tpu.memory_space<vmem>>, vector<4x64xf32>
    %336 = arith.truncf %335 : vector<4x64xf32> to vector<4x64xbf16>
    %c9_350 = arith.constant 9 : index
    %c0_351 = arith.constant 0 : index
    %c0_352 = arith.constant 0 : index
    %337 = vector.load %arg5[%c9_350, %c0_351, %c0_352] : memref<21x64x128xbf16, #tpu.memory_space<vmem>>, vector<1x64x128xbf16>
    %338 = vector.shape_cast %337 : vector<1x64x128xbf16> to vector<64x128xbf16>
    %cst_353 = arith.constant dense<0.000000e+00> : vector<4x128xf32>
    %339 = tpu.matmul %336, %338, %cst_353 {dimension_numbers = #tpu.dot_dimension_numbers<[1], [0], [0], [1], [0, 0, 1, 1], [], []>} : vector<4x64xbf16>, vector<64x128xbf16>, vector<4x128xf32> -> vector<4x128xf32>
    %340 = arith.addf %334, %339 : vector<4x128xf32>
    %c5_354 = arith.constant 5 : index
    %c0_355 = arith.constant 0 : index
    %341 = vector.load %arg18[%c5_354, %c0_355] : memref<28x64xf32, #tpu.memory_space<vmem>>, vector<4x64xf32>
    %342 = arith.truncf %341 : vector<4x64xf32> to vector<4x64xbf16>
    %c10_356 = arith.constant 10 : index
    %c0_357 = arith.constant 0 : index
    %c0_358 = arith.constant 0 : index
    %343 = vector.load %arg5[%c10_356, %c0_357, %c0_358] : memref<21x64x128xbf16, #tpu.memory_space<vmem>>, vector<1x64x128xbf16>
    %344 = vector.shape_cast %343 : vector<1x64x128xbf16> to vector<64x128xbf16>
    %cst_359 = arith.constant dense<0.000000e+00> : vector<4x128xf32>
    %345 = tpu.matmul %342, %344, %cst_359 {dimension_numbers = #tpu.dot_dimension_numbers<[1], [0], [0], [1], [0, 0, 1, 1], [], []>} : vector<4x64xbf16>, vector<64x128xbf16>, vector<4x128xf32> -> vector<4x128xf32>
    %346 = arith.addf %340, %345 : vector<4x128xf32>
    %c19_360 = arith.constant 19 : index
    %c0_361 = arith.constant 0 : index
    %347 = vector.load %arg18[%c19_360, %c0_361] : memref<28x64xf32, #tpu.memory_space<vmem>>, vector<4x64xf32>
    %348 = arith.truncf %347 : vector<4x64xf32> to vector<4x64xbf16>
    %c11_362 = arith.constant 11 : index
    %c0_363 = arith.constant 0 : index
    %c0_364 = arith.constant 0 : index
    %349 = vector.load %arg5[%c11_362, %c0_363, %c0_364] : memref<21x64x128xbf16, #tpu.memory_space<vmem>>, vector<1x64x128xbf16>
    %350 = vector.shape_cast %349 : vector<1x64x128xbf16> to vector<64x128xbf16>
    %cst_365 = arith.constant dense<0.000000e+00> : vector<4x128xf32>
    %351 = tpu.matmul %348, %350, %cst_365 {dimension_numbers = #tpu.dot_dimension_numbers<[1], [0], [0], [1], [0, 0, 1, 1], [], []>} : vector<4x64xbf16>, vector<64x128xbf16>, vector<4x128xf32> -> vector<4x128xf32>
    %352 = arith.addf %346, %351 : vector<4x128xf32>
    %c6_366 = arith.constant 6 : index
    %c0_367 = arith.constant 0 : index
    %353 = vector.load %arg18[%c6_366, %c0_367] : memref<28x64xf32, #tpu.memory_space<vmem>>, vector<4x64xf32>
    %354 = arith.truncf %353 : vector<4x64xf32> to vector<4x64xbf16>
    %c12_368 = arith.constant 12 : index
    %c0_369 = arith.constant 0 : index
    %c0_370 = arith.constant 0 : index
    %355 = vector.load %arg5[%c12_368, %c0_369, %c0_370] : memref<21x64x128xbf16, #tpu.memory_space<vmem>>, vector<1x64x128xbf16>
    %356 = vector.shape_cast %355 : vector<1x64x128xbf16> to vector<64x128xbf16>
    %cst_371 = arith.constant dense<0.000000e+00> : vector<4x128xf32>
    %357 = tpu.matmul %354, %356, %cst_371 {dimension_numbers = #tpu.dot_dimension_numbers<[1], [0], [0], [1], [0, 0, 1, 1], [], []>} : vector<4x64xbf16>, vector<64x128xbf16>, vector<4x128xf32> -> vector<4x128xf32>
    %358 = arith.addf %352, %357 : vector<4x128xf32>
    %c20_372 = arith.constant 20 : index
    %c0_373 = arith.constant 0 : index
    %359 = vector.load %arg18[%c20_372, %c0_373] : memref<28x64xf32, #tpu.memory_space<vmem>>, vector<4x64xf32>
    %360 = arith.truncf %359 : vector<4x64xf32> to vector<4x64xbf16>
    %c13_374 = arith.constant 13 : index
    %c0_375 = arith.constant 0 : index
    %c0_376 = arith.constant 0 : index
    %361 = vector.load %arg5[%c13_374, %c0_375, %c0_376] : memref<21x64x128xbf16, #tpu.memory_space<vmem>>, vector<1x64x128xbf16>
    %362 = vector.shape_cast %361 : vector<1x64x128xbf16> to vector<64x128xbf16>
    %cst_377 = arith.constant dense<0.000000e+00> : vector<4x128xf32>
    %363 = tpu.matmul %360, %362, %cst_377 {dimension_numbers = #tpu.dot_dimension_numbers<[1], [0], [0], [1], [0, 0, 1, 1], [], []>} : vector<4x64xbf16>, vector<64x128xbf16>, vector<4x128xf32> -> vector<4x128xf32>
    %364 = arith.addf %358, %363 : vector<4x128xf32>
    %c7_378 = arith.constant 7 : index
    %c0_379 = arith.constant 0 : index
    %365 = vector.load %arg18[%c7_378, %c0_379] : memref<28x64xf32, #tpu.memory_space<vmem>>, vector<4x64xf32>
    %366 = arith.truncf %365 : vector<4x64xf32> to vector<4x64xbf16>
    %c14_380 = arith.constant 14 : index
    %c0_381 = arith.constant 0 : index
    %c0_382 = arith.constant 0 : index
    %367 = vector.load %arg5[%c14_380, %c0_381, %c0_382] : memref<21x64x128xbf16, #tpu.memory_space<vmem>>, vector<1x64x128xbf16>
    %368 = vector.shape_cast %367 : vector<1x64x128xbf16> to vector<64x128xbf16>
    %cst_383 = arith.constant dense<0.000000e+00> : vector<4x128xf32>
    %369 = tpu.matmul %366, %368, %cst_383 {dimension_numbers = #tpu.dot_dimension_numbers<[1], [0], [0], [1], [0, 0, 1, 1], [], []>} : vector<4x64xbf16>, vector<64x128xbf16>, vector<4x128xf32> -> vector<4x128xf32>
    %370 = arith.addf %364, %369 : vector<4x128xf32>
    %c21_384 = arith.constant 21 : index
    %c0_385 = arith.constant 0 : index
    %371 = vector.load %arg18[%c21_384, %c0_385] : memref<28x64xf32, #tpu.memory_space<vmem>>, vector<4x64xf32>
    %372 = arith.truncf %371 : vector<4x64xf32> to vector<4x64xbf16>
    %c15_386 = arith.constant 15 : index
    %c0_387 = arith.constant 0 : index
    %c0_388 = arith.constant 0 : index
    %373 = vector.load %arg5[%c15_386, %c0_387, %c0_388] : memref<21x64x128xbf16, #tpu.memory_space<vmem>>, vector<1x64x128xbf16>
    %374 = vector.shape_cast %373 : vector<1x64x128xbf16> to vector<64x128xbf16>
    %cst_389 = arith.constant dense<0.000000e+00> : vector<4x128xf32>
    %375 = tpu.matmul %372, %374, %cst_389 {dimension_numbers = #tpu.dot_dimension_numbers<[1], [0], [0], [1], [0, 0, 1, 1], [], []>} : vector<4x64xbf16>, vector<64x128xbf16>, vector<4x128xf32> -> vector<4x128xf32>
    %376 = arith.addf %370, %375 : vector<4x128xf32>
    %c8_390 = arith.constant 8 : index
    %c0_391 = arith.constant 0 : index
    %377 = vector.load %arg18[%c8_390, %c0_391] : memref<28x64xf32, #tpu.memory_space<vmem>>, vector<4x64xf32>
    %378 = arith.truncf %377 : vector<4x64xf32> to vector<4x64xbf16>
    %c16_392 = arith.constant 16 : index
    %c0_393 = arith.constant 0 : index
    %c0_394 = arith.constant 0 : index
    %379 = vector.load %arg5[%c16_392, %c0_393, %c0_394] : memref<21x64x128xbf16, #tpu.memory_space<vmem>>, vector<1x64x128xbf16>
    %380 = vector.shape_cast %379 : vector<1x64x128xbf16> to vector<64x128xbf16>
    %cst_395 = arith.constant dense<0.000000e+00> : vector<4x128xf32>
    %381 = tpu.matmul %378, %380, %cst_395 {dimension_numbers = #tpu.dot_dimension_numbers<[1], [0], [0], [1], [0, 0, 1, 1], [], []>} : vector<4x64xbf16>, vector<64x128xbf16>, vector<4x128xf32> -> vector<4x128xf32>
    %382 = arith.addf %376, %381 : vector<4x128xf32>
    %c22_396 = arith.constant 22 : index
    %c0_397 = arith.constant 0 : index
    %383 = vector.load %arg18[%c22_396, %c0_397] : memref<28x64xf32, #tpu.memory_space<vmem>>, vector<4x64xf32>
    %384 = arith.truncf %383 : vector<4x64xf32> to vector<4x64xbf16>
    %c17_398 = arith.constant 17 : index
    %c0_399 = arith.constant 0 : index
    %c0_400 = arith.constant 0 : index
    %385 = vector.load %arg5[%c17_398, %c0_399, %c0_400] : memref<21x64x128xbf16, #tpu.memory_space<vmem>>, vector<1x64x128xbf16>
    %386 = vector.shape_cast %385 : vector<1x64x128xbf16> to vector<64x128xbf16>
    %cst_401 = arith.constant dense<0.000000e+00> : vector<4x128xf32>
    %387 = tpu.matmul %384, %386, %cst_401 {dimension_numbers = #tpu.dot_dimension_numbers<[1], [0], [0], [1], [0, 0, 1, 1], [], []>} : vector<4x64xbf16>, vector<64x128xbf16>, vector<4x128xf32> -> vector<4x128xf32>
    %388 = arith.addf %382, %387 : vector<4x128xf32>
    %c9_402 = arith.constant 9 : index
    %c0_403 = arith.constant 0 : index
    %389 = vector.load %arg18[%c9_402, %c0_403] : memref<28x64xf32, #tpu.memory_space<vmem>>, vector<4x64xf32>
    %390 = arith.truncf %389 : vector<4x64xf32> to vector<4x64xbf16>
    %c18_404 = arith.constant 18 : index
    %c0_405 = arith.constant 0 : index
    %c0_406 = arith.constant 0 : index
    %391 = vector.load %arg5[%c18_404, %c0_405, %c0_406] : memref<21x64x128xbf16, #tpu.memory_space<vmem>>, vector<1x64x128xbf16>
    %392 = vector.shape_cast %391 : vector<1x64x128xbf16> to vector<64x128xbf16>
    %cst_407 = arith.constant dense<0.000000e+00> : vector<4x128xf32>
    %393 = tpu.matmul %390, %392, %cst_407 {dimension_numbers = #tpu.dot_dimension_numbers<[1], [0], [0], [1], [0, 0, 1, 1], [], []>} : vector<4x64xbf16>, vector<64x128xbf16>, vector<4x128xf32> -> vector<4x128xf32>
    %394 = arith.addf %388, %393 : vector<4x128xf32>
    %c23_408 = arith.constant 23 : index
    %c0_409 = arith.constant 0 : index
    %395 = vector.load %arg18[%c23_408, %c0_409] : memref<28x64xf32, #tpu.memory_space<vmem>>, vector<4x64xf32>
    %396 = arith.truncf %395 : vector<4x64xf32> to vector<4x64xbf16>
    %c19_410 = arith.constant 19 : index
    %c0_411 = arith.constant 0 : index
    %c0_412 = arith.constant 0 : index
    %397 = vector.load %arg5[%c19_410, %c0_411, %c0_412] : memref<21x64x128xbf16, #tpu.memory_space<vmem>>, vector<1x64x128xbf16>
    %398 = vector.shape_cast %397 : vector<1x64x128xbf16> to vector<64x128xbf16>
    %cst_413 = arith.constant dense<0.000000e+00> : vector<4x128xf32>
    %399 = tpu.matmul %396, %398, %cst_413 {dimension_numbers = #tpu.dot_dimension_numbers<[1], [0], [0], [1], [0, 0, 1, 1], [], []>} : vector<4x64xbf16>, vector<64x128xbf16>, vector<4x128xf32> -> vector<4x128xf32>
    %400 = arith.addf %394, %399 : vector<4x128xf32>
    %c10_414 = arith.constant 10 : index
    %c0_415 = arith.constant 0 : index
    %401 = vector.load %arg18[%c10_414, %c0_415] : memref<28x64xf32, #tpu.memory_space<vmem>>, vector<4x64xf32>
    %402 = arith.truncf %401 : vector<4x64xf32> to vector<4x64xbf16>
    %c20_416 = arith.constant 20 : index
    %c0_417 = arith.constant 0 : index
    %c0_418 = arith.constant 0 : index
    %403 = vector.load %arg5[%c20_416, %c0_417, %c0_418] : memref<21x64x128xbf16, #tpu.memory_space<vmem>>, vector<1x64x128xbf16>
    %404 = vector.shape_cast %403 : vector<1x64x128xbf16> to vector<64x128xbf16>
    %cst_419 = arith.constant dense<0.000000e+00> : vector<4x128xf32>
    %405 = tpu.matmul %402, %404, %cst_419 {dimension_numbers = #tpu.dot_dimension_numbers<[1], [0], [0], [1], [0, 0, 1, 1], [], []>} : vector<4x64xbf16>, vector<64x128xbf16>, vector<4x128xf32> -> vector<4x128xf32>
    %406 = arith.addf %400, %405 : vector<4x128xf32>
    %c0_420 = arith.constant 0 : index
    %c0_421 = arith.constant 0 : index
    %407 = vector.load %arg6[%c0_420, %c0_421] : memref<1x128xf32, #tpu.memory_space<vmem>>, vector<1x128xf32>
    %408 = vector.broadcast %407 : vector<1x128xf32> to vector<4x128xf32>
    %409 = arith.addf %406, %408 : vector<4x128xf32>
    %cst_422 = arith.constant 2.000000e-01 : f32
    %410 = vector.broadcast %cst_422 : f32 to vector<4x128xf32>
    %411 = arith.mulf %410, %409 : vector<4x128xf32>
    %412 = arith.maximumf %409, %411 : vector<4x128xf32>
    %cst_423 = arith.constant 0.000000e+00 : f32
    %413 = vector.broadcast %cst_423 : f32 to vector<2x128xf32>
    %c0_424 = arith.constant 0 : index
    %c0_425 = arith.constant 0 : index
    %414 = vector.load %arg13[%c0_424, %c0_425] : memref<8x128xf32, #tpu.memory_space<vmem>>, vector<2x128xf32>
    tpu.vector_store %arg13[%c0_424, %c0_425], %413 {strides = array<i32>} : memref<8x128xf32, #tpu.memory_space<vmem>>, vector<2x128xf32>,
    %c6_426 = arith.constant 6 : index
    %c0_427 = arith.constant 0 : index
    %415 = vector.load %arg13[%c6_426, %c0_427] : memref<8x128xf32, #tpu.memory_space<vmem>>, vector<2x128xf32>
    tpu.vector_store %arg13[%c6_426, %c0_427], %413 {strides = array<i32>} : memref<8x128xf32, #tpu.memory_space<vmem>>, vector<2x128xf32>,
    %c2_428 = arith.constant 2 : index
    %c0_429 = arith.constant 0 : index
    %416 = vector.load %arg13[%c2_428, %c0_429] : memref<8x128xf32, #tpu.memory_space<vmem>>, vector<4x128xf32>
    tpu.vector_store %arg13[%c2_428, %c0_429], %412 {strides = array<i32>} : memref<8x128xf32, #tpu.memory_space<vmem>>, vector<4x128xf32>,
    %c0_430 = arith.constant 0 : index
    %c0_431 = arith.constant 0 : index
    %417 = vector.load %arg13[%c0_430, %c0_431] : memref<8x128xf32, #tpu.memory_space<vmem>>, vector<4x128xf32>
    %418 = arith.truncf %417 : vector<4x128xf32> to vector<4x128xbf16>
    %c0_432 = arith.constant 0 : index
    %c0_433 = arith.constant 0 : index
    %c0_434 = arith.constant 0 : index
    %419 = vector.load %arg7[%c0_432, %c0_433, %c0_434] : memref<5x128x128xbf16, #tpu.memory_space<vmem>>, vector<1x128x128xbf16>
    %420 = vector.shape_cast %419 : vector<1x128x128xbf16> to vector<128x128xbf16>
    %cst_435 = arith.constant dense<0.000000e+00> : vector<4x128xf32>
    %421 = tpu.matmul %418, %420, %cst_435 {dimension_numbers = #tpu.dot_dimension_numbers<[1], [0], [0], [1], [0, 0, 1, 1], [], []>} : vector<4x128xbf16>, vector<128x128xbf16>, vector<4x128xf32> -> vector<4x128xf32>
    %c1_436 = arith.constant 1 : index
    %c0_437 = arith.constant 0 : index
    %422 = vector.load %arg13[%c1_436, %c0_437] : memref<8x128xf32, #tpu.memory_space<vmem>>, vector<4x128xf32>
    %423 = arith.truncf %422 : vector<4x128xf32> to vector<4x128xbf16>
    %c1_438 = arith.constant 1 : index
    %c0_439 = arith.constant 0 : index
    %c0_440 = arith.constant 0 : index
    %424 = vector.load %arg7[%c1_438, %c0_439, %c0_440] : memref<5x128x128xbf16, #tpu.memory_space<vmem>>, vector<1x128x128xbf16>
    %425 = vector.shape_cast %424 : vector<1x128x128xbf16> to vector<128x128xbf16>
    %cst_441 = arith.constant dense<0.000000e+00> : vector<4x128xf32>
    %426 = tpu.matmul %423, %425, %cst_441 {dimension_numbers = #tpu.dot_dimension_numbers<[1], [0], [0], [1], [0, 0, 1, 1], [], []>} : vector<4x128xbf16>, vector<128x128xbf16>, vector<4x128xf32> -> vector<4x128xf32>
    %427 = arith.addf %421, %426 : vector<4x128xf32>
    %c2_442 = arith.constant 2 : index
    %c0_443 = arith.constant 0 : index
    %428 = vector.load %arg13[%c2_442, %c0_443] : memref<8x128xf32, #tpu.memory_space<vmem>>, vector<4x128xf32>
    %429 = arith.truncf %428 : vector<4x128xf32> to vector<4x128xbf16>
    %c2_444 = arith.constant 2 : index
    %c0_445 = arith.constant 0 : index
    %c0_446 = arith.constant 0 : index
    %430 = vector.load %arg7[%c2_444, %c0_445, %c0_446] : memref<5x128x128xbf16, #tpu.memory_space<vmem>>, vector<1x128x128xbf16>
    %431 = vector.shape_cast %430 : vector<1x128x128xbf16> to vector<128x128xbf16>
    %cst_447 = arith.constant dense<0.000000e+00> : vector<4x128xf32>
    %432 = tpu.matmul %429, %431, %cst_447 {dimension_numbers = #tpu.dot_dimension_numbers<[1], [0], [0], [1], [0, 0, 1, 1], [], []>} : vector<4x128xbf16>, vector<128x128xbf16>, vector<4x128xf32> -> vector<4x128xf32>
    %433 = arith.addf %427, %432 : vector<4x128xf32>
    %c3_448 = arith.constant 3 : index
    %c0_449 = arith.constant 0 : index
    %434 = vector.load %arg13[%c3_448, %c0_449] : memref<8x128xf32, #tpu.memory_space<vmem>>, vector<4x128xf32>
    %435 = arith.truncf %434 : vector<4x128xf32> to vector<4x128xbf16>
    %c3_450 = arith.constant 3 : index
    %c0_451 = arith.constant 0 : index
    %c0_452 = arith.constant 0 : index
    %436 = vector.load %arg7[%c3_450, %c0_451, %c0_452] : memref<5x128x128xbf16, #tpu.memory_space<vmem>>, vector<1x128x128xbf16>
    %437 = vector.shape_cast %436 : vector<1x128x128xbf16> to vector<128x128xbf16>
    %cst_453 = arith.constant dense<0.000000e+00> : vector<4x128xf32>
    %438 = tpu.matmul %435, %437, %cst_453 {dimension_numbers = #tpu.dot_dimension_numbers<[1], [0], [0], [1], [0, 0, 1, 1], [], []>} : vector<4x128xbf16>, vector<128x128xbf16>, vector<4x128xf32> -> vector<4x128xf32>
    %439 = arith.addf %433, %438 : vector<4x128xf32>
    %c4_454 = arith.constant 4 : index
    %c0_455 = arith.constant 0 : index
    %440 = vector.load %arg13[%c4_454, %c0_455] : memref<8x128xf32, #tpu.memory_space<vmem>>, vector<4x128xf32>
    %441 = arith.truncf %440 : vector<4x128xf32> to vector<4x128xbf16>
    %c4_456 = arith.constant 4 : index
    %c0_457 = arith.constant 0 : index
    %c0_458 = arith.constant 0 : index
    %442 = vector.load %arg7[%c4_456, %c0_457, %c0_458] : memref<5x128x128xbf16, #tpu.memory_space<vmem>>, vector<1x128x128xbf16>
    %443 = vector.shape_cast %442 : vector<1x128x128xbf16> to vector<128x128xbf16>
    %cst_459 = arith.constant dense<0.000000e+00> : vector<4x128xf32>
    %444 = tpu.matmul %441, %443, %cst_459 {dimension_numbers = #tpu.dot_dimension_numbers<[1], [0], [0], [1], [0, 0, 1, 1], [], []>} : vector<4x128xbf16>, vector<128x128xbf16>, vector<4x128xf32> -> vector<4x128xf32>
    %445 = arith.addf %439, %444 : vector<4x128xf32>
    %c0_460 = arith.constant 0 : index
    %c0_461 = arith.constant 0 : index
    %446 = vector.load %arg8[%c0_460, %c0_461] : memref<1x128xf32, #tpu.memory_space<vmem>>, vector<1x128xf32>
    %447 = vector.broadcast %446 : vector<1x128xf32> to vector<4x128xf32>
    %448 = arith.addf %445, %447 : vector<4x128xf32>
    %cst_462 = arith.constant 2.000000e-01 : f32
    %449 = vector.broadcast %cst_462 : f32 to vector<4x128xf32>
    %450 = arith.mulf %449, %448 : vector<4x128xf32>
    %451 = arith.maximumf %448, %450 : vector<4x128xf32>
    %cst_463 = arith.constant 0.000000e+00 : f32
    %452 = vector.broadcast %cst_463 : f32 to vector<1x128xf32>
    %c0_464 = arith.constant 0 : index
    %c0_465 = arith.constant 0 : index
    %453 = vector.load %arg14[%c0_464, %c0_465] : memref<6x128xf32, #tpu.memory_space<vmem>>, vector<1x128xf32>
    tpu.vector_store %arg14[%c0_464, %c0_465], %452 {strides = array<i32>} : memref<6x128xf32, #tpu.memory_space<vmem>>, vector<1x128xf32>,
    %c5_466 = arith.constant 5 : index
    %c0_467 = arith.constant 0 : index
    %454 = vector.load %arg14[%c5_466, %c0_467] : memref<6x128xf32, #tpu.memory_space<vmem>>, vector<1x128xf32>
    tpu.vector_store %arg14[%c5_466, %c0_467], %452 {strides = array<i32>} : memref<6x128xf32, #tpu.memory_space<vmem>>, vector<1x128xf32>,
    %c1_468 = arith.constant 1 : index
    %c0_469 = arith.constant 0 : index
    %455 = vector.load %arg14[%c1_468, %c0_469] : memref<6x128xf32, #tpu.memory_space<vmem>>, vector<4x128xf32>
    tpu.vector_store %arg14[%c1_468, %c0_469], %451 {strides = array<i32>} : memref<6x128xf32, #tpu.memory_space<vmem>>, vector<4x128xf32>,
    %c0_470 = arith.constant 0 : index
    %c0_471 = arith.constant 0 : index
    %456 = vector.load %arg14[%c0_470, %c0_471] : memref<6x128xf32, #tpu.memory_space<vmem>>, vector<4x128xf32>
    %457 = arith.truncf %456 : vector<4x128xf32> to vector<4x128xbf16>
    %c0_472 = arith.constant 0 : index
    %c0_473 = arith.constant 0 : index
    %c0_474 = arith.constant 0 : index
    %458 = vector.load %arg9[%c0_472, %c0_473, %c0_474] : memref<3x128x8xbf16, #tpu.memory_space<vmem>>, vector<1x128x8xbf16>
    %459 = vector.shape_cast %458 : vector<1x128x8xbf16> to vector<128x8xbf16>
    %cst_475 = arith.constant dense<0.000000e+00> : vector<4x8xf32>
    %460 = tpu.matmul %457, %459, %cst_475 {dimension_numbers = #tpu.dot_dimension_numbers<[1], [0], [0], [1], [0, 0, 1, 1], [], []>} : vector<4x128xbf16>, vector<128x8xbf16>, vector<4x8xf32> -> vector<4x8xf32>
    %c1_476 = arith.constant 1 : index
    %c0_477 = arith.constant 0 : index
    %461 = vector.load %arg14[%c1_476, %c0_477] : memref<6x128xf32, #tpu.memory_space<vmem>>, vector<4x128xf32>
    %462 = arith.truncf %461 : vector<4x128xf32> to vector<4x128xbf16>
    %c1_478 = arith.constant 1 : index
    %c0_479 = arith.constant 0 : index
    %c0_480 = arith.constant 0 : index
    %463 = vector.load %arg9[%c1_478, %c0_479, %c0_480] : memref<3x128x8xbf16, #tpu.memory_space<vmem>>, vector<1x128x8xbf16>
    %464 = vector.shape_cast %463 : vector<1x128x8xbf16> to vector<128x8xbf16>
    %cst_481 = arith.constant dense<0.000000e+00> : vector<4x8xf32>
    %465 = tpu.matmul %462, %464, %cst_481 {dimension_numbers = #tpu.dot_dimension_numbers<[1], [0], [0], [1], [0, 0, 1, 1], [], []>} : vector<4x128xbf16>, vector<128x8xbf16>, vector<4x8xf32> -> vector<4x8xf32>
    %466 = arith.addf %460, %465 : vector<4x8xf32>
    %c2_482 = arith.constant 2 : index
    %c0_483 = arith.constant 0 : index
    %467 = vector.load %arg14[%c2_482, %c0_483] : memref<6x128xf32, #tpu.memory_space<vmem>>, vector<4x128xf32>
    %468 = arith.truncf %467 : vector<4x128xf32> to vector<4x128xbf16>
    %c2_484 = arith.constant 2 : index
    %c0_485 = arith.constant 0 : index
    %c0_486 = arith.constant 0 : index
    %469 = vector.load %arg9[%c2_484, %c0_485, %c0_486] : memref<3x128x8xbf16, #tpu.memory_space<vmem>>, vector<1x128x8xbf16>
    %470 = vector.shape_cast %469 : vector<1x128x8xbf16> to vector<128x8xbf16>
    %cst_487 = arith.constant dense<0.000000e+00> : vector<4x8xf32>
    %471 = tpu.matmul %468, %470, %cst_487 {dimension_numbers = #tpu.dot_dimension_numbers<[1], [0], [0], [1], [0, 0, 1, 1], [], []>} : vector<4x128xbf16>, vector<128x8xbf16>, vector<4x8xf32> -> vector<4x8xf32>
    %472 = arith.addf %466, %471 : vector<4x8xf32>
    %c0_488 = arith.constant 0 : index
    %c0_489 = arith.constant 0 : index
    %473 = vector.load %arg10[%c0_488, %c0_489] : memref<1x8xf32, #tpu.memory_space<vmem>>, vector<1x8xf32>
    %474 = vector.broadcast %473 : vector<1x8xf32> to vector<4x8xf32>
    %475 = arith.addf %472, %474 : vector<4x8xf32>
    %c0_490 = arith.constant 0 : index
    %c0_491 = arith.constant 0 : index
    %476 = vector.load %arg15[%c0_490, %c0_491] : memref<4x8xf32, #tpu.memory_space<vmem>>, vector<4x8xf32>
    tpu.vector_store %arg15[%c0_490, %c0_491], %475 {strides = array<i32>} : memref<4x8xf32, #tpu.memory_space<vmem>>, vector<4x8xf32>,
    return
  }
}

</mosaic_0001>

<llo_original>
// kernel: forward.1
$region0: #{forward.1}
  #allocation0 [shape = 'u32[]', space=smem, size = 0x4, offset = 0x4, fixed_abs, tag = 'smem constant byte address 0x4 - core index']
  #allocation1 [shape = 'u32[144,128]{1,0:T(1,128)}', space=vmem, size = 0x12000, scoped, tag = 'internal scratch']
  #allocation2 [shape = 'f32[30,8]{1,0:T(8,128)}', space=vmem, size = 0x4000, scoped, tag = 'scratch operand']
  #allocation3 [shape = 'f32[36,32]{1,0:T(8,128)}', space=vmem, size = 0x5000, scoped, tag = 'scratch operand']
  #allocation4 [shape = 'f32[28,64]{1,0:T(8,128)}', space=vmem, size = 0x4000, scoped, tag = 'scratch operand']
  %s0 = inlined_call_operand.vmem [shape: f32[16,8], index: 0, kind: input, shape index: {}]
  %s1 = inlined_call_operand.vmem [shape: bf16[15,8,32], index: 1, kind: input, shape index: {}]
  %s2 = inlined_call_operand.vmem [shape: f32[1,32], index: 2, kind: input, shape index: {}]
  %s3 = inlined_call_operand.hbm [shape: bf16[21,32,64], index: 3, kind: input, shape index: {}]
  %s4 = inlined_call_operand.vmem [shape: f32[1,64], index: 4, kind: input, shape index: {}]
  %s5 = inlined_call_operand.hbm [shape: bf16[21,64,128], index: 5, kind: input, shape index: {}]
  %s6 = inlined_call_operand.vmem [shape: f32[1,128], index: 6, kind: input, shape index: {}]
  %s7 = inlined_call_operand.hbm [shape: bf16[5,128,128], index: 7, kind: input, shape index: {}]
  %s8 = inlined_call_operand.vmem [shape: f32[1,128], index: 8, kind: input, shape index: {}]
  %s9 = inlined_call_operand.hbm [shape: bf16[3,128,8], index: 9, kind: input, shape index: {}]
  %s10 = inlined_call_operand.vmem [shape: f32[1,8], index: 10, kind: input, shape index: {}]
  %s11 = inlined_call_operand.vmem [shape: f32[16,32], index: 11, kind: output, shape index: {0}]
  %s12 = inlined_call_operand.vmem [shape: f32[8,64], index: 12, kind: output, shape index: {1}]
  %s13 = inlined_call_operand.vmem [shape: f32[8,128], index: 13, kind: output, shape index: {2}]
  %s14 = inlined_call_operand.vmem [shape: f32[6,128], index: 14, kind: output, shape index: {3}]
  %s15 = inlined_call_operand.vmem [shape: f32[4,8], index: 15, kind: output, shape index: {4}]
  %16 = xla_tuple %s11, %s12, %s13, %s14, %s15
  %s17 = sld [smem:[#allocation0]]
  $region102: #{forward.1} parent=0
    _
  %s19 = ssub.s32 1, %s17
  %s20 = scalar_select 0, %s19, %s17
  $region1: #{forward.1} parent=0
    #allocation5 [shape = 'u8[172032]{0}', space=vmem, size = 0x2a000, scoped, tag = 'input window, operand 3, single buffered']
    #allocation6 [shape = 's32[1]{0}', space=sflag, size = 0x4, scoped, tag = 'scoped memory for forward.1']
    #allocation7 [shape = 'u8[344064]{0}', space=vmem, size = 0x54000, scoped, tag = 'input window, operand 5, single buffered']
    #allocation8 [shape = 's32[1]{0}', space=sflag, size = 0x4, scoped, tag = 'scoped memory for forward.1']
    #allocation9 [shape = 'u8[163840]{0}', space=vmem, size = 0x28000, scoped, tag = 'input window, operand 7, single buffered']
    #allocation10 [shape = 'u8[98304]{0}', space=vmem, size = 0x18000, scoped, tag = 'input window, operand 9, single buffered']
    #allocation11 [shape = 's32[1]{0}', space=sflag, size = 0x4, scoped, tag = 'scoped memory for forward.1']
    %21 = vsyncpa [#allocation6], 0
    %22 = vsyncpa [#allocation8], 0
    %23 = vsyncpa [#allocation11], 0
    // Predicated region
    $region2: #{forward.1} parent=1 // pred_check
      _
    $region3: #{forward.1} parent=1 // pred_check_branch
      %25 = sbr.rel (0) target = $region5
    $region4: #{forward.1} parent=1 // pred_region
      _
    $region5: #{forward.1} parent=1 // pred_fallthru
      _
    // Predicated region
    $region6: #{forward.1} parent=1 // pred_check
      _
    $region7: #{forward.1} parent=1 // pred_check_branch
      %27 = sbr.rel (0) target = $region9
    $region8: #{forward.1} parent=1 // pred_region
      _
    $region9: #{forward.1} parent=1 // pred_fallthru
      _
    // Predicated region
    $region10: #{forward.1} parent=1 // pred_check
      _
    $region11: #{forward.1} parent=1 // pred_check_branch
      %29 = sbr.rel (0) target = $region13
    $region12: #{forward.1} parent=1 // pred_region
      _
    $region13: #{forward.1} parent=1 // pred_fallthru
      _
    // Predicated region
    $region14: #{forward.1} parent=1 // pred_check
      _
    $region15: #{forward.1} parent=1 // pred_check_branch
      %31 = sbr.rel (0) target = $region17
    $region16: #{forward.1} parent=1 // pred_region
      %s33 = ssub.s32 5376, 5376
      %34 = vsyncadd [#allocation6], %s33
      %s35 = sshll.u32 [#allocation5], 4
      %s36 = int_to_ptr.vmem [resolvable:$true] %s35
      %41 = dma.hbm_to_vmem [thread:$0]  %s3, 5376, %s36, [#allocation6], 64, 64, 4
    $region17: #{forward.1} parent=1 // pred_fallthru
      _
    // Predicated region
    $region18: #{forward.1} parent=1 // pred_check
      _
    $region19: #{forward.1} parent=1 // pred_check_branch
      %43 = sbr.rel (0) target = $region21
    $region20: #{forward.1} parent=1 // pred_region
      _
    $region21: #{forward.1} parent=1 // pred_fallthru
      _
    // Predicated region
    $region22: #{forward.1} parent=1 // pred_check
      _
    $region23: #{forward.1} parent=1 // pred_check_branch
      %45 = sbr.rel (0) target = $region25
    $region24: #{forward.1} parent=1 // pred_region
      %s47 = ssub.s32 10752, 10752
      %48 = vsyncadd [#allocation8], %s47
      %s49 = sshll.u32 [#allocation7], 4
      %s50 = int_to_ptr.vmem [resolvable:$true] %s49
      %55 = dma.hbm_to_vmem [thread:$0]  %s5, 10752, %s50, [#allocation8], 64, 64, 4
    $region25: #{forward.1} parent=1 // pred_fallthru
      _
    // Predicated region
    $region26: #{forward.1} parent=1 // pred_check
      _
    $region27: #{forward.1} parent=1 // pred_check_branch
      %57 = sbr.rel (0) target = $region29
    $region28: #{forward.1} parent=1 // pred_region
      _
    $region29: #{forward.1} parent=1 // pred_fallthru
      _
    // Predicated region
    $region30: #{forward.1} parent=1 // pred_check
      _
    $region31: #{forward.1} parent=1 // pred_check_branch
      %59 = sbr.rel (0) target = $region33
    $region32: #{forward.1} parent=1 // pred_region
      %s61 = ssub.s32 5120, 5120
      %62 = vsyncadd [#allocation8], %s61
      %s63 = sshll.u32 [#allocation9], 4
      %s64 = int_to_ptr.vmem [resolvable:$true] %s63
      %69 = dma.hbm_to_vmem [thread:$0]  %s7, 5120, %s64, [#allocation8], 64, 64, 4
    $region33: #{forward.1} parent=1 // pred_fallthru
      _
    // Predicated region
    $region34: #{forward.1} parent=1 // pred_check
      _
    $region35: #{forward.1} parent=1 // pred_check_branch
      %71 = sbr.rel (0) target = $region37
    $region36: #{forward.1} parent=1 // pred_region
      _
    $region37: #{forward.1} parent=1 // pred_fallthru
      _
    // Predicated region
    $region38: #{forward.1} parent=1 // pred_check
      _
    $region39: #{forward.1} parent=1 // pred_check_branch
      %73 = sbr.rel (0) target = $region41
    $region40: #{forward.1} parent=1 // pred_region
      %s75 = ssub.s32 3072, 3072
      %76 = vsyncadd [#allocation11], %s75
      %s77 = sshll.u32 [#allocation10], 4
      %s78 = int_to_ptr.vmem [resolvable:$true] %s77
      %83 = dma.hbm_to_vmem [thread:$0]  %s9, 3072, %s78, [#allocation11], 64, 64, 4
    $region41: #{forward.1} parent=1 // pred_fallthru
      _
    // Predicated region
    $region42: #{forward.1} parent=1 // pred_check
      _
    $region43: #{forward.1} parent=1 // pred_check_branch
      %85 = sbr.rel (0) target = $region45
    $region44: #{forward.1} parent=1 // pred_region
      _
    $region45: #{forward.1} parent=1 // pred_fallthru
      _
    // Predicated region
    $region46: #{forward.1} parent=1 // pred_check
      _
    $region47: #{forward.1} parent=1 // pred_check_branch
      %87 = sbr.rel (0) target = $region49
    $region48: #{forward.1} parent=1 // pred_region
      %88 = dma.done [#allocation6], 5376
    $region49: #{forward.1} parent=1 // pred_fallthru
      _
    // Predicated region
    $region50: #{forward.1} parent=1 // pred_check
      _
    $region51: #{forward.1} parent=1 // pred_check_branch
      %90 = sbr.rel (0) target = $region53
    $region52: #{forward.1} parent=1 // pred_region
      %91 = dma.done [#allocation8], 10752
    $region53: #{forward.1} parent=1 // pred_fallthru
      _
    // Predicated region
    $region54: #{forward.1} parent=1 // pred_check
      _
    $region55: #{forward.1} parent=1 // pred_check_branch
      %93 = sbr.rel (0) target = $region57
    $region56: #{forward.1} parent=1 // pred_region
      %94 = dma.done [#allocation8], 5120
    $region57: #{forward.1} parent=1 // pred_fallthru
      _
    // Predicated region
    $region58: #{forward.1} parent=1 // pred_check
      _
    $region59: #{forward.1} parent=1 // pred_check_branch
      %96 = sbr.rel (0) target = $region61
    $region60: #{forward.1} parent=1 // pred_region
      %97 = dma.done [#allocation11], 3072
    $region61: #{forward.1} parent=1 // pred_fallthru
      _
    %v99 = vld [vmem:[%s0] sm:$0xff]
    %v100 = vld [vmem:[%s0 + $0x8] sm:$0xff]
    %vm101 = vcmask 64512
    %102 = vst.msk [vmem:[#allocation2 + $0x7] sm:$0xff] %vm101, %v99
    %103 = vst.msk [vmem:[#allocation2 + $0xf] sm:$0xff] %vm101, %v100
    %v104 = vld [vmem:[%s0 + $0x1] sm:$0x1]
    %vm105 = vcmask 57344
    %106 = vst.msk [vmem:[#allocation2 + $0x6] sm:$0x1] %vm105, %v104
    %v107 = vld [vmem:[%s0 + $0xe] sm:$0x1]
    %108 = vst.msk [vmem:[#allocation2 + $0x17] sm:$0x1] %vm105, %v107
    %v109 = vld [vmem:[%s0 + $0x2] sm:$0x1]
    %110 = vst.msk [vmem:[#allocation2 + $0x5] sm:$0x1] %vm105, %v109
    %v111 = vld [vmem:[%s0 + $0xd] sm:$0x1]
    %112 = vst.msk [vmem:[#allocation2 + $0x18] sm:$0x1] %vm105, %v111
    %v113 = vld [vmem:[%s0 + $0x3] sm:$0x1]
    %114 = vst.msk [vmem:[#allocation2 + $0x4] sm:$0x1] %vm105, %v113
    %v115 = vld [vmem:[%s0 + $0xc] sm:$0x1]
    %116 = vst.msk [vmem:[#allocation2 + $0x19] sm:$0x1] %vm105, %v115
    %v117 = vld [vmem:[%s0 + $0x4] sm:$0x1]
    %118 = vst.msk [vmem:[#allocation2 + $0x3] sm:$0x1] %vm105, %v117
    %v119 = vld [vmem:[%s0 + $0xb] sm:$0x1]
    %120 = vst.msk [vmem:[#allocation2 + $0x1a] sm:$0x1] %vm105, %v119
    %v121 = vld [vmem:[%s0 + $0x5] sm:$0x1]
    %122 = vst.msk [vmem:[#allocation2 + $0x2] sm:$0x1] %vm105, %v121
    %v123 = vld [vmem:[%s0 + $0xa] sm:$0x1]
    %124 = vst.msk [vmem:[#allocation2 + $0x1b] sm:$0x1] %vm105, %v123
    %v125 = vld [vmem:[%s0 + $0x6] sm:$0x1]
    %126 = vst.msk [vmem:[#allocation2 + $0x1] sm:$0x1] %vm105, %v125
    %v127 = vld [vmem:[%s0 + $0x9] sm:$0x1]
    %128 = vst.msk [vmem:[#allocation2 + $0x1c] sm:$0x1] %vm105, %v127
    %v129 = vld [vmem:[%s0 + $0x7] sm:$0x1]
    %130 = vst.msk [vmem:[#allocation2] sm:$0x1] %vm105, %v129
    %v131 = vld [vmem:[%s0 + $0x8] sm:$0x1]
    %132 = vst.msk [vmem:[#allocation2 + $0x1d] sm:$0x1] %vm105, %v131
    %v133 = vld [vmem:[#allocation2] sm:$0xff]
    %v134 = vld [vmem:[#allocation2 + $0x8] sm:$0xff]
    %v135 = vpack.c.bf16 %v134, %v133
    %v136 = vld [vmem:[%s1] sm:$0xf]
    %v137 = vld [vmem:[#allocation2 + $0x1] sm:$0xff]
    %v138 = vld [vmem:[#allocation2 + $0x9] sm:$0xff]
    %v139 = vpack.c.bf16 %v138, %v137
    %s140 = scalar_lea.vmem %s1, 4
    %v141 = vld [vmem:[%s140] sm:$0xf]
    %v143 = vsel %vm101, %v139, 0
    %vm145 = vcmask 1043456
    %v147 = vsel %vm145, %v141, 0
    %149 = vmatprep.subr.bf16.mxu0 0
    %150 = vmatpush1.bf16.msra.mxu0 %v147
    %151 = vmatprep.subr.bf16.mxu0 0
    %152 = vmatpush1.bf16.msra.mxu0 0
    %153 = vmatprep.subr.bf16.mxu0 0
    %154 = vmatpush1.bf16.msra.mxu0 0
    %155 = vmatprep.subr.bf16.mxu0 0
    %156 = vmatpush1.bf16.msra.mxu0 0
    %157 = vmatprep.subr.bf16.mxu0 0
    %158 = vmatpush1.bf16.msra.mxu0 0
    %159 = vmatprep.subr.bf16.mxu0 0
    %160 = vmatpush1.bf16.msra.mxu0 0
    %161 = vmatprep.subr.bf16.mxu0 0
    %162 = vmatpush1.bf16.msra.mxu0 0
    %163 = vmatprep.subr.bf16.mxu0 0
    %164 = vmatpush1.bf16.msra.mxu0 0
    %165 = vmatprep.subr.bf16.mxu0 0
    %166 = vmatpush1.bf16.msra.mxu0 0
    %167 = vmatprep.subr.bf16.mxu0 0
    %168 = vmatpush1.bf16.msra.mxu0 0
    %169 = vmatprep.subr.bf16.mxu0 0
    %170 = vmatpush1.bf16.msra.mxu0 0
    %171 = vmatprep.subr.bf16.mxu0 0
    %172 = vmatpush1.bf16.msra.mxu0 0
    %173 = vmatprep.subr.bf16.mxu0 0
    %174 = vmatpush1.bf16.msra.mxu0 0
    %175 = vmatprep.subr.bf16.mxu0 0
    %176 = vmatpush1.bf16.msra.mxu0 0
    %177 = vmatprep.subr.bf16.mxu0 0
    %178 = vmatpush1.bf16.msra.mxu0 0
    %179 = vmatprep.subr.bf16.mxu0 0
    %180 = vmatpush1.bf16.msra.mxu0 0
    %181 = vmatprep.mubr.bf16.mxu0 0
    %182 = vmatmul.mubr.bf16.gmra.mrb[0].mxu0 %v143
    %v183 = vpop.f32.mrb[0].mxu0
    %v184 = vadd.f32 0.0, %v183
    %v185 = vpop.f32.mrb[0].mxu0
    %v186 = vpop.f32.mrb[0].mxu0
    %v187 = vadd.f32 0.0, %v186
    %v188 = vpop.f32.mrb[0].mxu0
    %189 = vdwg.mxu0
    %v191 = vsel %vm101, %v135, 0
    %v194 = vsel %vm145, %v136, 0
    %196 = vmatprep.subr.bf16.mxu0 0
    %197 = vmatpush1.bf16.msra.mxu0 %v194
    %198 = vmatprep.subr.bf16.mxu0 0
    %199 = vmatpush1.bf16.msra.mxu0 0
    %200 = vmatprep.subr.bf16.mxu0 0
    %201 = vmatpush1.bf16.msra.mxu0 0
    %202 = vmatprep.subr.bf16.mxu0 0
    %203 = vmatpush1.bf16.msra.mxu0 0
    %204 = vmatprep.subr.bf16.mxu0 0
    %205 = vmatpush1.bf16.msra.mxu0 0
    %206 = vmatprep.subr.bf16.mxu0 0
    %207 = vmatpush1.bf16.msra.mxu0 0
    %208 = vmatprep.subr.bf16.mxu0 0
    %209 = vmatpush1.bf16.msra.mxu0 0
    %210 = vmatprep.subr.bf16.mxu0 0
    %211 = vmatpush1.bf16.msra.mxu0 0
    %212 = vmatprep.subr.bf16.mxu0 0
    %213 = vmatpush1.bf16.msra.mxu0 0
    %214 = vmatprep.subr.bf16.mxu0 0
    %215 = vmatpush1.bf16.msra.mxu0 0
    %216 = vmatprep.subr.bf16.mxu0 0
    %217 = vmatpush1.bf16.msra.mxu0 0
    %218 = vmatprep.subr.bf16.mxu0 0
    %219 = vmatpush1.bf16.msra.mxu0 0
    %220 = vmatprep.subr.bf16.mxu0 0
    %221 = vmatpush1.bf16.msra.mxu0 0
    %222 = vmatprep.subr.bf16.mxu0 0
    %223 = vmatpush1.bf16.msra.mxu0 0
    %224 = vmatprep.subr.bf16.mxu0 0
    %225 = vmatpush1.bf16.msra.mxu0 0
    %226 = vmatprep.subr.bf16.mxu0 0
    %227 = vmatpush1.bf16.msra.mxu0 0
    %228 = vmatprep.mubr.bf16.mxu0 0
    %229 = vmatmul.mubr.bf16.gmra.mrb[0].mxu0 %v191
    %v230 = vpop.f32.mrb[0].mxu0
    %v231 = vadd.f32 %v184, %v230
    %v232 = vpop.f32.mrb[0].mxu0
    %v233 = vpop.f32.mrb[0].mxu0
    %v234 = vadd.f32 %v187, %v233
    %v235 = vpop.f32.mrb[0].mxu0
    %236 = vdwg.mxu0
    %v237 = vld [vmem:[#allocation2 + $0x2] sm:$0xff]
    %v238 = vld [vmem:[#allocation2 + $0xa] sm:$0xff]
    %v239 = vpack.c.bf16 %v238, %v237
    %s240 = scalar_lea.vmem %s1, 8
    %v241 = vld [vmem:[%s240] sm:$0xf]
    %v243 = vsel %vm101, %v239, 0
    %v246 = vsel %vm145, %v241, 0
    %248 = vmatprep.subr.bf16.mxu0 0
    %249 = vmatpush1.bf16.msra.mxu0 %v246
    %250 = vmatprep.subr.bf16.mxu0 0
    %251 = vmatpush1.bf16.msra.mxu0 0
    %252 = vmatprep.subr.bf16.mxu0 0
    %253 = vmatpush1.bf16.msra.mxu0 0
    %254 = vmatprep.subr.bf16.mxu0 0
    %255 = vmatpush1.bf16.msra.mxu0 0
    %256 = vmatprep.subr.bf16.mxu0 0
    %257 = vmatpush1.bf16.msra.mxu0 0
    %258 = vmatprep.subr.bf16.mxu0 0
    %259 = vmatpush1.bf16.msra.mxu0 0
    %260 = vmatprep.subr.bf16.mxu0 0
    %261 = vmatpush1.bf16.msra.mxu0 0
    %262 = vmatprep.subr.bf16.mxu0 0
    %263 = vmatpush1.bf16.msra.mxu0 0
    %264 = vmatprep.subr.bf16.mxu0 0
    %265 = vmatpush1.bf16.msra.mxu0 0
    %266 = vmatprep.subr.bf16.mxu0 0
    %267 = vmatpush1.bf16.msra.mxu0 0
    %268 = vmatprep.subr.bf16.mxu0 0
    %269 = vmatpush1.bf16.msra.mxu0 0
    %270 = vmatprep.subr.bf16.mxu0 0
    %271 = vmatpush1.bf16.msra.mxu0 0
    %272 = vmatprep.subr.bf16.mxu0 0
    %273 = vmatpush1.bf16.msra.mxu0 0
    %274 = vmatprep.subr.bf16.mxu0 0
    %275 = vmatpush1.bf16.msra.mxu0 0
    %276 = vmatprep.subr.bf16.mxu0 0
    %277 = vmatpush1.bf16.msra.mxu0 0
    %278 = vmatprep.subr.bf16.mxu0 0
    %279 = vmatpush1.bf16.msra.mxu0 0
    %280 = vmatprep.mubr.bf16.mxu0 0
    %281 = vmatmul.mubr.bf16.gmra.mrb[0].mxu0 %v243
    %v282 = vpop.f32.mrb[0].mxu0
    %v283 = vadd.f32 0.0, %v282
    %v284 = vpop.f32.mrb[0].mxu0
    %v285 = vpop.f32.mrb[0].mxu0
    %v286 = vadd.f32 0.0, %v285
    %v287 = vpop.f32.mrb[0].mxu0
    %288 = vdwg.mxu0
    %v289 = vadd.f32 %v231, %v283
    %v290 = vadd.f32 %v234, %v286
    %v291 = vld [vmem:[#allocation2 + $0x3] sm:$0xff]
    %v292 = vld [vmem:[#allocation2 + $0xb] sm:$0xff]
    %v293 = vpack.c.bf16 %v292, %v291
    %s294 = scalar_lea.vmem %s1, 12
    %v295 = vld [vmem:[%s294] sm:$0xf]
    %v297 = vsel %vm101, %v293, 0
    %v300 = vsel %vm145, %v295, 0
    %302 = vmatprep.subr.bf16.mxu0 0
    %303 = vmatpush1.bf16.msra.mxu0 %v300
    %304 = vmatprep.subr.bf16.mxu0 0
    %305 = vmatpush1.bf16.msra.mxu0 0
    %306 = vmatprep.subr.bf16.mxu0 0
    %307 = vmatpush1.bf16.msra.mxu0 0
    %308 = vmatprep.subr.bf16.mxu0 0
    %309 = vmatpush1.bf16.msra.mxu0 0
    %310 = vmatprep.subr.bf16.mxu0 0
    %311 = vmatpush1.bf16.msra.mxu0 0
    %312 = vmatprep.subr.bf16.mxu0 0
    %313 = vmatpush1.bf16.msra.mxu0 0
    %314 = vmatprep.subr.bf16.mxu0 0
    %315 = vmatpush1.bf16.msra.mxu0 0
    %316 = vmatprep.subr.bf16.mxu0 0
    %317 = vmatpush1.bf16.msra.mxu0 0
    %318 = vmatprep.subr.bf16.mxu0 0
    %319 = vmatpush1.bf16.msra.mxu0 0
    %320 = vmatprep.subr.bf16.mxu0 0
    %321 = vmatpush1.bf16.msra.mxu0 0
    %322 = vmatprep.subr.bf16.mxu0 0
    %323 = vmatpush1.bf16.msra.mxu0 0
    %324 = vmatprep.subr.bf16.mxu0 0
    %325 = vmatpush1.bf16.msra.mxu0 0
    %326 = vmatprep.subr.bf16.mxu0 0
    %327 = vmatpush1.bf16.msra.mxu0 0
    %328 = vmatprep.subr.bf16.mxu0 0
    %329 = vmatpush1.bf16.msra.mxu0 0
    %330 = vmatprep.subr.bf16.mxu0 0
    %331 = vmatpush1.bf16.msra.mxu0 0
    %332 = vmatprep.subr.bf16.mxu0 0
    %333 = vmatpush1.bf16.msra.mxu0 0
    %334 = vmatprep.mubr.bf16.mxu0 0
    %335 = vmatmul.mubr.bf16.gmra.mrb[0].mxu0 %v297
    %v336 = vpop.f32.mrb[0].mxu0
    %v337 = vadd.f32 0.0, %v336
    %v338 = vpop.f32.mrb[0].mxu0
    %v339 = vpop.f32.mrb[0].mxu0
    %v340 = vadd.f32 0.0, %v339
    %v341 = vpop.f32.mrb[0].mxu0
    %342 = vdwg.mxu0
    %v343 = vadd.f32 %v289, %v337
    %v344 = vadd.f32 %v290, %v340
    %v345 = vld [vmem:[#allocation2 + $0x4] sm:$0xff]
    %v346 = vld [vmem:[#allocation2 + $0xc] sm:$0xff]
    %v347 = vpack.c.bf16 %v346, %v345
    %s348 = scalar_lea.vmem %s1, 16
    %v349 = vld [vmem:[%s348] sm:$0xf]
    %v351 = vsel %vm101, %v347, 0
    %v354 = vsel %vm145, %v349, 0
    %356 = vmatprep.subr.bf16.mxu0 0
    %357 = vmatpush1.bf16.msra.mxu0 %v354
    %358 = vmatprep.subr.bf16.mxu0 0
    %359 = vmatpush1.bf16.msra.mxu0 0
    %360 = vmatprep.subr.bf16.mxu0 0
    %361 = vmatpush1.bf16.msra.mxu0 0
    %362 = vmatprep.subr.bf16.mxu0 0
    %363 = vmatpush1.bf16.msra.mxu0 0
    %364 = vmatprep.subr.bf16.mxu0 0
    %365 = vmatpush1.bf16.msra.mxu0 0
    %366 = vmatprep.subr.bf16.mxu0 0
    %367 = vmatpush1.bf16.msra.mxu0 0
    %368 = vmatprep.subr.bf16.mxu0 0
    %369 = vmatpush1.bf16.msra.mxu0 0
    %370 = vmatprep.subr.bf16.mxu0 0
    %371 = vmatpush1.bf16.msra.mxu0 0
    %372 = vmatprep.subr.bf16.mxu0 0
    %373 = vmatpush1.bf16.msra.mxu0 0
    %374 = vmatprep.subr.bf16.mxu0 0
    %375 = vmatpush1.bf16.msra.mxu0 0
    %376 = vmatprep.subr.bf16.mxu0 0
    %377 = vmatpush1.bf16.msra.mxu0 0
    %378 = vmatprep.subr.bf16.mxu0 0
    %379 = vmatpush1.bf16.msra.mxu0 0
    %380 = vmatprep.subr.bf16.mxu0 0
    %381 = vmatpush1.bf16.msra.mxu0 0
    %382 = vmatprep.subr.bf16.mxu0 0
    %383 = vmatpush1.bf16.msra.mxu0 0
    %384 = vmatprep.subr.bf16.mxu0 0
    %385 = vmatpush1.bf16.msra.mxu0 0
    %386 = vmatprep.subr.bf16.mxu0 0
    %387 = vmatpush1.bf16.msra.mxu0 0
    %388 = vmatprep.mubr.bf16.mxu0 0
    %389 = vmatmul.mubr.bf16.gmra.mrb[0].mxu0 %v351
    %v390 = vpop.f32.mrb[0].mxu0
    %v391 = vadd.f32 0.0, %v390
    %v392 = vpop.f32.mrb[0].mxu0
    %v393 = vpop.f32.mrb[0].mxu0
    %v394 = vadd.f32 0.0, %v393
    %v395 = vpop.f32.mrb[0].mxu0
    %396 = vdwg.mxu0
    %v397 = vadd.f32 %v343, %v391
    %v398 = vadd.f32 %v344, %v394
    %v399 = vld [vmem:[#allocation2 + $0x5] sm:$0xff]
    %v400 = vld [vmem:[#allocation2 + $0xd] sm:$0xff]
    %v401 = vpack.c.bf16 %v400, %v399
    %s402 = scalar_lea.vmem %s1, 20
    %v403 = vld [vmem:[%s402] sm:$0xf]
    %v405 = vsel %vm101, %v401, 0
    %v408 = vsel %vm145, %v403, 0
    %410 = vmatprep.subr.bf16.mxu0 0
    %411 = vmatpush1.bf16.msra.mxu0 %v408
    %412 = vmatprep.subr.bf16.mxu0 0
    %413 = vmatpush1.bf16.msra.mxu0 0
    %414 = vmatprep.subr.bf16.mxu0 0
    %415 = vmatpush1.bf16.msra.mxu0 0
    %416 = vmatprep.subr.bf16.mxu0 0
    %417 = vmatpush1.bf16.msra.mxu0 0
    %418 = vmatprep.subr.bf16.mxu0 0
    %419 = vmatpush1.bf16.msra.mxu0 0
    %420 = vmatprep.subr.bf16.mxu0 0
    %421 = vmatpush1.bf16.msra.mxu0 0
    %422 = vmatprep.subr.bf16.mxu0 0
    %423 = vmatpush1.bf16.msra.mxu0 0
    %424 = vmatprep.subr.bf16.mxu0 0
    %425 = vmatpush1.bf16.msra.mxu0 0
    %426 = vmatprep.subr.bf16.mxu0 0
    %427 = vmatpush1.bf16.msra.mxu0 0
    %428 = vmatprep.subr.bf16.mxu0 0
    %429 = vmatpush1.bf16.msra.mxu0 0
    %430 = vmatprep.subr.bf16.mxu0 0
    %431 = vmatpush1.bf16.msra.mxu0 0
    %432 = vmatprep.subr.bf16.mxu0 0
    %433 = vmatpush1.bf16.msra.mxu0 0
    %434 = vmatprep.subr.bf16.mxu0 0
    %435 = vmatpush1.bf16.msra.mxu0 0
    %436 = vmatprep.subr.bf16.mxu0 0
    %437 = vmatpush1.bf16.msra.mxu0 0
    %438 = vmatprep.subr.bf16.mxu0 0
    %439 = vmatpush1.bf16.msra.mxu0 0
    %440 = vmatprep.subr.bf16.mxu0 0
    %441 = vmatpush1.bf16.msra.mxu0 0
    %442 = vmatprep.mubr.bf16.mxu0 0
    %443 = vmatmul.mubr.bf16.gmra.mrb[0].mxu0 %v405
    %v444 = vpop.f32.mrb[0].mxu0
    %v445 = vadd.f32 0.0, %v444
    %v446 = vpop.f32.mrb[0].mxu0
    %v447 = vpop.f32.mrb[0].mxu0
    %v448 = vadd.f32 0.0, %v447
    %v449 = vpop.f32.mrb[0].mxu0
    %450 = vdwg.mxu0
    %v451 = vadd.f32 %v397, %v445
    %v452 = vadd.f32 %v398, %v448
    %v453 = vld [vmem:[#allocation2 + $0x6] sm:$0xff]
    %v454 = vld [vmem:[#allocation2 + $0xe] sm:$0xff]
    %v455 = vpack.c.bf16 %v454, %v453
    %s456 = scalar_lea.vmem %s1, 24
    %v457 = vld [vmem:[%s456] sm:$0xf]
    %v459 = vsel %vm101, %v455, 0
    %v462 = vsel %vm145, %v457, 0
    %464 = vmatprep.subr.bf16.mxu0 0
    %465 = vmatpush1.bf16.msra.mxu0 %v462
    %466 = vmatprep.subr.bf16.mxu0 0
    %467 = vmatpush1.bf16.msra.mxu0 0
    %468 = vmatprep.subr.bf16.mxu0 0
    %469 = vmatpush1.bf16.msra.mxu0 0
    %470 = vmatprep.subr.bf16.mxu0 0
    %471 = vmatpush1.bf16.msra.mxu0 0
    %472 = vmatprep.subr.bf16.mxu0 0
    %473 = vmatpush1.bf16.msra.mxu0 0
    %474 = vmatprep.subr.bf16.mxu0 0
    %475 = vmatpush1.bf16.msra.mxu0 0
    %476 = vmatprep.subr.bf16.mxu0 0
    %477 = vmatpush1.bf16.msra.mxu0 0
    %478 = vmatprep.subr.bf16.mxu0 0
    %479 = vmatpush1.bf16.msra.mxu0 0
    %480 = vmatprep.subr.bf16.mxu0 0
    %481 = vmatpush1.bf16.msra.mxu0 0
    %482 = vmatprep.subr.bf16.mxu0 0
    %483 = vmatpush1.bf16.msra.mxu0 0
    %484 = vmatprep.subr.bf16.mxu0 0
    %485 = vmatpush1.bf16.msra.mxu0 0
    %486 = vmatprep.subr.bf16.mxu0 0
    %487 = vmatpush1.bf16.msra.mxu0 0
    %488 = vmatprep.subr.bf16.mxu0 0
    %489 = vmatpush1.bf16.msra.mxu0 0
    %490 = vmatprep.subr.bf16.mxu0 0
    %491 = vmatpush1.bf16.msra.mxu0 0
    %492 = vmatprep.subr.bf16.mxu0 0
    %493 = vmatpush1.bf16.msra.mxu0 0
    %494 = vmatprep.subr.bf16.mxu0 0
    %495 = vmatpush1.bf16.msra.mxu0 0
    %496 = vmatprep.mubr.bf16.mxu0 0
    %497 = vmatmul.mubr.bf16.gmra.mrb[0].mxu0 %v459
    %v498 = vpop.f32.mrb[0].mxu0
    %v499 = vadd.f32 0.0, %v498
    %v500 = vpop.f32.mrb[0].mxu0
    %v501 = vpop.f32.mrb[0].mxu0
    %v502 = vadd.f32 0.0, %v501
    %v503 = vpop.f32.mrb[0].mxu0
    %504 = vdwg.mxu0
    %v505 = vadd.f32 %v451, %v499
    %v506 = vadd.f32 %v452, %v502
    %v507 = vld [vmem:[#allocation2 + $0x7] sm:$0xff]
    %v508 = vld [vmem:[#allocation2 + $0xf] sm:$0xff]
    %v509 = vpack.c.bf16 %v508, %v507
    %s510 = scalar_lea.vmem %s1, 28
    %v511 = vld [vmem:[%s510] sm:$0xf]
    %v513 = vsel %vm101, %v509, 0
    %v516 = vsel %vm145, %v511, 0
    %518 = vmatprep.subr.bf16.mxu0 0
    %519 = vmatpush1.bf16.msra.mxu0 %v516
    %520 = vmatprep.subr.bf16.mxu0 0
    %521 = vmatpush1.bf16.msra.mxu0 0
    %522 = vmatprep.subr.bf16.mxu0 0
    %523 = vmatpush1.bf16.msra.mxu0 0
    %524 = vmatprep.subr.bf16.mxu0 0
    %525 = vmatpush1.bf16.msra.mxu0 0
    %526 = vmatprep.subr.bf16.mxu0 0
    %527 = vmatpush1.bf16.msra.mxu0 0
    %528 = vmatprep.subr.bf16.mxu0 0
    %529 = vmatpush1.bf16.msra.mxu0 0
    %530 = vmatprep.subr.bf16.mxu0 0
    %531 = vmatpush1.bf16.msra.mxu0 0
    %532 = vmatprep.subr.bf16.mxu0 0
    %533 = vmatpush1.bf16.msra.mxu0 0
    %534 = vmatprep.subr.bf16.mxu0 0
    %535 = vmatpush1.bf16.msra.mxu0 0
    %536 = vmatprep.subr.bf16.mxu0 0
    %537 = vmatpush1.bf16.msra.mxu0 0
    %538 = vmatprep.subr.bf16.mxu0 0
    %539 = vmatpush1.bf16.msra.mxu0 0
    %540 = vmatprep.subr.bf16.mxu0 0
    %541 = vmatpush1.bf16.msra.mxu0 0
    %542 = vmatprep.subr.bf16.mxu0 0
    %543 = vmatpush1.bf16.msra.mxu0 0
    %544 = vmatprep.subr.bf16.mxu0 0
    %545 = vmatpush1.bf16.msra.mxu0 0
    %546 = vmatprep.subr.bf16.mxu0 0
    %547 = vmatpush1.bf16.msra.mxu0 0
    %548 = vmatprep.subr.bf16.mxu0 0
    %549 = vmatpush1.bf16.msra.mxu0 0
    %550 = vmatprep.mubr.bf16.mxu0 0
    %551 = vmatmul.mubr.bf16.gmra.mrb[0].mxu0 %v513
    %v552 = vpop.f32.mrb[0].mxu0
    %v553 = vadd.f32 0.0, %v552
    %v554 = vpop.f32.mrb[0].mxu0
    %v555 = vpop.f32.mrb[0].mxu0
    %v556 = vadd.f32 0.0, %v555
    %v557 = vpop.f32.mrb[0].mxu0
    %558 = vdwg.mxu0
    %v559 = vadd.f32 %v505, %v553
    %v560 = vadd.f32 %v506, %v556
    %v561 = vld [vmem:[#allocation2 + $0x8] sm:$0xff]
    %v562 = vld [vmem:[#allocation2 + $0x10] sm:$0xff]
    %v563 = vpack.c.bf16 %v562, %v561
    %s564 = scalar_lea.vmem %s1, 32
    %v565 = vld [vmem:[%s564] sm:$0xf]
    %v567 = vsel %vm101, %v563, 0
    %v570 = vsel %vm145, %v565, 0
    %572 = vmatprep.subr.bf16.mxu0 0
    %573 = vmatpush1.bf16.msra.mxu0 %v570
    %574 = vmatprep.subr.bf16.mxu0 0
    %575 = vmatpush1.bf16.msra.mxu0 0
    %576 = vmatprep.subr.bf16.mxu0 0
    %577 = vmatpush1.bf16.msra.mxu0 0
    %578 = vmatprep.subr.bf16.mxu0 0
    %579 = vmatpush1.bf16.msra.mxu0 0
    %580 = vmatprep.subr.bf16.mxu0 0
    %581 = vmatpush1.bf16.msra.mxu0 0
    %582 = vmatprep.subr.bf16.mxu0 0
    %583 = vmatpush1.bf16.msra.mxu0 0
    %584 = vmatprep.subr.bf16.mxu0 0
    %585 = vmatpush1.bf16.msra.mxu0 0
    %586 = vmatprep.subr.bf16.mxu0 0
    %587 = vmatpush1.bf16.msra.mxu0 0
    %588 = vmatprep.subr.bf16.mxu0 0
    %589 = vmatpush1.bf16.msra.mxu0 0
    %590 = vmatprep.subr.bf16.mxu0 0
    %591 = vmatpush1.bf16.msra.mxu0 0
    %592 = vmatprep.subr.bf16.mxu0 0
    %593 = vmatpush1.bf16.msra.mxu0 0
    %594 = vmatprep.subr.bf16.mxu0 0
    %595 = vmatpush1.bf16.msra.mxu0 0
    %596 = vmatprep.subr.bf16.mxu0 0
    %597 = vmatpush1.bf16.msra.mxu0 0
    %598 = vmatprep.subr.bf16.mxu0 0
    %599 = vmatpush1.bf16.msra.mxu0 0
    %600 = vmatprep.subr.bf16.mxu0 0
    %601 = vmatpush1.bf16.msra.mxu0 0
    %602 = vmatprep.subr.bf16.mxu0 0
    %603 = vmatpush1.bf16.msra.mxu0 0
    %604 = vmatprep.mubr.bf16.mxu0 0
    %605 = vmatmul.mubr.bf16.gmra.mrb[0].mxu0 %v567
    %v606 = vpop.f32.mrb[0].mxu0
    %v607 = vadd.f32 0.0, %v606
    %v608 = vpop.f32.mrb[0].mxu0
    %v609 = vpop.f32.mrb[0].mxu0
    %v610 = vadd.f32 0.0, %v609
    %v611 = vpop.f32.mrb[0].mxu0
    %612 = vdwg.mxu0
    %v613 = vadd.f32 %v559, %v607
    %v614 = vadd.f32 %v560, %v610
    %v615 = vld [vmem:[#allocation2 + $0x9] sm:$0xff]
    %v616 = vld [vmem:[#allocation2 + $0x11] sm:$0xff]
    %v617 = vpack.c.bf16 %v616, %v615
    %s618 = scalar_lea.vmem %s1, 36
    %v619 = vld [vmem:[%s618] sm:$0xf]
    %v621 = vsel %vm101, %v617, 0
    %v624 = vsel %vm145, %v619, 0
    %626 = vmatprep.subr.bf16.mxu0 0
    %627 = vmatpush1.bf16.msra.mxu0 %v624
    %628 = vmatprep.subr.bf16.mxu0 0
    %629 = vmatpush1.bf16.msra.mxu0 0
    %630 = vmatprep.subr.bf16.mxu0 0
    %631 = vmatpush1.bf16.msra.mxu0 0
    %632 = vmatprep.subr.bf16.mxu0 0
    %633 = vmatpush1.bf16.msra.mxu0 0
    %634 = vmatprep.subr.bf16.mxu0 0
    %635 = vmatpush1.bf16.msra.mxu0 0
    %636 = vmatprep.subr.bf16.mxu0 0
    %637 = vmatpush1.bf16.msra.mxu0 0
    %638 = vmatprep.subr.bf16.mxu0 0
    %639 = vmatpush1.bf16.msra.mxu0 0
    %640 = vmatprep.subr.bf16.mxu0 0
    %641 = vmatpush1.bf16.msra.mxu0 0
    %642 = vmatprep.subr.bf16.mxu0 0
    %643 = vmatpush1.bf16.msra.mxu0 0
    %644 = vmatprep.subr.bf16.mxu0 0
    %645 = vmatpush1.bf16.msra.mxu0 0
    %646 = vmatprep.subr.bf16.mxu0 0
    %647 = vmatpush1.bf16.msra.mxu0 0
    %648 = vmatprep.subr.bf16.mxu0 0
    %649 = vmatpush1.bf16.msra.mxu0 0
    %650 = vmatprep.subr.bf16.mxu0 0
    %651 = vmatpush1.bf16.msra.mxu0 0
    %652 = vmatprep.subr.bf16.mxu0 0
    %653 = vmatpush1.bf16.msra.mxu0 0
    %654 = vmatprep.subr.bf16.mxu0 0
    %655 = vmatpush1.bf16.msra.mxu0 0
    %656 = vmatprep.subr.bf16.mxu0 0
    %657 = vmatpush1.bf16.msra.mxu0 0
    %658 = vmatprep.mubr.bf16.mxu0 0
    %659 = vmatmul.mubr.bf16.gmra.mrb[0].mxu0 %v621
    %v660 = vpop.f32.mrb[0].mxu0
    %v661 = vadd.f32 0.0, %v660
    %v662 = vpop.f32.mrb[0].mxu0
    %v663 = vpop.f32.mrb[0].mxu0
    %v664 = vadd.f32 0.0, %v663
    %v665 = vpop.f32.mrb[0].mxu0
    %666 = vdwg.mxu0
    %v667 = vadd.f32 %v613, %v661
    %v668 = vadd.f32 %v614, %v664
    %v669 = vld [vmem:[#allocation2 + $0xa] sm:$0xff]
    %v670 = vld [vmem:[#allocation2 + $0x12] sm:$0xff]
    %v671 = vpack.c.bf16 %v670, %v669
    %s672 = scalar_lea.vmem %s1, 40
    %v673 = vld [vmem:[%s672] sm:$0xf]
    %v675 = vsel %vm101, %v671, 0
    %v678 = vsel %vm145, %v673, 0
    %680 = vmatprep.subr.bf16.mxu0 0
    %681 = vmatpush1.bf16.msra.mxu0 %v678
    %682 = vmatprep.subr.bf16.mxu0 0
    %683 = vmatpush1.bf16.msra.mxu0 0
    %684 = vmatprep.subr.bf16.mxu0 0
    %685 = vmatpush1.bf16.msra.mxu0 0
    %686 = vmatprep.subr.bf16.mxu0 0
    %687 = vmatpush1.bf16.msra.mxu0 0
    %688 = vmatprep.subr.bf16.mxu0 0
    %689 = vmatpush1.bf16.msra.mxu0 0
    %690 = vmatprep.subr.bf16.mxu0 0
    %691 = vmatpush1.bf16.msra.mxu0 0
    %692 = vmatprep.subr.bf16.mxu0 0
    %693 = vmatpush1.bf16.msra.mxu0 0
    %694 = vmatprep.subr.bf16.mxu0 0
    %695 = vmatpush1.bf16.msra.mxu0 0
    %696 = vmatprep.subr.bf16.mxu0 0
    %697 = vmatpush1.bf16.msra.mxu0 0
    %698 = vmatprep.subr.bf16.mxu0 0
    %699 = vmatpush1.bf16.msra.mxu0 0
    %700 = vmatprep.subr.bf16.mxu0 0
    %701 = vmatpush1.bf16.msra.mxu0 0
    %702 = vmatprep.subr.bf16.mxu0 0
    %703 = vmatpush1.bf16.msra.mxu0 0
    %704 = vmatprep.subr.bf16.mxu0 0
    %705 = vmatpush1.bf16.msra.mxu0 0
    %706 = vmatprep.subr.bf16.mxu0 0
    %707 = vmatpush1.bf16.msra.mxu0 0
    %708 = vmatprep.subr.bf16.mxu0 0
    %709 = vmatpush1.bf16.msra.mxu0 0
    %710 = vmatprep.subr.bf16.mxu0 0
    %711 = vmatpush1.bf16.msra.mxu0 0
    %712 = vmatprep.mubr.bf16.mxu0 0
    %713 = vmatmul.mubr.bf16.gmra.mrb[0].mxu0 %v675
    %v714 = vpop.f32.mrb[0].mxu0
    %v715 = vadd.f32 0.0, %v714
    %v716 = vpop.f32.mrb[0].mxu0
    %v717 = vpop.f32.mrb[0].mxu0
    %v718 = vadd.f32 0.0, %v717
    %v719 = vpop.f32.mrb[0].mxu0
    %720 = vdwg.mxu0
    %v721 = vadd.f32 %v667, %v715
    %v722 = vadd.f32 %v668, %v718
    %v723 = vld [vmem:[#allocation2 + $0xb] sm:$0xff]
    %v724 = vld [vmem:[#allocation2 + $0x13] sm:$0xff]
    %v725 = vpack.c.bf16 %v724, %v723
    %s726 = scalar_lea.vmem %s1, 44
    %v727 = vld [vmem:[%s726] sm:$0xf]
    %v729 = vsel %vm101, %v725, 0
    %v732 = vsel %vm145, %v727, 0
    %734 = vmatprep.subr.bf16.mxu0 0
    %735 = vmatpush1.bf16.msra.mxu0 %v732
    %736 = vmatprep.subr.bf16.mxu0 0
    %737 = vmatpush1.bf16.msra.mxu0 0
    %738 = vmatprep.subr.bf16.mxu0 0
    %739 = vmatpush1.bf16.msra.mxu0 0
    %740 = vmatprep.subr.bf16.mxu0 0
    %741 = vmatpush1.bf16.msra.mxu0 0
    %742 = vmatprep.subr.bf16.mxu0 0
    %743 = vmatpush1.bf16.msra.mxu0 0
    %744 = vmatprep.subr.bf16.mxu0 0
    %745 = vmatpush1.bf16.msra.mxu0 0
    %746 = vmatprep.subr.bf16.mxu0 0
    %747 = vmatpush1.bf16.msra.mxu0 0
    %748 = vmatprep.subr.bf16.mxu0 0
    %749 = vmatpush1.bf16.msra.mxu0 0
    %750 = vmatprep.subr.bf16.mxu0 0
    %751 = vmatpush1.bf16.msra.mxu0 0
    %752 = vmatprep.subr.bf16.mxu0 0
    %753 = vmatpush1.bf16.msra.mxu0 0
    %754 = vmatprep.subr.bf16.mxu0 0
    %755 = vmatpush1.bf16.msra.mxu0 0
    %756 = vmatprep.subr.bf16.mxu0 0
    %757 = vmatpush1.bf16.msra.mxu0 0
    %758 = vmatprep.subr.bf16.mxu0 0
    %759 = vmatpush1.bf16.msra.mxu0 0
    %760 = vmatprep.subr.bf16.mxu0 0
    %761 = vmatpush1.bf16.msra.mxu0 0
    %762 = vmatprep.subr.bf16.mxu0 0
    %763 = vmatpush1.bf16.msra.mxu0 0
    %764 = vmatprep.subr.bf16.mxu0 0
    %765 = vmatpush1.bf16.msra.mxu0 0
    %766 = vmatprep.mubr.bf16.mxu0 0
    %767 = vmatmul.mubr.bf16.gmra.mrb[0].mxu0 %v729
    %v768 = vpop.f32.mrb[0].mxu0
    %v769 = vadd.f32 0.0, %v768
    %v770 = vpop.f32.mrb[0].mxu0
    %v771 = vpop.f32.mrb[0].mxu0
    %v772 = vadd.f32 0.0, %v771
    %v773 = vpop.f32.mrb[0].mxu0
    %774 = vdwg.mxu0
    %v775 = vadd.f32 %v721, %v769
    %v776 = vadd.f32 %v722, %v772
    %v777 = vld [vmem:[#allocation2 + $0xc] sm:$0xff]
    %v778 = vld [vmem:[#allocation2 + $0x14] sm:$0xff]
    %v779 = vpack.c.bf16 %v778, %v777
    %s780 = scalar_lea.vmem %s1, 48
    %v781 = vld [vmem:[%s780] sm:$0xf]
    %v783 = vsel %vm101, %v779, 0
    %v786 = vsel %vm145, %v781, 0
    %788 = vmatprep.subr.bf16.mxu0 0
    %789 = vmatpush1.bf16.msra.mxu0 %v786
    %790 = vmatprep.subr.bf16.mxu0 0
    %791 = vmatpush1.bf16.msra.mxu0 0
    %792 = vmatprep.subr.bf16.mxu0 0
    %793 = vmatpush1.bf16.msra.mxu0 0
    %794 = vmatprep.subr.bf16.mxu0 0
    %795 = vmatpush1.bf16.msra.mxu0 0
    %796 = vmatprep.subr.bf16.mxu0 0
    %797 = vmatpush1.bf16.msra.mxu0 0
    %798 = vmatprep.subr.bf16.mxu0 0
    %799 = vmatpush1.bf16.msra.mxu0 0
    %800 = vmatprep.subr.bf16.mxu0 0
    %801 = vmatpush1.bf16.msra.mxu0 0
    %802 = vmatprep.subr.bf16.mxu0 0
    %803 = vmatpush1.bf16.msra.mxu0 0
    %804 = vmatprep.subr.bf16.mxu0 0
    %805 = vmatpush1.bf16.msra.mxu0 0
    %806 = vmatprep.subr.bf16.mxu0 0
    %807 = vmatpush1.bf16.msra.mxu0 0
    %808 = vmatprep.subr.bf16.mxu0 0
    %809 = vmatpush1.bf16.msra.mxu0 0
    %810 = vmatprep.subr.bf16.mxu0 0
    %811 = vmatpush1.bf16.msra.mxu0 0
    %812 = vmatprep.subr.bf16.mxu0 0
    %813 = vmatpush1.bf16.msra.mxu0 0
    %814 = vmatprep.subr.bf16.mxu0 0
    %815 = vmatpush1.bf16.msra.mxu0 0
    %816 = vmatprep.subr.bf16.mxu0 0
    %817 = vmatpush1.bf16.msra.mxu0 0
    %818 = vmatprep.subr.bf16.mxu0 0
    %819 = vmatpush1.bf16.msra.mxu0 0
    %820 = vmatprep.mubr.bf16.mxu0 0
    %821 = vmatmul.mubr.bf16.gmra.mrb[0].mxu0 %v783
    %v822 = vpop.f32.mrb[0].mxu0
    %v823 = vadd.f32 0.0, %v822
    %v824 = vpop.f32.mrb[0].mxu0
    %v825 = vpop.f32.mrb[0].mxu0
    %v826 = vadd.f32 0.0, %v825
    %v827 = vpop.f32.mrb[0].mxu0
    %828 = vdwg.mxu0
    %v829 = vadd.f32 %v775, %v823
    %v830 = vadd.f32 %v776, %v826
    %v831 = vld [vmem:[#allocation2 + $0xd] sm:$0xff]
    %v832 = vld [vmem:[#allocation2 + $0x15] sm:$0xff]
    %v833 = vpack.c.bf16 %v832, %v831
    %s834 = scalar_lea.vmem %s1, 52
    %v835 = vld [vmem:[%s834] sm:$0xf]
    %v837 = vsel %vm101, %v833, 0
    %v840 = vsel %vm145, %v835, 0
    %842 = vmatprep.subr.bf16.mxu0 0
    %843 = vmatpush1.bf16.msra.mxu0 %v840
    %844 = vmatprep.subr.bf16.mxu0 0
    %845 = vmatpush1.bf16.msra.mxu0 0
    %846 = vmatprep.subr.bf16.mxu0 0
    %847 = vmatpush1.bf16.msra.mxu0 0
    %848 = vmatprep.subr.bf16.mxu0 0
    %849 = vmatpush1.bf16.msra.mxu0 0
    %850 = vmatprep.subr.bf16.mxu0 0
    %851 = vmatpush1.bf16.msra.mxu0 0
    %852 = vmatprep.subr.bf16.mxu0 0
    %853 = vmatpush1.bf16.msra.mxu0 0
    %854 = vmatprep.subr.bf16.mxu0 0
    %855 = vmatpush1.bf16.msra.mxu0 0
    %856 = vmatprep.subr.bf16.mxu0 0
    %857 = vmatpush1.bf16.msra.mxu0 0
    %858 = vmatprep.subr.bf16.mxu0 0
    %859 = vmatpush1.bf16.msra.mxu0 0
    %860 = vmatprep.subr.bf16.mxu0 0
    %861 = vmatpush1.bf16.msra.mxu0 0
    %862 = vmatprep.subr.bf16.mxu0 0
    %863 = vmatpush1.bf16.msra.mxu0 0
    %864 = vmatprep.subr.bf16.mxu0 0
    %865 = vmatpush1.bf16.msra.mxu0 0
    %866 = vmatprep.subr.bf16.mxu0 0
    %867 = vmatpush1.bf16.msra.mxu0 0
    %868 = vmatprep.subr.bf16.mxu0 0
    %869 = vmatpush1.bf16.msra.mxu0 0
    %870 = vmatprep.subr.bf16.mxu0 0
    %871 = vmatpush1.bf16.msra.mxu0 0
    %872 = vmatprep.subr.bf16.mxu0 0
    %873 = vmatpush1.bf16.msra.mxu0 0
    %874 = vmatprep.mubr.bf16.mxu0 0
    %875 = vmatmul.mubr.bf16.gmra.mrb[0].mxu0 %v837
    %v876 = vpop.f32.mrb[0].mxu0
    %v877 = vadd.f32 0.0, %v876
    %v878 = vpop.f32.mrb[0].mxu0
    %v879 = vpop.f32.mrb[0].mxu0
    %v880 = vadd.f32 0.0, %v879
    %v881 = vpop.f32.mrb[0].mxu0
    %882 = vdwg.mxu0
    %v883 = vadd.f32 %v829, %v877
    %v884 = vadd.f32 %v830, %v880
    %v885 = vld [vmem:[#allocation2 + $0xe] sm:$0xff]
    %v886 = vld [vmem:[#allocation2 + $0x16] sm:$0xff]
    %v887 = vpack.c.bf16 %v886, %v885
    %s888 = scalar_lea.vmem %s1, 56
    %v889 = vld [vmem:[%s888] sm:$0xf]
    %v891 = vsel %vm101, %v887, 0
    %v894 = vsel %vm145, %v889, 0
    %896 = vmatprep.subr.bf16.mxu0 0
    %897 = vmatpush1.bf16.msra.mxu0 %v894
    %898 = vmatprep.subr.bf16.mxu0 0
    %899 = vmatpush1.bf16.msra.mxu0 0
    %900 = vmatprep.subr.bf16.mxu0 0
    %901 = vmatpush1.bf16.msra.mxu0 0
    %902 = vmatprep.subr.bf16.mxu0 0
    %903 = vmatpush1.bf16.msra.mxu0 0
    %904 = vmatprep.subr.bf16.mxu0 0
    %905 = vmatpush1.bf16.msra.mxu0 0
    %906 = vmatprep.subr.bf16.mxu0 0
    %907 = vmatpush1.bf16.msra.mxu0 0
    %908 = vmatprep.subr.bf16.mxu0 0
    %909 = vmatpush1.bf16.msra.mxu0 0
    %910 = vmatprep.subr.bf16.mxu0 0
    %911 = vmatpush1.bf16.msra.mxu0 0
    %912 = vmatprep.subr.bf16.mxu0 0
    %913 = vmatpush1.bf16.msra.mxu0 0
    %914 = vmatprep.subr.bf16.mxu0 0
    %915 = vmatpush1.bf16.msra.mxu0 0
    %916 = vmatprep.subr.bf16.mxu0 0
    %917 = vmatpush1.bf16.msra.mxu0 0
    %918 = vmatprep.subr.bf16.mxu0 0
    %919 = vmatpush1.bf16.msra.mxu0 0
    %920 = vmatprep.subr.bf16.mxu0 0
    %921 = vmatpush1.bf16.msra.mxu0 0
    %922 = vmatprep.subr.bf16.mxu0 0
    %923 = vmatpush1.bf16.msra.mxu0 0
    %924 = vmatprep.subr.bf16.mxu0 0
    %925 = vmatpush1.bf16.msra.mxu0 0
    %926 = vmatprep.subr.bf16.mxu0 0
    %927 = vmatpush1.bf16.msra.mxu0 0
    %928 = vmatprep.mubr.bf16.mxu0 0
    %929 = vmatmul.mubr.bf16.gmra.mrb[0].mxu0 %v891
    %v930 = vpop.f32.mrb[0].mxu0
    %v931 = vadd.f32 0.0, %v930
    %v932 = vpop.f32.mrb[0].mxu0
    %v933 = vpop.f32.mrb[0].mxu0
    %v934 = vadd.f32 0.0, %v933
    %v935 = vpop.f32.mrb[0].mxu0
    %936 = vdwg.mxu0
    %v937 = vadd.f32 %v883, %v931
    %v938 = vadd.f32 %v884, %v934
    %v939 = vld [vmem:[%s2] sm:$0x1]
    %v941 = vlaneseq
    %v942 = vshrl.u32 %v941, 7
    %v943 = vsub.s32 0, %v942
    %v944 = vrot.slane %v939, %v943
    %v946 = vadd.f32 %v937, %v944
    %v947 = vadd.f32 %v938, %v944
    %v948 = vmul.f32 %v946, 0.2
    %v949 = vmul.f32 %v947, 0.2
    %v950 = vmax.f32 %v946, %v948
    %v951 = vmax.f32 %v947, %v949
    %vm952 = vcmask 261120
    %953 = vst.msk [vmem:[%s11] sm:$0xff] %vm952, %v950
    %954 = vst.msk [vmem:[%s11 + $0x8] sm:$0xff] %vm952, %v951
    %vm955 = vcmask 258048
    %956 = vst.msk [vmem:[#allocation3] sm:$0x1f] %vm955, 0.0
    %957 = vst.msk [vmem:[#allocation3 + $0xd] sm:$0x1f] %vm955, 0.0
    %v958 = vld [vmem:[%s11] ss:$2 sm:$0xff]
    %959 = vst.msk [vmem:[#allocation3 + $0x5] sm:$0xff] %vm952, %v958
    %960 = vst.msk [vmem:[#allocation3 + $0x12] sm:$0x1f] %vm955, 0.0
    %961 = vst.msk [vmem:[#allocation3 + $0x1f] sm:$0x1f] %vm955, 0.0
    %s962 = scalar_lea.vmem %s11, 1
    %v963 = vld [vmem:[%s962] ss:$2 sm:$0xff]
    %964 = vst.msk [vmem:[#allocation3 + $0x17] sm:$0xff] %vm952, %v963
    %v965 = vld [vmem:[#allocation3] sm:$0xff]
    %v966 = vpack.c.bf16 %v965, %v965
    %v967 = vld [vmem:[#allocation5] sm:$0xf]
    %v968 = vld [vmem:[#allocation5 + $0x4] sm:$0xf]
    %v969 = vld [vmem:[#allocation5 + $0x8] sm:$0xf]
    %v970 = vld [vmem:[#allocation5 + $0xc] sm:$0xf]
    %v971 = vld [vmem:[#allocation3 + $0x12] sm:$0xff]
    %v972 = vpack.c.bf16 %v971, %v971
    %s973 = scalar_lea.vmem [#allocation5], 16
    %v974 = vld [vmem:[%s973] sm:$0xf]
    %v975 = vld [vmem:[%s973 + $0x4] sm:$0xf]
    %v976 = vld [vmem:[%s973 + $0x8] sm:$0xf]
    %v977 = vld [vmem:[%s973 + $0xc] sm:$0xf]
    %v982 = vunpack.c.l.b16 %v974
    %v983 = vunpack.c.l.b16 %v975
    %v984 = vunpack.c.l.b16 %v976
    %v985 = vunpack.c.l.b16 %v977
    %v986 = vpack.c.b16 %v983, %v982
    %v987 = vpack.c.b16 %v985, %v984
    %v991 = vsel %vm952, %v972, 0
    %993 = vmatprep.subr.bf16.mxu0 0
    %994 = vmatpush1.bf16.msra.mxu0 %v986
    %995 = vmatprep.subr.bf16.mxu0 0
    %996 = vmatpush1.bf16.msra.mxu0 %v987
    %997 = vmatprep.subr.bf16.mxu0 0
    %998 = vmatpush1.bf16.msra.mxu0 0
    %999 = vmatprep.subr.bf16.mxu0 0
    %1000 = vmatpush1.bf16.msra.mxu0 0
    %1001 = vmatprep.subr.bf16.mxu0 0
    %1002 = vmatpush1.bf16.msra.mxu0 0
    %1003 = vmatprep.subr.bf16.mxu0 0
    %1004 = vmatpush1.bf16.msra.mxu0 0
    %1005 = vmatprep.subr.bf16.mxu0 0
    %1006 = vmatpush1.bf16.msra.mxu0 0
    %1007 = vmatprep.subr.bf16.mxu0 0
    %1008 = vmatpush1.bf16.msra.mxu0 0
    %1009 = vmatprep.subr.bf16.mxu0 0
    %1010 = vmatpush1.bf16.msra.mxu0 0
    %1011 = vmatprep.subr.bf16.mxu0 0
    %1012 = vmatpush1.bf16.msra.mxu0 0
    %1013 = vmatprep.subr.bf16.mxu0 0
    %1014 = vmatpush1.bf16.msra.mxu0 0
    %1015 = vmatprep.subr.bf16.mxu0 0
    %1016 = vmatpush1.bf16.msra.mxu0 0
    %1017 = vmatprep.subr.bf16.mxu0 0
    %1018 = vmatpush1.bf16.msra.mxu0 0
    %1019 = vmatprep.subr.bf16.mxu0 0
    %1020 = vmatpush1.bf16.msra.mxu0 0
    %1021 = vmatprep.subr.bf16.mxu0 0
    %1022 = vmatpush1.bf16.msra.mxu0 0
    %1023 = vmatprep.subr.bf16.mxu0 0
    %1024 = vmatpush1.bf16.msra.mxu0 0
    %1025 = vmatprep.mubr.bf16.mxu0 0
    %1026 = vmatmul.mubr.bf16.gmra.mrb[0].mxu0 %v991
    %v1027 = vpop.f32.mrb[0].mxu0
    %v1028 = vadd.f32 0.0, %v1027
    %v1029 = vpop.f32.mrb[0].mxu0
    %v1030 = vpop.f32.mrb[0].mxu0
    %v1031 = vpop.f32.mrb[0].mxu0
    %1032 = vdwg.mxu0
    %v1037 = vunpack.c.l.b16 %v967
    %v1038 = vunpack.c.l.b16 %v968
    %v1039 = vunpack.c.l.b16 %v969
    %v1040 = vunpack.c.l.b16 %v970
    %v1041 = vpack.c.b16 %v1038, %v1037
    %v1042 = vpack.c.b16 %v1040, %v1039
    %v1046 = vsel %vm952, %v966, 0
    %1048 = vmatprep.subr.bf16.mxu0 0
    %1049 = vmatpush1.bf16.msra.mxu0 %v1041
    %1050 = vmatprep.subr.bf16.mxu0 0
    %1051 = vmatpush1.bf16.msra.mxu0 %v1042
    %1052 = vmatprep.subr.bf16.mxu0 0
    %1053 = vmatpush1.bf16.msra.mxu0 0
    %1054 = vmatprep.subr.bf16.mxu0 0
    %1055 = vmatpush1.bf16.msra.mxu0 0
    %1056 = vmatprep.subr.bf16.mxu0 0
    %1057 = vmatpush1.bf16.msra.mxu0 0
    %1058 = vmatprep.subr.bf16.mxu0 0
    %1059 = vmatpush1.bf16.msra.mxu0 0
    %1060 = vmatprep.subr.bf16.mxu0 0
    %1061 = vmatpush1.bf16.msra.mxu0 0
    %1062 = vmatprep.subr.bf16.mxu0 0
    %1063 = vmatpush1.bf16.msra.mxu0 0
    %1064 = vmatprep.subr.bf16.mxu0 0
    %1065 = vmatpush1.bf16.msra.mxu0 0
    %1066 = vmatprep.subr.bf16.mxu0 0
    %1067 = vmatpush1.bf16.msra.mxu0 0
    %1068 = vmatprep.subr.bf16.mxu0 0
    %1069 = vmatpush1.bf16.msra.mxu0 0
    %1070 = vmatprep.subr.bf16.mxu0 0
    %1071 = vmatpush1.bf16.msra.mxu0 0
    %1072 = vmatprep.subr.bf16.mxu0 0
    %1073 = vmatpush1.bf16.msra.mxu0 0
    %1074 = vmatprep.subr.bf16.mxu0 0
    %1075 = vmatpush1.bf16.msra.mxu0 0
    %1076 = vmatprep.subr.bf16.mxu0 0
    %1077 = vmatpush1.bf16.msra.mxu0 0
    %1078 = vmatprep.subr.bf16.mxu0 0
    %1079 = vmatpush1.bf16.msra.mxu0 0
    %1080 = vmatprep.mubr.bf16.mxu0 0
    %1081 = vmatmul.mubr.bf16.gmra.mrb[0].mxu0 %v1046
    %v1082 = vpop.f32.mrb[0].mxu0
    %v1083 = vadd.f32 %v1028, %v1082
    %v1084 = vpop.f32.mrb[0].mxu0
    %v1085 = vpop.f32.mrb[0].mxu0
    %v1086 = vpop.f32.mrb[0].mxu0
    %1087 = vdwg.mxu0
    %v1088 = vld [vmem:[#allocation3 + $0x1] sm:$0xff]
    %v1089 = vpack.c.bf16 %v1088, %v1088
    %s1090 = scalar_lea.vmem [#allocation5], 32
    %v1091 = vld [vmem:[%s1090] sm:$0xf]
    %v1092 = vld [vmem:[%s1090 + $0x4] sm:$0xf]
    %v1093 = vld [vmem:[%s1090 + $0x8] sm:$0xf]
    %v1094 = vld [vmem:[%s1090 + $0xc] sm:$0xf]
    %v1099 = vunpack.c.l.b16 %v1091
    %v1100 = vunpack.c.l.b16 %v1092
    %v1101 = vunpack.c.l.b16 %v1093
    %v1102 = vunpack.c.l.b16 %v1094
    %v1103 = vpack.c.b16 %v1100, %v1099
    %v1104 = vpack.c.b16 %v1102, %v1101
    %v1108 = vsel %vm952, %v1089, 0
    %1110 = vmatprep.subr.bf16.mxu0 0
    %1111 = vmatpush1.bf16.msra.mxu0 %v1103
    %1112 = vmatprep.subr.bf16.mxu0 0
    %1113 = vmatpush1.bf16.msra.mxu0 %v1104
    %1114 = vmatprep.subr.bf16.mxu0 0
    %1115 = vmatpush1.bf16.msra.mxu0 0
    %1116 = vmatprep.subr.bf16.mxu0 0
    %1117 = vmatpush1.bf16.msra.mxu0 0
    %1118 = vmatprep.subr.bf16.mxu0 0
    %1119 = vmatpush1.bf16.msra.mxu0 0
    %1120 = vmatprep.subr.bf16.mxu0 0
    %1121 = vmatpush1.bf16.msra.mxu0 0
    %1122 = vmatprep.subr.bf16.mxu0 0
    %1123 = vmatpush1.bf16.msra.mxu0 0
    %1124 = vmatprep.subr.bf16.mxu0 0
    %1125 = vmatpush1.bf16.msra.mxu0 0
    %1126 = vmatprep.subr.bf16.mxu0 0
    %1127 = vmatpush1.bf16.msra.mxu0 0
    %1128 = vmatprep.subr.bf16.mxu0 0
    %1129 = vmatpush1.bf16.msra.mxu0 0
    %1130 = vmatprep.subr.bf16.mxu0 0
    %1131 = vmatpush1.bf16.msra.mxu0 0
    %1132 = vmatprep.subr.bf16.mxu0 0
    %1133 = vmatpush1.bf16.msra.mxu0 0
    %1134 = vmatprep.subr.bf16.mxu0 0
    %1135 = vmatpush1.bf16.msra.mxu0 0
    %1136 = vmatprep.subr.bf16.mxu0 0
    %1137 = vmatpush1.bf16.msra.mxu0 0
    %1138 = vmatprep.subr.bf16.mxu0 0
    %1139 = vmatpush1.bf16.msra.mxu0 0
    %1140 = vmatprep.subr.bf16.mxu0 0
    %1141 = vmatpush1.bf16.msra.mxu0 0
    %1142 = vmatprep.mubr.bf16.mxu0 0
    %1143 = vmatmul.mubr.bf16.gmra.mrb[0].mxu0 %v1108
    %v1144 = vpop.f32.mrb[0].mxu0
    %v1145 = vadd.f32 0.0, %v1144
    %v1146 = vpop.f32.mrb[0].mxu0
    %v1147 = vpop.f32.mrb[0].mxu0
    %v1148 = vpop.f32.mrb[0].mxu0
    %1149 = vdwg.mxu0
    %v1150 = vadd.f32 %v1083, %v1145
    %v1151 = vld [vmem:[#allocation3 + $0x13] sm:$0xff]
    %v1152 = vpack.c.bf16 %v1151, %v1151
    %s1153 = scalar_lea.vmem [#allocation5], 48
    %v1154 = vld [vmem:[%s1153] sm:$0xf]
    %v1155 = vld [vmem:[%s1153 + $0x4] sm:$0xf]
    %v1156 = vld [vmem:[%s1153 + $0x8] sm:$0xf]
    %v1157 = vld [vmem:[%s1153 + $0xc] sm:$0xf]
    %v1162 = vunpack.c.l.b16 %v1154
    %v1163 = vunpack.c.l.b16 %v1155
    %v1164 = vunpack.c.l.b16 %v1156
    %v1165 = vunpack.c.l.b16 %v1157
    %v1166 = vpack.c.b16 %v1163, %v1162
    %v1167 = vpack.c.b16 %v1165, %v1164
    %v1171 = vsel %vm952, %v1152, 0
    %1173 = vmatprep.subr.bf16.mxu0 0
    %1174 = vmatpush1.bf16.msra.mxu0 %v1166
    %1175 = vmatprep.subr.bf16.mxu0 0
    %1176 = vmatpush1.bf16.msra.mxu0 %v1167
    %1177 = vmatprep.subr.bf16.mxu0 0
    %1178 = vmatpush1.bf16.msra.mxu0 0
    %1179 = vmatprep.subr.bf16.mxu0 0
    %1180 = vmatpush1.bf16.msra.mxu0 0
    %1181 = vmatprep.subr.bf16.mxu0 0
    %1182 = vmatpush1.bf16.msra.mxu0 0
    %1183 = vmatprep.subr.bf16.mxu0 0
    %1184 = vmatpush1.bf16.msra.mxu0 0
    %1185 = vmatprep.subr.bf16.mxu0 0
    %1186 = vmatpush1.bf16.msra.mxu0 0
    %1187 = vmatprep.subr.bf16.mxu0 0
    %1188 = vmatpush1.bf16.msra.mxu0 0
    %1189 = vmatprep.subr.bf16.mxu0 0
    %1190 = vmatpush1.bf16.msra.mxu0 0
    %1191 = vmatprep.subr.bf16.mxu0 0
    %1192 = vmatpush1.bf16.msra.mxu0 0
    %1193 = vmatprep.subr.bf16.mxu0 0
    %1194 = vmatpush1.bf16.msra.mxu0 0
    %1195 = vmatprep.subr.bf16.mxu0 0
    %1196 = vmatpush1.bf16.msra.mxu0 0
    %1197 = vmatprep.subr.bf16.mxu0 0
    %1198 = vmatpush1.bf16.msra.mxu0 0
    %1199 = vmatprep.subr.bf16.mxu0 0
    %1200 = vmatpush1.bf16.msra.mxu0 0
    %1201 = vmatprep.subr.bf16.mxu0 0
    %1202 = vmatpush1.bf16.msra.mxu0 0
    %1203 = vmatprep.subr.bf16.mxu0 0
    %1204 = vmatpush1.bf16.msra.mxu0 0
    %1205 = vmatprep.mubr.bf16.mxu0 0
    %1206 = vmatmul.mubr.bf16.gmra.mrb[0].mxu0 %v1171
    %v1207 = vpop.f32.mrb[0].mxu0
    %v1208 = vadd.f32 0.0, %v1207
    %v1209 = vpop.f32.mrb[0].mxu0
    %v1210 = vpop.f32.mrb[0].mxu0
    %v1211 = vpop.f32.mrb[0].mxu0
    %1212 = vdwg.mxu0
    %v1213 = vadd.f32 %v1150, %v1208
    %v1214 = vld [vmem:[#allocation3 + $0x2] sm:$0xff]
    %v1215 = vpack.c.bf16 %v1214, %v1214
    %s1216 = scalar_lea.vmem [#allocation5], 64
    %v1217 = vld [vmem:[%s1216] sm:$0xf]
    %v1218 = vld [vmem:[%s1216 + $0x4] sm:$0xf]
    %v1219 = vld [vmem:[%s1216 + $0x8] sm:$0xf]
    %v1220 = vld [vmem:[%s1216 + $0xc] sm:$0xf]
    %v1225 = vunpack.c.l.b16 %v1217
    %v1226 = vunpack.c.l.b16 %v1218
    %v1227 = vunpack.c.l.b16 %v1219
    %v1228 = vunpack.c.l.b16 %v1220
    %v1229 = vpack.c.b16 %v1226, %v1225
    %v1230 = vpack.c.b16 %v1228, %v1227
    %v1234 = vsel %vm952, %v1215, 0
    %1236 = vmatprep.subr.bf16.mxu0 0
    %1237 = vmatpush1.bf16.msra.mxu0 %v1229
    %1238 = vmatprep.subr.bf16.mxu0 0
    %1239 = vmatpush1.bf16.msra.mxu0 %v1230
    %1240 = vmatprep.subr.bf16.mxu0 0
    %1241 = vmatpush1.bf16.msra.mxu0 0
    %1242 = vmatprep.subr.bf16.mxu0 0
    %1243 = vmatpush1.bf16.msra.mxu0 0
    %1244 = vmatprep.subr.bf16.mxu0 0
    %1245 = vmatpush1.bf16.msra.mxu0 0
    %1246 = vmatprep.subr.bf16.mxu0 0
    %1247 = vmatpush1.bf16.msra.mxu0 0
    %1248 = vmatprep.subr.bf16.mxu0 0
    %1249 = vmatpush1.bf16.msra.mxu0 0
    %1250 = vmatprep.subr.bf16.mxu0 0
    %1251 = vmatpush1.bf16.msra.mxu0 0
    %1252 = vmatprep.subr.bf16.mxu0 0
    %1253 = vmatpush1.bf16.msra.mxu0 0
    %1254 = vmatprep.subr.bf16.mxu0 0
    %1255 = vmatpush1.bf16.msra.mxu0 0
    %1256 = vmatprep.subr.bf16.mxu0 0
    %1257 = vmatpush1.bf16.msra.mxu0 0
    %1258 = vmatprep.subr.bf16.mxu0 0
    %1259 = vmatpush1.bf16.msra.mxu0 0
    %1260 = vmatprep.subr.bf16.mxu0 0
    %1261 = vmatpush1.bf16.msra.mxu0 0
    %1262 = vmatprep.subr.bf16.mxu0 0
    %1263 = vmatpush1.bf16.msra.mxu0 0
    %1264 = vmatprep.subr.bf16.mxu0 0
    %1265 = vmatpush1.bf16.msra.mxu0 0
    %1266 = vmatprep.subr.bf16.mxu0 0
    %1267 = vmatpush1.bf16.msra.mxu0 0
    %1268 = vmatprep.mubr.bf16.mxu0 0
    %1269 = vmatmul.mubr.bf16.gmra.mrb[0].mxu0 %v1234
    %v1270 = vpop.f32.mrb[0].mxu0
    %v1271 = vadd.f32 0.0, %v1270
    %v1272 = vpop.f32.mrb[0].mxu0
    %v1273 = vpop.f32.mrb[0].mxu0
    %v1274 = vpop.f32.mrb[0].mxu0
    %1275 = vdwg.mxu0
    %v1276 = vadd.f32 %v1213, %v1271
    %v1277 = vld [vmem:[#allocation3 + $0x14] sm:$0xff]
    %v1278 = vpack.c.bf16 %v1277, %v1277
    %s1279 = scalar_lea.vmem [#allocation5], 80
    %v1280 = vld [vmem:[%s1279] sm:$0xf]
    %v1281 = vld [vmem:[%s1279 + $0x4] sm:$0xf]
    %v1282 = vld [vmem:[%s1279 + $0x8] sm:$0xf]
    %v1283 = vld [vmem:[%s1279 + $0xc] sm:$0xf]
    %v1288 = vunpack.c.l.b16 %v1280
    %v1289 = vunpack.c.l.b16 %v1281
    %v1290 = vunpack.c.l.b16 %v1282
    %v1291 = vunpack.c.l.b16 %v1283
    %v1292 = vpack.c.b16 %v1289, %v1288
    %v1293 = vpack.c.b16 %v1291, %v1290
    %v1297 = vsel %vm952, %v1278, 0
    %1299 = vmatprep.subr.bf16.mxu0 0
    %1300 = vmatpush1.bf16.msra.mxu0 %v1292
    %1301 = vmatprep.subr.bf16.mxu0 0
    %1302 = vmatpush1.bf16.msra.mxu0 %v1293
    %1303 = vmatprep.subr.bf16.mxu0 0
    %1304 = vmatpush1.bf16.msra.mxu0 0
    %1305 = vmatprep.subr.bf16.mxu0 0
    %1306 = vmatpush1.bf16.msra.mxu0 0
    %1307 = vmatprep.subr.bf16.mxu0 0
    %1308 = vmatpush1.bf16.msra.mxu0 0
    %1309 = vmatprep.subr.bf16.mxu0 0
    %1310 = vmatpush1.bf16.msra.mxu0 0
    %1311 = vmatprep.subr.bf16.mxu0 0
    %1312 = vmatpush1.bf16.msra.mxu0 0
    %1313 = vmatprep.subr.bf16.mxu0 0
    %1314 = vmatpush1.bf16.msra.mxu0 0
    %1315 = vmatprep.subr.bf16.mxu0 0
    %1316 = vmatpush1.bf16.msra.mxu0 0
    %1317 = vmatprep.subr.bf16.mxu0 0
    %1318 = vmatpush1.bf16.msra.mxu0 0
    %1319 = vmatprep.subr.bf16.mxu0 0
    %1320 = vmatpush1.bf16.msra.mxu0 0
    %1321 = vmatprep.subr.bf16.mxu0 0
    %1322 = vmatpush1.bf16.msra.mxu0 0
    %1323 = vmatprep.subr.bf16.mxu0 0
    %1324 = vmatpush1.bf16.msra.mxu0 0
    %1325 = vmatprep.subr.bf16.mxu0 0
    %1326 = vmatpush1.bf16.msra.mxu0 0
    %1327 = vmatprep.subr.bf16.mxu0 0
    %1328 = vmatpush1.bf16.msra.mxu0 0
    %1329 = vmatprep.subr.bf16.mxu0 0
    %1330 = vmatpush1.bf16.msra.mxu0 0
    %1331 = vmatprep.mubr.bf16.mxu0 0
    %1332 = vmatmul.mubr.bf16.gmra.mrb[0].mxu0 %v1297
    %v1333 = vpop.f32.mrb[0].mxu0
    %v1334 = vadd.f32 0.0, %v1333
    %v1335 = vpop.f32.mrb[0].mxu0
    %v1336 = vpop.f32.mrb[0].mxu0
    %v1337 = vpop.f32.mrb[0].mxu0
    %1338 = vdwg.mxu0
    %v1339 = vadd.f32 %v1276, %v1334
    %v1340 = vld [vmem:[#allocation3 + $0x3] sm:$0xff]
    %v1341 = vpack.c.bf16 %v1340, %v1340
    %s1342 = scalar_lea.vmem [#allocation5], 96
    %v1343 = vld [vmem:[%s1342] sm:$0xf]
    %v1344 = vld [vmem:[%s1342 + $0x4] sm:$0xf]
    %v1345 = vld [vmem:[%s1342 + $0x8] sm:$0xf]
    %v1346 = vld [vmem:[%s1342 + $0xc] sm:$0xf]
    %v1351 = vunpack.c.l.b16 %v1343
    %v1352 = vunpack.c.l.b16 %v1344
    %v1353 = vunpack.c.l.b16 %v1345
    %v1354 = vunpack.c.l.b16 %v1346
    %v1355 = vpack.c.b16 %v1352, %v1351
    %v1356 = vpack.c.b16 %v1354, %v1353
    %v1360 = vsel %vm952, %v1341, 0
    %1362 = vmatprep.subr.bf16.mxu0 0
    %1363 = vmatpush1.bf16.msra.mxu0 %v1355
    %1364 = vmatprep.subr.bf16.mxu0 0
    %1365 = vmatpush1.bf16.msra.mxu0 %v1356
    %1366 = vmatprep.subr.bf16.mxu0 0
    %1367 = vmatpush1.bf16.msra.mxu0 0
    %1368 = vmatprep.subr.bf16.mxu0 0
    %1369 = vmatpush1.bf16.msra.mxu0 0
    %1370 = vmatprep.subr.bf16.mxu0 0
    %1371 = vmatpush1.bf16.msra.mxu0 0
    %1372 = vmatprep.subr.bf16.mxu0 0
    %1373 = vmatpush1.bf16.msra.mxu0 0
    %1374 = vmatprep.subr.bf16.mxu0 0
    %1375 = vmatpush1.bf16.msra.mxu0 0
    %1376 = vmatprep.subr.bf16.mxu0 0
    %1377 = vmatpush1.bf16.msra.mxu0 0
    %1378 = vmatprep.subr.bf16.mxu0 0
    %1379 = vmatpush1.bf16.msra.mxu0 0
    %1380 = vmatprep.subr.bf16.mxu0 0
    %1381 = vmatpush1.bf16.msra.mxu0 0
    %1382 = vmatprep.subr.bf16.mxu0 0
    %1383 = vmatpush1.bf16.msra.mxu0 0
    %1384 = vmatprep.subr.bf16.mxu0 0
    %1385 = vmatpush1.bf16.msra.mxu0 0
    %1386 = vmatprep.subr.bf16.mxu0 0
    %1387 = vmatpush1.bf16.msra.mxu0 0
    %1388 = vmatprep.subr.bf16.mxu0 0
    %1389 = vmatpush1.bf16.msra.mxu0 0
    %1390 = vmatprep.subr.bf16.mxu0 0
    %1391 = vmatpush1.bf16.msra.mxu0 0
    %1392 = vmatprep.subr.bf16.mxu0 0
    %1393 = vmatpush1.bf16.msra.mxu0 0
    %1394 = vmatprep.mubr.bf16.mxu0 0
    %1395 = vmatmul.mubr.bf16.gmra.mrb[0].mxu0 %v1360
    %v1396 = vpop.f32.mrb[0].mxu0
    %v1397 = vadd.f32 0.0, %v1396
    %v1398 = vpop.f32.mrb[0].mxu0
    %v1399 = vpop.f32.mrb[0].mxu0
    %v1400 = vpop.f32.mrb[0].mxu0
    %1401 = vdwg.mxu0
    %v1402 = vadd.f32 %v1339, %v1397
    %v1403 = vld [vmem:[#allocation3 + $0x15] sm:$0xff]
    %v1404 = vpack.c.bf16 %v1403, %v1403
    %s1405 = scalar_lea.vmem [#allocation5], 112
    %v1406 = vld [vmem:[%s1405] sm:$0xf]
    %v1407 = vld [vmem:[%s1405 + $0x4] sm:$0xf]
    %v1408 = vld [vmem:[%s1405 + $0x8] sm:$0xf]
    %v1409 = vld [vmem:[%s1405 + $0xc] sm:$0xf]
    %v1414 = vunpack.c.l.b16 %v1406
    %v1415 = vunpack.c.l.b16 %v1407
    %v1416 = vunpack.c.l.b16 %v1408
    %v1417 = vunpack.c.l.b16 %v1409
    %v1418 = vpack.c.b16 %v1415, %v1414
    %v1419 = vpack.c.b16 %v1417, %v1416
    %v1423 = vsel %vm952, %v1404, 0
    %1425 = vmatprep.subr.bf16.mxu0 0
    %1426 = vmatpush1.bf16.msra.mxu0 %v1418
    %1427 = vmatprep.subr.bf16.mxu0 0
    %1428 = vmatpush1.bf16.msra.mxu0 %v1419
    %1429 = vmatprep.subr.bf16.mxu0 0
    %1430 = vmatpush1.bf16.msra.mxu0 0
    %1431 = vmatprep.subr.bf16.mxu0 0
    %1432 = vmatpush1.bf16.msra.mxu0 0
    %1433 = vmatprep.subr.bf16.mxu0 0
    %1434 = vmatpush1.bf16.msra.mxu0 0
    %1435 = vmatprep.subr.bf16.mxu0 0
    %1436 = vmatpush1.bf16.msra.mxu0 0
    %1437 = vmatprep.subr.bf16.mxu0 0
    %1438 = vmatpush1.bf16.msra.mxu0 0
    %1439 = vmatprep.subr.bf16.mxu0 0
    %1440 = vmatpush1.bf16.msra.mxu0 0
    %1441 = vmatprep.subr.bf16.mxu0 0
    %1442 = vmatpush1.bf16.msra.mxu0 0
    %1443 = vmatprep.subr.bf16.mxu0 0
    %1444 = vmatpush1.bf16.msra.mxu0 0
    %1445 = vmatprep.subr.bf16.mxu0 0
    %1446 = vmatpush1.bf16.msra.mxu0 0
    %1447 = vmatprep.subr.bf16.mxu0 0
    %1448 = vmatpush1.bf16.msra.mxu0 0
    %1449 = vmatprep.subr.bf16.mxu0 0
    %1450 = vmatpush1.bf16.msra.mxu0 0
    %1451 = vmatprep.subr.bf16.mxu0 0
    %1452 = vmatpush1.bf16.msra.mxu0 0
    %1453 = vmatprep.subr.bf16.mxu0 0
    %1454 = vmatpush1.bf16.msra.mxu0 0
    %1455 = vmatprep.subr.bf16.mxu0 0
    %1456 = vmatpush1.bf16.msra.mxu0 0
    %1457 = vmatprep.mubr.bf16.mxu0 0
    %1458 = vmatmul.mubr.bf16.gmra.mrb[0].mxu0 %v1423
    %v1459 = vpop.f32.mrb[0].mxu0
    %v1460 = vadd.f32 0.0, %v1459
    %v1461 = vpop.f32.mrb[0].mxu0
    %v1462 = vpop.f32.mrb[0].mxu0
    %v1463 = vpop.f32.mrb[0].mxu0
    %1464 = vdwg.mxu0
    %v1465 = vadd.f32 %v1402, %v1460
    %v1466 = vld [vmem:[#allocation3 + $0x4] sm:$0xff]
    %v1467 = vpack.c.bf16 %v1466, %v1466
    %s1468 = scalar_lea.vmem [#allocation5], 128
    %v1469 = vld [vmem:[%s1468] sm:$0xf]
    %v1470 = vld [vmem:[%s1468 + $0x4] sm:$0xf]
    %v1471 = vld [vmem:[%s1468 + $0x8] sm:$0xf]
    %v1472 = vld [vmem:[%s1468 + $0xc] sm:$0xf]
    %v1477 = vunpack.c.l.b16 %v1469
    %v1478 = vunpack.c.l.b16 %v1470
    %v1479 = vunpack.c.l.b16 %v1471
    %v1480 = vunpack.c.l.b16 %v1472
    %v1481 = vpack.c.b16 %v1478, %v1477
    %v1482 = vpack.c.b16 %v1480, %v1479
    %v1486 = vsel %vm952, %v1467, 0
    %1488 = vmatprep.subr.bf16.mxu0 0
    %1489 = vmatpush1.bf16.msra.mxu0 %v1481
    %1490 = vmatprep.subr.bf16.mxu0 0
    %1491 = vmatpush1.bf16.msra.mxu0 %v1482
    %1492 = vmatprep.subr.bf16.mxu0 0
    %1493 = vmatpush1.bf16.msra.mxu0 0
    %1494 = vmatprep.subr.bf16.mxu0 0
    %1495 = vmatpush1.bf16.msra.mxu0 0
    %1496 = vmatprep.subr.bf16.mxu0 0
    %1497 = vmatpush1.bf16.msra.mxu0 0
    %1498 = vmatprep.subr.bf16.mxu0 0
    %1499 = vmatpush1.bf16.msra.mxu0 0
    %1500 = vmatprep.subr.bf16.mxu0 0
    %1501 = vmatpush1.bf16.msra.mxu0 0
    %1502 = vmatprep.subr.bf16.mxu0 0
    %1503 = vmatpush1.bf16.msra.mxu0 0
    %1504 = vmatprep.subr.bf16.mxu0 0
    %1505 = vmatpush1.bf16.msra.mxu0 0
    %1506 = vmatprep.subr.bf16.mxu0 0
    %1507 = vmatpush1.bf16.msra.mxu0 0
    %1508 = vmatprep.subr.bf16.mxu0 0
    %1509 = vmatpush1.bf16.msra.mxu0 0
    %1510 = vmatprep.subr.bf16.mxu0 0
    %1511 = vmatpush1.bf16.msra.mxu0 0
    %1512 = vmatprep.subr.bf16.mxu0 0
    %1513 = vmatpush1.bf16.msra.mxu0 0
    %1514 = vmatprep.subr.bf16.mxu0 0
    %1515 = vmatpush1.bf16.msra.mxu0 0
    %1516 = vmatprep.subr.bf16.mxu0 0
    %1517 = vmatpush1.bf16.msra.mxu0 0
    %1518 = vmatprep.subr.bf16.mxu0 0
    %1519 = vmatpush1.bf16.msra.mxu0 0
    %1520 = vmatprep.mubr.bf16.mxu0 0
    %1521 = vmatmul.mubr.bf16.gmra.mrb[0].mxu0 %v1486
    %v1522 = vpop.f32.mrb[0].mxu0
    %v1523 = vadd.f32 0.0, %v1522
    %v1524 = vpop.f32.mrb[0].mxu0
    %v1525 = vpop.f32.mrb[0].mxu0
    %v1526 = vpop.f32.mrb[0].mxu0
    %1527 = vdwg.mxu0
    %v1528 = vadd.f32 %v1465, %v1523
    %v1529 = vld [vmem:[#allocation3 + $0x16] sm:$0xff]
    %v1530 = vpack.c.bf16 %v1529, %v1529
    %s1531 = scalar_lea.vmem [#allocation5], 144
    %v1532 = vld [vmem:[%s1531] sm:$0xf]
    %v1533 = vld [vmem:[%s1531 + $0x4] sm:$0xf]
    %v1534 = vld [vmem:[%s1531 + $0x8] sm:$0xf]
    %v1535 = vld [vmem:[%s1531 + $0xc] sm:$0xf]
    %v1540 = vunpack.c.l.b16 %v1532
    %v1541 = vunpack.c.l.b16 %v1533
    %v1542 = vunpack.c.l.b16 %v1534
    %v1543 = vunpack.c.l.b16 %v1535
    %v1544 = vpack.c.b16 %v1541, %v1540
    %v1545 = vpack.c.b16 %v1543, %v1542
    %v1549 = vsel %vm952, %v1530, 0
    %1551 = vmatprep.subr.bf16.mxu0 0
    %1552 = vmatpush1.bf16.msra.mxu0 %v1544
    %1553 = vmatprep.subr.bf16.mxu0 0
    %1554 = vmatpush1.bf16.msra.mxu0 %v1545
    %1555 = vmatprep.subr.bf16.mxu0 0
    %1556 = vmatpush1.bf16.msra.mxu0 0
    %1557 = vmatprep.subr.bf16.mxu0 0
    %1558 = vmatpush1.bf16.msra.mxu0 0
    %1559 = vmatprep.subr.bf16.mxu0 0
    %1560 = vmatpush1.bf16.msra.mxu0 0
    %1561 = vmatprep.subr.bf16.mxu0 0
    %1562 = vmatpush1.bf16.msra.mxu0 0
    %1563 = vmatprep.subr.bf16.mxu0 0
    %1564 = vmatpush1.bf16.msra.mxu0 0
    %1565 = vmatprep.subr.bf16.mxu0 0
    %1566 = vmatpush1.bf16.msra.mxu0 0
    %1567 = vmatprep.subr.bf16.mxu0 0
    %1568 = vmatpush1.bf16.msra.mxu0 0
    %1569 = vmatprep.subr.bf16.mxu0 0
    %1570 = vmatpush1.bf16.msra.mxu0 0
    %1571 = vmatprep.subr.bf16.mxu0 0
    %1572 = vmatpush1.bf16.msra.mxu0 0
    %1573 = vmatprep.subr.bf16.mxu0 0
    %1574 = vmatpush1.bf16.msra.mxu0 0
    %1575 = vmatprep.subr.bf16.mxu0 0
    %1576 = vmatpush1.bf16.msra.mxu0 0
    %1577 = vmatprep.subr.bf16.mxu0 0
    %1578 = vmatpush1.bf16.msra.mxu0 0
    %1579 = vmatprep.subr.bf16.mxu0 0
    %1580 = vmatpush1.bf16.msra.mxu0 0
    %1581 = vmatprep.subr.bf16.mxu0 0
    %1582 = vmatpush1.bf16.msra.mxu0 0
    %1583 = vmatprep.mubr.bf16.mxu0 0
    %1584 = vmatmul.mubr.bf16.gmra.mrb[0].mxu0 %v1549
    %v1585 = vpop.f32.mrb[0].mxu0
    %v1586 = vadd.f32 0.0, %v1585
    %v1587 = vpop.f32.mrb[0].mxu0
    %v1588 = vpop.f32.mrb[0].mxu0
    %v1589 = vpop.f32.mrb[0].mxu0
    %1590 = vdwg.mxu0
    %v1591 = vadd.f32 %v1528, %v1586
    %v1592 = vld [vmem:[#allocation3 + $0x5] sm:$0xff]
    %v1593 = vpack.c.bf16 %v1592, %v1592
    %s1594 = scalar_lea.vmem [#allocation5], 160
    %v1595 = vld [vmem:[%s1594] sm:$0xf]
    %v1596 = vld [vmem:[%s1594 + $0x4] sm:$0xf]
    %v1597 = vld [vmem:[%s1594 + $0x8] sm:$0xf]
    %v1598 = vld [vmem:[%s1594 + $0xc] sm:$0xf]
    %v1603 = vunpack.c.l.b16 %v1595
    %v1604 = vunpack.c.l.b16 %v1596
    %v1605 = vunpack.c.l.b16 %v1597
    %v1606 = vunpack.c.l.b16 %v1598
    %v1607 = vpack.c.b16 %v1604, %v1603
    %v1608 = vpack.c.b16 %v1606, %v1605
    %v1612 = vsel %vm952, %v1593, 0
    %1614 = vmatprep.subr.bf16.mxu0 0
    %1615 = vmatpush1.bf16.msra.mxu0 %v1607
    %1616 = vmatprep.subr.bf16.mxu0 0
    %1617 = vmatpush1.bf16.msra.mxu0 %v1608
    %1618 = vmatprep.subr.bf16.mxu0 0
    %1619 = vmatpush1.bf16.msra.mxu0 0
    %1620 = vmatprep.subr.bf16.mxu0 0
    %1621 = vmatpush1.bf16.msra.mxu0 0
    %1622 = vmatprep.subr.bf16.mxu0 0
    %1623 = vmatpush1.bf16.msra.mxu0 0
    %1624 = vmatprep.subr.bf16.mxu0 0
    %1625 = vmatpush1.bf16.msra.mxu0 0
    %1626 = vmatprep.subr.bf16.mxu0 0
    %1627 = vmatpush1.bf16.msra.mxu0 0
    %1628 = vmatprep.subr.bf16.mxu0 0
    %1629 = vmatpush1.bf16.msra.mxu0 0
    %1630 = vmatprep.subr.bf16.mxu0 0
    %1631 = vmatpush1.bf16.msra.mxu0 0
    %1632 = vmatprep.subr.bf16.mxu0 0
    %1633 = vmatpush1.bf16.msra.mxu0 0
    %1634 = vmatprep.subr.bf16.mxu0 0
    %1635 = vmatpush1.bf16.msra.mxu0 0
    %1636 = vmatprep.subr.bf16.mxu0 0
    %1637 = vmatpush1.bf16.msra.mxu0 0
    %1638 = vmatprep.subr.bf16.mxu0 0
    %1639 = vmatpush1.bf16.msra.mxu0 0
    %1640 = vmatprep.subr.bf16.mxu0 0
    %1641 = vmatpush1.bf16.msra.mxu0 0
    %1642 = vmatprep.subr.bf16.mxu0 0
    %1643 = vmatpush1.bf16.msra.mxu0 0
    %1644 = vmatprep.subr.bf16.mxu0 0
    %1645 = vmatpush1.bf16.msra.mxu0 0
    %1646 = vmatprep.mubr.bf16.mxu0 0
    %1647 = vmatmul.mubr.bf16.gmra.mrb[0].mxu0 %v1612
    %v1648 = vpop.f32.mrb[0].mxu0
    %v1649 = vadd.f32 0.0, %v1648
    %v1650 = vpop.f32.mrb[0].mxu0
    %v1651 = vpop.f32.mrb[0].mxu0
    %v1652 = vpop.f32.mrb[0].mxu0
    %1653 = vdwg.mxu0
    %v1654 = vadd.f32 %v1591, %v1649
    %v1655 = vld [vmem:[#allocation3 + $0x17] sm:$0xff]
    %v1656 = vpack.c.bf16 %v1655, %v1655
    %s1657 = scalar_lea.vmem [#allocation5], 176
    %v1658 = vld [vmem:[%s1657] sm:$0xf]
    %v1659 = vld [vmem:[%s1657 + $0x4] sm:$0xf]
    %v1660 = vld [vmem:[%s1657 + $0x8] sm:$0xf]
    %v1661 = vld [vmem:[%s1657 + $0xc] sm:$0xf]
    %v1666 = vunpack.c.l.b16 %v1658
    %v1667 = vunpack.c.l.b16 %v1659
    %v1668 = vunpack.c.l.b16 %v1660
    %v1669 = vunpack.c.l.b16 %v1661
    %v1670 = vpack.c.b16 %v1667, %v1666
    %v1671 = vpack.c.b16 %v1669, %v1668
    %v1675 = vsel %vm952, %v1656, 0
    %1677 = vmatprep.subr.bf16.mxu0 0
    %1678 = vmatpush1.bf16.msra.mxu0 %v1670
    %1679 = vmatprep.subr.bf16.mxu0 0
    %1680 = vmatpush1.bf16.msra.mxu0 %v1671
    %1681 = vmatprep.subr.bf16.mxu0 0
    %1682 = vmatpush1.bf16.msra.mxu0 0
    %1683 = vmatprep.subr.bf16.mxu0 0
    %1684 = vmatpush1.bf16.msra.mxu0 0
    %1685 = vmatprep.subr.bf16.mxu0 0
    %1686 = vmatpush1.bf16.msra.mxu0 0
    %1687 = vmatprep.subr.bf16.mxu0 0
    %1688 = vmatpush1.bf16.msra.mxu0 0
    %1689 = vmatprep.subr.bf16.mxu0 0
    %1690 = vmatpush1.bf16.msra.mxu0 0
    %1691 = vmatprep.subr.bf16.mxu0 0
    %1692 = vmatpush1.bf16.msra.mxu0 0
    %1693 = vmatprep.subr.bf16.mxu0 0
    %1694 = vmatpush1.bf16.msra.mxu0 0
    %1695 = vmatprep.subr.bf16.mxu0 0
    %1696 = vmatpush1.bf16.msra.mxu0 0
    %1697 = vmatprep.subr.bf16.mxu0 0
    %1698 = vmatpush1.bf16.msra.mxu0 0
    %1699 = vmatprep.subr.bf16.mxu0 0
    %1700 = vmatpush1.bf16.msra.mxu0 0
    %1701 = vmatprep.subr.bf16.mxu0 0
    %1702 = vmatpush1.bf16.msra.mxu0 0
    %1703 = vmatprep.subr.bf16.mxu0 0
    %1704 = vmatpush1.bf16.msra.mxu0 0
    %1705 = vmatprep.subr.bf16.mxu0 0
    %1706 = vmatpush1.bf16.msra.mxu0 0
    %1707 = vmatprep.subr.bf16.mxu0 0
    %1708 = vmatpush1.bf16.msra.mxu0 0
    %1709 = vmatprep.mubr.bf16.mxu0 0
    %1710 = vmatmul.mubr.bf16.gmra.mrb[0].mxu0 %v1675
    %v1711 = vpop.f32.mrb[0].mxu0
    %v1712 = vadd.f32 0.0, %v1711
    %v1713 = vpop.f32.mrb[0].mxu0
    %v1714 = vpop.f32.mrb[0].mxu0
    %v1715 = vpop.f32.mrb[0].mxu0
    %1716 = vdwg.mxu0
    %v1717 = vadd.f32 %v1654, %v1712
    %v1718 = vld [vmem:[#allocation3 + $0x6] sm:$0xff]
    %v1719 = vpack.c.bf16 %v1718, %v1718
    %s1720 = scalar_lea.vmem [#allocation5], 192
    %v1721 = vld [vmem:[%s1720] sm:$0xf]
    %v1722 = vld [vmem:[%s1720 + $0x4] sm:$0xf]
    %v1723 = vld [vmem:[%s1720 + $0x8] sm:$0xf]
    %v1724 = vld [vmem:[%s1720 + $0xc] sm:$0xf]
    %v1729 = vunpack.c.l.b16 %v1721
    %v1730 = vunpack.c.l.b16 %v1722
    %v1731 = vunpack.c.l.b16 %v1723
    %v1732 = vunpack.c.l.b16 %v1724
    %v1733 = vpack.c.b16 %v1730, %v1729
    %v1734 = vpack.c.b16 %v1732, %v1731
    %v1738 = vsel %vm952, %v1719, 0
    %1740 = vmatprep.subr.bf16.mxu0 0
    %1741 = vmatpush1.bf16.msra.mxu0 %v1733
    %1742 = vmatprep.subr.bf16.mxu0 0
    %1743 = vmatpush1.bf16.msra.mxu0 %v1734
    %1744 = vmatprep.subr.bf16.mxu0 0
    %1745 = vmatpush1.bf16.msra.mxu0 0
    %1746 = vmatprep.subr.bf16.mxu0 0
    %1747 = vmatpush1.bf16.msra.mxu0 0
    %1748 = vmatprep.subr.bf16.mxu0 0
    %1749 = vmatpush1.bf16.msra.mxu0 0
    %1750 = vmatprep.subr.bf16.mxu0 0
    %1751 = vmatpush1.bf16.msra.mxu0 0
    %1752 = vmatprep.subr.bf16.mxu0 0
    %1753 = vmatpush1.bf16.msra.mxu0 0
    %1754 = vmatprep.subr.bf16.mxu0 0
    %1755 = vmatpush1.bf16.msra.mxu0 0
    %1756 = vmatprep.subr.bf16.mxu0 0
    %1757 = vmatpush1.bf16.msra.mxu0 0
    %1758 = vmatprep.subr.bf16.mxu0 0
    %1759 = vmatpush1.bf16.msra.mxu0 0
    %1760 = vmatprep.subr.bf16.mxu0 0
    %1761 = vmatpush1.bf16.msra.mxu0 0
    %1762 = vmatprep.subr.bf16.mxu0 0
    %1763 = vmatpush1.bf16.msra.mxu0 0
    %1764 = vmatprep.subr.bf16.mxu0 0
    %1765 = vmatpush1.bf16.msra.mxu0 0
    %1766 = vmatprep.subr.bf16.mxu0 0
    %1767 = vmatpush1.bf16.msra.mxu0 0
    %1768 = vmatprep.subr.bf16.mxu0 0
    %1769 = vmatpush1.bf16.msra.mxu0 0
    %1770 = vmatprep.subr.bf16.mxu0 0
    %1771 = vmatpush1.bf16.msra.mxu0 0
    %1772 = vmatprep.mubr.bf16.mxu0 0
    %1773 = vmatmul.mubr.bf16.gmra.mrb[0].mxu0 %v1738
    %v1774 = vpop.f32.mrb[0].mxu0
    %v1775 = vadd.f32 0.0, %v1774
    %v1776 = vpop.f32.mrb[0].mxu0
    %v1777 = vpop.f32.mrb[0].mxu0
    %v1778 = vpop.f32.mrb[0].mxu0
    %1779 = vdwg.mxu0
    %v1780 = vadd.f32 %v1717, %v1775
    %v1781 = vld [vmem:[#allocation3 + $0x18] sm:$0xff]
    %v1782 = vpack.c.bf16 %v1781, %v1781
    %s1783 = scalar_lea.vmem [#allocation5], 208
    %v1784 = vld [vmem:[%s1783] sm:$0xf]
    %v1785 = vld [vmem:[%s1783 + $0x4] sm:$0xf]
    %v1786 = vld [vmem:[%s1783 + $0x8] sm:$0xf]
    %v1787 = vld [vmem:[%s1783 + $0xc] sm:$0xf]
    %v1792 = vunpack.c.l.b16 %v1784
    %v1793 = vunpack.c.l.b16 %v1785
    %v1794 = vunpack.c.l.b16 %v1786
    %v1795 = vunpack.c.l.b16 %v1787
    %v1796 = vpack.c.b16 %v1793, %v1792
    %v1797 = vpack.c.b16 %v1795, %v1794
    %v1801 = vsel %vm952, %v1782, 0
    %1803 = vmatprep.subr.bf16.mxu0 0
    %1804 = vmatpush1.bf16.msra.mxu0 %v1796
    %1805 = vmatprep.subr.bf16.mxu0 0
    %1806 = vmatpush1.bf16.msra.mxu0 %v1797
    %1807 = vmatprep.subr.bf16.mxu0 0
    %1808 = vmatpush1.bf16.msra.mxu0 0
    %1809 = vmatprep.subr.bf16.mxu0 0
    %1810 = vmatpush1.bf16.msra.mxu0 0
    %1811 = vmatprep.subr.bf16.mxu0 0
    %1812 = vmatpush1.bf16.msra.mxu0 0
    %1813 = vmatprep.subr.bf16.mxu0 0
    %1814 = vmatpush1.bf16.msra.mxu0 0
    %1815 = vmatprep.subr.bf16.mxu0 0
    %1816 = vmatpush1.bf16.msra.mxu0 0
    %1817 = vmatprep.subr.bf16.mxu0 0
    %1818 = vmatpush1.bf16.msra.mxu0 0
    %1819 = vmatprep.subr.bf16.mxu0 0
    %1820 = vmatpush1.bf16.msra.mxu0 0
    %1821 = vmatprep.subr.bf16.mxu0 0
    %1822 = vmatpush1.bf16.msra.mxu0 0
    %1823 = vmatprep.subr.bf16.mxu0 0
    %1824 = vmatpush1.bf16.msra.mxu0 0
    %1825 = vmatprep.subr.bf16.mxu0 0
    %1826 = vmatpush1.bf16.msra.mxu0 0
    %1827 = vmatprep.subr.bf16.mxu0 0
    %1828 = vmatpush1.bf16.msra.mxu0 0
    %1829 = vmatprep.subr.bf16.mxu0 0
    %1830 = vmatpush1.bf16.msra.mxu0 0
    %1831 = vmatprep.subr.bf16.mxu0 0
    %1832 = vmatpush1.bf16.msra.mxu0 0
    %1833 = vmatprep.subr.bf16.mxu0 0
    %1834 = vmatpush1.bf16.msra.mxu0 0
    %1835 = vmatprep.mubr.bf16.mxu0 0
    %1836 = vmatmul.mubr.bf16.gmra.mrb[0].mxu0 %v1801
    %v1837 = vpop.f32.mrb[0].mxu0
    %v1838 = vadd.f32 0.0, %v1837
    %v1839 = vpop.f32.mrb[0].mxu0
    %v1840 = vpop.f32.mrb[0].mxu0
    %v1841 = vpop.f32.mrb[0].mxu0
    %1842 = vdwg.mxu0
    %v1843 = vadd.f32 %v1780, %v1838
    %v1844 = vld [vmem:[#allocation3 + $0x7] sm:$0xff]
    %v1845 = vpack.c.bf16 %v1844, %v1844
    %s1846 = scalar_lea.vmem [#allocation5], 224
    %v1847 = vld [vmem:[%s1846] sm:$0xf]
    %v1848 = vld [vmem:[%s1846 + $0x4] sm:$0xf]
    %v1849 = vld [vmem:[%s1846 + $0x8] sm:$0xf]
    %v1850 = vld [vmem:[%s1846 + $0xc] sm:$0xf]
    %v1855 = vunpack.c.l.b16 %v1847
    %v1856 = vunpack.c.l.b16 %v1848
    %v1857 = vunpack.c.l.b16 %v1849
    %v1858 = vunpack.c.l.b16 %v1850
    %v1859 = vpack.c.b16 %v1856, %v1855
    %v1860 = vpack.c.b16 %v1858, %v1857
    %v1864 = vsel %vm952, %v1845, 0
    %1866 = vmatprep.subr.bf16.mxu0 0
    %1867 = vmatpush1.bf16.msra.mxu0 %v1859
    %1868 = vmatprep.subr.bf16.mxu0 0
    %1869 = vmatpush1.bf16.msra.mxu0 %v1860
    %1870 = vmatprep.subr.bf16.mxu0 0
    %1871 = vmatpush1.bf16.msra.mxu0 0
    %1872 = vmatprep.subr.bf16.mxu0 0
    %1873 = vmatpush1.bf16.msra.mxu0 0
    %1874 = vmatprep.subr.bf16.mxu0 0
    %1875 = vmatpush1.bf16.msra.mxu0 0
    %1876 = vmatprep.subr.bf16.mxu0 0
    %1877 = vmatpush1.bf16.msra.mxu0 0
    %1878 = vmatprep.subr.bf16.mxu0 0
    %1879 = vmatpush1.bf16.msra.mxu0 0
    %1880 = vmatprep.subr.bf16.mxu0 0
    %1881 = vmatpush1.bf16.msra.mxu0 0
    %1882 = vmatprep.subr.bf16.mxu0 0
    %1883 = vmatpush1.bf16.msra.mxu0 0
    %1884 = vmatprep.subr.bf16.mxu0 0
    %1885 = vmatpush1.bf16.msra.mxu0 0
    %1886 = vmatprep.subr.bf16.mxu0 0
    %1887 = vmatpush1.bf16.msra.mxu0 0
    %1888 = vmatprep.subr.bf16.mxu0 0
    %1889 = vmatpush1.bf16.msra.mxu0 0
    %1890 = vmatprep.subr.bf16.mxu0 0
    %1891 = vmatpush1.bf16.msra.mxu0 0
    %1892 = vmatprep.subr.bf16.mxu0 0
    %1893 = vmatpush1.bf16.msra.mxu0 0
    %1894 = vmatprep.subr.bf16.mxu0 0
    %1895 = vmatpush1.bf16.msra.mxu0 0
    %1896 = vmatprep.subr.bf16.mxu0 0
    %1897 = vmatpush1.bf16.msra.mxu0 0
    %1898 = vmatprep.mubr.bf16.mxu0 0
    %1899 = vmatmul.mubr.bf16.gmra.mrb[0].mxu0 %v1864
    %v1900 = vpop.f32.mrb[0].mxu0
    %v1901 = vadd.f32 0.0, %v1900
    %v1902 = vpop.f32.mrb[0].mxu0
    %v1903 = vpop.f32.mrb[0].mxu0
    %v1904 = vpop.f32.mrb[0].mxu0
    %1905 = vdwg.mxu0
    %v1906 = vadd.f32 %v1843, %v1901
    %v1907 = vld [vmem:[#allocation3 + $0x19] sm:$0xff]
    %v1908 = vpack.c.bf16 %v1907, %v1907
    %s1909 = scalar_lea.vmem [#allocation5], 240
    %v1910 = vld [vmem:[%s1909] sm:$0xf]
    %v1911 = vld [vmem:[%s1909 + $0x4] sm:$0xf]
    %v1912 = vld [vmem:[%s1909 + $0x8] sm:$0xf]
    %v1913 = vld [vmem:[%s1909 + $0xc] sm:$0xf]
    %v1918 = vunpack.c.l.b16 %v1910
    %v1919 = vunpack.c.l.b16 %v1911
    %v1920 = vunpack.c.l.b16 %v1912
    %v1921 = vunpack.c.l.b16 %v1913
    %v1922 = vpack.c.b16 %v1919, %v1918
    %v1923 = vpack.c.b16 %v1921, %v1920
    %v1927 = vsel %vm952, %v1908, 0
    %1929 = vmatprep.subr.bf16.mxu0 0
    %1930 = vmatpush1.bf16.msra.mxu0 %v1922
    %1931 = vmatprep.subr.bf16.mxu0 0
    %1932 = vmatpush1.bf16.msra.mxu0 %v1923
    %1933 = vmatprep.subr.bf16.mxu0 0
    %1934 = vmatpush1.bf16.msra.mxu0 0
    %1935 = vmatprep.subr.bf16.mxu0 0
    %1936 = vmatpush1.bf16.msra.mxu0 0
    %1937 = vmatprep.subr.bf16.mxu0 0
    %1938 = vmatpush1.bf16.msra.mxu0 0
    %1939 = vmatprep.subr.bf16.mxu0 0
    %1940 = vmatpush1.bf16.msra.mxu0 0
    %1941 = vmatprep.subr.bf16.mxu0 0
    %1942 = vmatpush1.bf16.msra.mxu0 0
    %1943 = vmatprep.subr.bf16.mxu0 0
    %1944 = vmatpush1.bf16.msra.mxu0 0
    %1945 = vmatprep.subr.bf16.mxu0 0
    %1946 = vmatpush1.bf16.msra.mxu0 0
    %1947 = vmatprep.subr.bf16.mxu0 0
    %1948 = vmatpush1.bf16.msra.mxu0 0
    %1949 = vmatprep.subr.bf16.mxu0 0
    %1950 = vmatpush1.bf16.msra.mxu0 0
    %1951 = vmatprep.subr.bf16.mxu0 0
    %1952 = vmatpush1.bf16.msra.mxu0 0
    %1953 = vmatprep.subr.bf16.mxu0 0
    %1954 = vmatpush1.bf16.msra.mxu0 0
    %1955 = vmatprep.subr.bf16.mxu0 0
    %1956 = vmatpush1.bf16.msra.mxu0 0
    %1957 = vmatprep.subr.bf16.mxu0 0
    %1958 = vmatpush1.bf16.msra.mxu0 0
    %1959 = vmatprep.subr.bf16.mxu0 0
    %1960 = vmatpush1.bf16.msra.mxu0 0
    %1961 = vmatprep.mubr.bf16.mxu0 0
    %1962 = vmatmul.mubr.bf16.gmra.mrb[0].mxu0 %v1927
    %v1963 = vpop.f32.mrb[0].mxu0
    %v1964 = vadd.f32 0.0, %v1963
    %v1965 = vpop.f32.mrb[0].mxu0
    %v1966 = vpop.f32.mrb[0].mxu0
    %v1967 = vpop.f32.mrb[0].mxu0
    %1968 = vdwg.mxu0
    %v1969 = vadd.f32 %v1906, %v1964
    %v1970 = vld [vmem:[#allocation3 + $0x8] sm:$0xff]
    %v1971 = vpack.c.bf16 %v1970, %v1970
    %s1972 = scalar_lea.vmem [#allocation5], 256
    %v1973 = vld [vmem:[%s1972] sm:$0xf]
    %v1974 = vld [vmem:[%s1972 + $0x4] sm:$0xf]
    %v1975 = vld [vmem:[%s1972 + $0x8] sm:$0xf]
    %v1976 = vld [vmem:[%s1972 + $0xc] sm:$0xf]
    %v1981 = vunpack.c.l.b16 %v1973
    %v1982 = vunpack.c.l.b16 %v1974
    %v1983 = vunpack.c.l.b16 %v1975
    %v1984 = vunpack.c.l.b16 %v1976
    %v1985 = vpack.c.b16 %v1982, %v1981
    %v1986 = vpack.c.b16 %v1984, %v1983
    %v1990 = vsel %vm952, %v1971, 0
    %1992 = vmatprep.subr.bf16.mxu0 0
    %1993 = vmatpush1.bf16.msra.mxu0 %v1985
    %1994 = vmatprep.subr.bf16.mxu0 0
    %1995 = vmatpush1.bf16.msra.mxu0 %v1986
    %1996 = vmatprep.subr.bf16.mxu0 0
    %1997 = vmatpush1.bf16.msra.mxu0 0
    %1998 = vmatprep.subr.bf16.mxu0 0
    %1999 = vmatpush1.bf16.msra.mxu0 0
    %2000 = vmatprep.subr.bf16.mxu0 0
    %2001 = vmatpush1.bf16.msra.mxu0 0
    %2002 = vmatprep.subr.bf16.mxu0 0
    %2003 = vmatpush1.bf16.msra.mxu0 0
    %2004 = vmatprep.subr.bf16.mxu0 0
    %2005 = vmatpush1.bf16.msra.mxu0 0
    %2006 = vmatprep.subr.bf16.mxu0 0
    %2007 = vmatpush1.bf16.msra.mxu0 0
    %2008 = vmatprep.subr.bf16.mxu0 0
    %2009 = vmatpush1.bf16.msra.mxu0 0
    %2010 = vmatprep.subr.bf16.mxu0 0
    %2011 = vmatpush1.bf16.msra.mxu0 0
    %2012 = vmatprep.subr.bf16.mxu0 0
    %2013 = vmatpush1.bf16.msra.mxu0 0
    %2014 = vmatprep.subr.bf16.mxu0 0
    %2015 = vmatpush1.bf16.msra.mxu0 0
    %2016 = vmatprep.subr.bf16.mxu0 0
    %2017 = vmatpush1.bf16.msra.mxu0 0
    %2018 = vmatprep.subr.bf16.mxu0 0
    %2019 = vmatpush1.bf16.msra.mxu0 0
    %2020 = vmatprep.subr.bf16.mxu0 0
    %2021 = vmatpush1.bf16.msra.mxu0 0
    %2022 = vmatprep.subr.bf16.mxu0 0
    %2023 = vmatpush1.bf16.msra.mxu0 0
    %2024 = vmatprep.mubr.bf16.mxu0 0
    %2025 = vmatmul.mubr.bf16.gmra.mrb[0].mxu0 %v1990
    %v2026 = vpop.f32.mrb[0].mxu0
    %v2027 = vadd.f32 0.0, %v2026
    %v2028 = vpop.f32.mrb[0].mxu0
    %v2029 = vpop.f32.mrb[0].mxu0
    %v2030 = vpop.f32.mrb[0].mxu0
    %2031 = vdwg.mxu0
    %v2032 = vadd.f32 %v1969, %v2027
    %v2033 = vld [vmem:[#allocation3 + $0x1a] sm:$0xff]
    %v2034 = vpack.c.bf16 %v2033, %v2033
    %s2035 = scalar_lea.vmem [#allocation5], 272
    %v2036 = vld [vmem:[%s2035] sm:$0xf]
    %v2037 = vld [vmem:[%s2035 + $0x4] sm:$0xf]
    %v2038 = vld [vmem:[%s2035 + $0x8] sm:$0xf]
    %v2039 = vld [vmem:[%s2035 + $0xc] sm:$0xf]
    %v2044 = vunpack.c.l.b16 %v2036
    %v2045 = vunpack.c.l.b16 %v2037
    %v2046 = vunpack.c.l.b16 %v2038
    %v2047 = vunpack.c.l.b16 %v2039
    %v2048 = vpack.c.b16 %v2045, %v2044
    %v2049 = vpack.c.b16 %v2047, %v2046
    %v2053 = vsel %vm952, %v2034, 0
    %2055 = vmatprep.subr.bf16.mxu0 0
    %2056 = vmatpush1.bf16.msra.mxu0 %v2048
    %2057 = vmatprep.subr.bf16.mxu0 0
    %2058 = vmatpush1.bf16.msra.mxu0 %v2049
    %2059 = vmatprep.subr.bf16.mxu0 0
    %2060 = vmatpush1.bf16.msra.mxu0 0
    %2061 = vmatprep.subr.bf16.mxu0 0
    %2062 = vmatpush1.bf16.msra.mxu0 0
    %2063 = vmatprep.subr.bf16.mxu0 0
    %2064 = vmatpush1.bf16.msra.mxu0 0
    %2065 = vmatprep.subr.bf16.mxu0 0
    %2066 = vmatpush1.bf16.msra.mxu0 0
    %2067 = vmatprep.subr.bf16.mxu0 0
    %2068 = vmatpush1.bf16.msra.mxu0 0
    %2069 = vmatprep.subr.bf16.mxu0 0
    %2070 = vmatpush1.bf16.msra.mxu0 0
    %2071 = vmatprep.subr.bf16.mxu0 0
    %2072 = vmatpush1.bf16.msra.mxu0 0
    %2073 = vmatprep.subr.bf16.mxu0 0
    %2074 = vmatpush1.bf16.msra.mxu0 0
    %2075 = vmatprep.subr.bf16.mxu0 0
    %2076 = vmatpush1.bf16.msra.mxu0 0
    %2077 = vmatprep.subr.bf16.mxu0 0
    %2078 = vmatpush1.bf16.msra.mxu0 0
    %2079 = vmatprep.subr.bf16.mxu0 0
    %2080 = vmatpush1.bf16.msra.mxu0 0
    %2081 = vmatprep.subr.bf16.mxu0 0
    %2082 = vmatpush1.bf16.msra.mxu0 0
    %2083 = vmatprep.subr.bf16.mxu0 0
    %2084 = vmatpush1.bf16.msra.mxu0 0
    %2085 = vmatprep.subr.bf16.mxu0 0
    %2086 = vmatpush1.bf16.msra.mxu0 0
    %2087 = vmatprep.mubr.bf16.mxu0 0
    %2088 = vmatmul.mubr.bf16.gmra.mrb[0].mxu0 %v2053
    %v2089 = vpop.f32.mrb[0].mxu0
    %v2090 = vadd.f32 0.0, %v2089
    %v2091 = vpop.f32.mrb[0].mxu0
    %v2092 = vpop.f32.mrb[0].mxu0
    %v2093 = vpop.f32.mrb[0].mxu0
    %2094 = vdwg.mxu0
    %v2095 = vadd.f32 %v2032, %v2090
    %v2096 = vld [vmem:[#allocation3 + $0x9] sm:$0xff]
    %v2097 = vpack.c.bf16 %v2096, %v2096
    %s2098 = scalar_lea.vmem [#allocation5], 288
    %v2099 = vld [vmem:[%s2098] sm:$0xf]
    %v2100 = vld [vmem:[%s2098 + $0x4] sm:$0xf]
    %v2101 = vld [vmem:[%s2098 + $0x8] sm:$0xf]
    %v2102 = vld [vmem:[%s2098 + $0xc] sm:$0xf]
    %v2107 = vunpack.c.l.b16 %v2099
    %v2108 = vunpack.c.l.b16 %v2100
    %v2109 = vunpack.c.l.b16 %v2101
    %v2110 = vunpack.c.l.b16 %v2102
    %v2111 = vpack.c.b16 %v2108, %v2107
    %v2112 = vpack.c.b16 %v2110, %v2109
    %v2116 = vsel %vm952, %v2097, 0
    %2118 = vmatprep.subr.bf16.mxu0 0
    %2119 = vmatpush1.bf16.msra.mxu0 %v2111
    %2120 = vmatprep.subr.bf16.mxu0 0
    %2121 = vmatpush1.bf16.msra.mxu0 %v2112
    %2122 = vmatprep.subr.bf16.mxu0 0
    %2123 = vmatpush1.bf16.msra.mxu0 0
    %2124 = vmatprep.subr.bf16.mxu0 0
    %2125 = vmatpush1.bf16.msra.mxu0 0
    %2126 = vmatprep.subr.bf16.mxu0 0
    %2127 = vmatpush1.bf16.msra.mxu0 0
    %2128 = vmatprep.subr.bf16.mxu0 0
    %2129 = vmatpush1.bf16.msra.mxu0 0
    %2130 = vmatprep.subr.bf16.mxu0 0
    %2131 = vmatpush1.bf16.msra.mxu0 0
    %2132 = vmatprep.subr.bf16.mxu0 0
    %2133 = vmatpush1.bf16.msra.mxu0 0
    %2134 = vmatprep.subr.bf16.mxu0 0
    %2135 = vmatpush1.bf16.msra.mxu0 0
    %2136 = vmatprep.subr.bf16.mxu0 0
    %2137 = vmatpush1.bf16.msra.mxu0 0
    %2138 = vmatprep.subr.bf16.mxu0 0
    %2139 = vmatpush1.bf16.msra.mxu0 0
    %2140 = vmatprep.subr.bf16.mxu0 0
    %2141 = vmatpush1.bf16.msra.mxu0 0
    %2142 = vmatprep.subr.bf16.mxu0 0
    %2143 = vmatpush1.bf16.msra.mxu0 0
    %2144 = vmatprep.subr.bf16.mxu0 0
    %2145 = vmatpush1.bf16.msra.mxu0 0
    %2146 = vmatprep.subr.bf16.mxu0 0
    %2147 = vmatpush1.bf16.msra.mxu0 0
    %2148 = vmatprep.subr.bf16.mxu0 0
    %2149 = vmatpush1.bf16.msra.mxu0 0
    %2150 = vmatprep.mubr.bf16.mxu0 0
    %2151 = vmatmul.mubr.bf16.gmra.mrb[0].mxu0 %v2116
    %v2152 = vpop.f32.mrb[0].mxu0
    %v2153 = vadd.f32 0.0, %v2152
    %v2154 = vpop.f32.mrb[0].mxu0
    %v2155 = vpop.f32.mrb[0].mxu0
    %v2156 = vpop.f32.mrb[0].mxu0
    %2157 = vdwg.mxu0
    %v2158 = vadd.f32 %v2095, %v2153
    %v2159 = vld [vmem:[#allocation3 + $0x1b] sm:$0xff]
    %v2160 = vpack.c.bf16 %v2159, %v2159
    %s2161 = scalar_lea.vmem [#allocation5], 304
    %v2162 = vld [vmem:[%s2161] sm:$0xf]
    %v2163 = vld [vmem:[%s2161 + $0x4] sm:$0xf]
    %v2164 = vld [vmem:[%s2161 + $0x8] sm:$0xf]
    %v2165 = vld [vmem:[%s2161 + $0xc] sm:$0xf]
    %v2170 = vunpack.c.l.b16 %v2162
    %v2171 = vunpack.c.l.b16 %v2163
    %v2172 = vunpack.c.l.b16 %v2164
    %v2173 = vunpack.c.l.b16 %v2165
    %v2174 = vpack.c.b16 %v2171, %v2170
    %v2175 = vpack.c.b16 %v2173, %v2172
    %v2179 = vsel %vm952, %v2160, 0
    %2181 = vmatprep.subr.bf16.mxu0 0
    %2182 = vmatpush1.bf16.msra.mxu0 %v2174
    %2183 = vmatprep.subr.bf16.mxu0 0
    %2184 = vmatpush1.bf16.msra.mxu0 %v2175
    %2185 = vmatprep.subr.bf16.mxu0 0
    %2186 = vmatpush1.bf16.msra.mxu0 0
    %2187 = vmatprep.subr.bf16.mxu0 0
    %2188 = vmatpush1.bf16.msra.mxu0 0
    %2189 = vmatprep.subr.bf16.mxu0 0
    %2190 = vmatpush1.bf16.msra.mxu0 0
    %2191 = vmatprep.subr.bf16.mxu0 0
    %2192 = vmatpush1.bf16.msra.mxu0 0
    %2193 = vmatprep.subr.bf16.mxu0 0
    %2194 = vmatpush1.bf16.msra.mxu0 0
    %2195 = vmatprep.subr.bf16.mxu0 0
    %2196 = vmatpush1.bf16.msra.mxu0 0
    %2197 = vmatprep.subr.bf16.mxu0 0
    %2198 = vmatpush1.bf16.msra.mxu0 0
    %2199 = vmatprep.subr.bf16.mxu0 0
    %2200 = vmatpush1.bf16.msra.mxu0 0
    %2201 = vmatprep.subr.bf16.mxu0 0
    %2202 = vmatpush1.bf16.msra.mxu0 0
    %2203 = vmatprep.subr.bf16.mxu0 0
    %2204 = vmatpush1.bf16.msra.mxu0 0
    %2205 = vmatprep.subr.bf16.mxu0 0
    %2206 = vmatpush1.bf16.msra.mxu0 0
    %2207 = vmatprep.subr.bf16.mxu0 0
    %2208 = vmatpush1.bf16.msra.mxu0 0
    %2209 = vmatprep.subr.bf16.mxu0 0
    %2210 = vmatpush1.bf16.msra.mxu0 0
    %2211 = vmatprep.subr.bf16.mxu0 0
    %2212 = vmatpush1.bf16.msra.mxu0 0
    %2213 = vmatprep.mubr.bf16.mxu0 0
    %2214 = vmatmul.mubr.bf16.gmra.mrb[0].mxu0 %v2179
    %v2215 = vpop.f32.mrb[0].mxu0
    %v2216 = vadd.f32 0.0, %v2215
    %v2217 = vpop.f32.mrb[0].mxu0
    %v2218 = vpop.f32.mrb[0].mxu0
    %v2219 = vpop.f32.mrb[0].mxu0
    %2220 = vdwg.mxu0
    %v2221 = vadd.f32 %v2158, %v2216
    %v2222 = vld [vmem:[#allocation3 + $0xa] sm:$0xff]
    %v2223 = vpack.c.bf16 %v2222, %v2222
    %s2224 = scalar_lea.vmem [#allocation5], 320
    %v2225 = vld [vmem:[%s2224] sm:$0xf]
    %v2226 = vld [vmem:[%s2224 + $0x4] sm:$0xf]
    %v2227 = vld [vmem:[%s2224 + $0x8] sm:$0xf]
    %v2228 = vld [vmem:[%s2224 + $0xc] sm:$0xf]
    %v2233 = vunpack.c.l.b16 %v2225
    %v2234 = vunpack.c.l.b16 %v2226
    %v2235 = vunpack.c.l.b16 %v2227
    %v2236 = vunpack.c.l.b16 %v2228
    %v2237 = vpack.c.b16 %v2234, %v2233
    %v2238 = vpack.c.b16 %v2236, %v2235
    %v2242 = vsel %vm952, %v2223, 0
    %2244 = vmatprep.subr.bf16.mxu0 0
    %2245 = vmatpush1.bf16.msra.mxu0 %v2237
    %2246 = vmatprep.subr.bf16.mxu0 0
    %2247 = vmatpush1.bf16.msra.mxu0 %v2238
    %2248 = vmatprep.subr.bf16.mxu0 0
    %2249 = vmatpush1.bf16.msra.mxu0 0
    %2250 = vmatprep.subr.bf16.mxu0 0
    %2251 = vmatpush1.bf16.msra.mxu0 0
    %2252 = vmatprep.subr.bf16.mxu0 0
    %2253 = vmatpush1.bf16.msra.mxu0 0
    %2254 = vmatprep.subr.bf16.mxu0 0
    %2255 = vmatpush1.bf16.msra.mxu0 0
    %2256 = vmatprep.subr.bf16.mxu0 0
    %2257 = vmatpush1.bf16.msra.mxu0 0
    %2258 = vmatprep.subr.bf16.mxu0 0
    %2259 = vmatpush1.bf16.msra.mxu0 0
    %2260 = vmatprep.subr.bf16.mxu0 0
    %2261 = vmatpush1.bf16.msra.mxu0 0
    %2262 = vmatprep.subr.bf16.mxu0 0
    %2263 = vmatpush1.bf16.msra.mxu0 0
    %2264 = vmatprep.subr.bf16.mxu0 0
    %2265 = vmatpush1.bf16.msra.mxu0 0
    %2266 = vmatprep.subr.bf16.mxu0 0
    %2267 = vmatpush1.bf16.msra.mxu0 0
    %2268 = vmatprep.subr.bf16.mxu0 0
    %2269 = vmatpush1.bf16.msra.mxu0 0
    %2270 = vmatprep.subr.bf16.mxu0 0
    %2271 = vmatpush1.bf16.msra.mxu0 0
    %2272 = vmatprep.subr.bf16.mxu0 0
    %2273 = vmatpush1.bf16.msra.mxu0 0
    %2274 = vmatprep.subr.bf16.mxu0 0
    %2275 = vmatpush1.bf16.msra.mxu0 0
    %2276 = vmatprep.mubr.bf16.mxu0 0
    %2277 = vmatmul.mubr.bf16.gmra.mrb[0].mxu0 %v2242
    %v2278 = vpop.f32.mrb[0].mxu0
    %v2279 = vadd.f32 0.0, %v2278
    %v2280 = vpop.f32.mrb[0].mxu0
    %v2281 = vpop.f32.mrb[0].mxu0
    %v2282 = vpop.f32.mrb[0].mxu0
    %2283 = vdwg.mxu0
    %v2284 = vadd.f32 %v2221, %v2279
    %v2285 = vld [vmem:[%s4] sm:$0x1]
    %v2287 = vlaneseq
    %v2288 = vshrl.u32 %v2287, 7
    %v2289 = vsub.s32 0, %v2288
    %v2290 = vrot.slane %v2285, %v2289
    %v2292 = vadd.f32 %v2284, %v2290
    %v2293 = vmul.f32 %v2292, 0.2
    %v2294 = vmax.f32 %v2292, %v2293
    %vm2295 = vcmask 523264
    %2296 = vst.msk [vmem:[%s12] sm:$0xff] %vm2295, %v2294
    %vm2297 = vcmask 520192
    %2298 = vst.msk [vmem:[#allocation4] sm:$0x1f] %vm2297, 0.0
    %2299 = vst.msk [vmem:[#allocation4 + $0x9] sm:$0x1f] %vm2297, 0.0
    %v2300 = vld [vmem:[%s12] ss:$2 sm:$0xf]
    %vm2301 = vcmask 519168
    %2302 = vst.msk [vmem:[#allocation4 + $0x5] sm:$0xf] %vm2301, %v2300
    %2303 = vst.msk [vmem:[#allocation4 + $0xe] sm:$0x1f] %vm2297, 0.0
    %2304 = vst.msk [vmem:[#allocation4 + $0x17] sm:$0x1f] %vm2297, 0.0
    %s2305 = scalar_lea.vmem %s12, 1
    %v2306 = vld [vmem:[%s2305] ss:$2 sm:$0xf]
    %2307 = vst.msk [vmem:[#allocation4 + $0x13] sm:$0xf] %vm2301, %v2306
    %v2308 = vld [vmem:[#allocation4] sm:$0xf]
    %v2309 = vpack.c.bf16 %v2308, %v2308
    %v2310 = vld [vmem:[#allocation7] sm:$0xf]
    %v2311 = vld [vmem:[#allocation7 + $0x4] sm:$0xf]
    %v2312 = vld [vmem:[#allocation7 + $0x8] sm:$0xf]
    %v2313 = vld [vmem:[#allocation7 + $0xc] sm:$0xf]
    %v2314 = vld [vmem:[#allocation7 + $0x10] sm:$0xf]
    %v2315 = vld [vmem:[#allocation7 + $0x14] sm:$0xf]
    %v2316 = vld [vmem:[#allocation7 + $0x18] sm:$0xf]
    %v2317 = vld [vmem:[#allocation7 + $0x1c] sm:$0xf]
    %v2318 = vld [vmem:[#allocation4 + $0xe] sm:$0xf]
    %v2319 = vpack.c.bf16 %v2318, %v2318
    %s2320 = scalar_lea.vmem [#allocation7], 32
    %v2321 = vld [vmem:[%s2320] sm:$0xf]
    %v2322 = vld [vmem:[%s2320 + $0x4] sm:$0xf]
    %v2323 = vld [vmem:[%s2320 + $0x8] sm:$0xf]
    %v2324 = vld [vmem:[%s2320 + $0xc] sm:$0xf]
    %v2325 = vld [vmem:[%s2320 + $0x10] sm:$0xf]
    %v2326 = vld [vmem:[%s2320 + $0x14] sm:$0xf]
    %v2327 = vld [vmem:[%s2320 + $0x18] sm:$0xf]
    %v2328 = vld [vmem:[%s2320 + $0x1c] sm:$0xf]
    %v2337 = vunpack.c.l.b16 %v2321
    %v2338 = vunpack.c.l.b16 %v2322
    %v2339 = vunpack.c.l.b16 %v2323
    %v2340 = vunpack.c.l.b16 %v2324
    %v2341 = vunpack.c.l.b16 %v2325
    %v2342 = vunpack.c.l.b16 %v2326
    %v2343 = vunpack.c.l.b16 %v2327
    %v2344 = vunpack.c.l.b16 %v2328
    %v2345 = vpack.c.b16 %v2338, %v2337
    %v2346 = vpack.c.b16 %v2340, %v2339
    %v2347 = vpack.c.b16 %v2342, %v2341
    %v2348 = vpack.c.b16 %v2344, %v2343
    %v2354 = vsel %vm2295, %v2319, 0
    %2356 = vmatprep.subr.bf16.mxu0 0
    %2357 = vmatpush1.bf16.msra.mxu0 %v2345
    %2358 = vmatprep.subr.bf16.mxu0 0
    %2359 = vmatpush1.bf16.msra.mxu0 %v2346
    %2360 = vmatprep.subr.bf16.mxu0 0
    %2361 = vmatpush1.bf16.msra.mxu0 %v2347
    %2362 = vmatprep.subr.bf16.mxu0 0
    %2363 = vmatpush1.bf16.msra.mxu0 %v2348
    %2364 = vmatprep.subr.bf16.mxu0 0
    %2365 = vmatpush1.bf16.msra.mxu0 0
    %2366 = vmatprep.subr.bf16.mxu0 0
    %2367 = vmatpush1.bf16.msra.mxu0 0
    %2368 = vmatprep.subr.bf16.mxu0 0
    %2369 = vmatpush1.bf16.msra.mxu0 0
    %2370 = vmatprep.subr.bf16.mxu0 0
    %2371 = vmatpush1.bf16.msra.mxu0 0
    %2372 = vmatprep.subr.bf16.mxu0 0
    %2373 = vmatpush1.bf16.msra.mxu0 0
    %2374 = vmatprep.subr.bf16.mxu0 0
    %2375 = vmatpush1.bf16.msra.mxu0 0
    %2376 = vmatprep.subr.bf16.mxu0 0
    %2377 = vmatpush1.bf16.msra.mxu0 0
    %2378 = vmatprep.subr.bf16.mxu0 0
    %2379 = vmatpush1.bf16.msra.mxu0 0
    %2380 = vmatprep.subr.bf16.mxu0 0
    %2381 = vmatpush1.bf16.msra.mxu0 0
    %2382 = vmatprep.subr.bf16.mxu0 0
    %2383 = vmatpush1.bf16.msra.mxu0 0
    %2384 = vmatprep.subr.bf16.mxu0 0
    %2385 = vmatpush1.bf16.msra.mxu0 0
    %2386 = vmatprep.subr.bf16.mxu0 0
    %2387 = vmatpush1.bf16.msra.mxu0 0
    %2388 = vmatprep.mubr.bf16.mxu0 0
    %2389 = vmatmul.mubr.bf16.gmra.mrb[0].mxu0 %v2354
    %v2390 = vpop.f32.mrb[0].mxu0
    %v2391 = vadd.f32 0.0, %v2390
    %v2392 = vpop.f32.mrb[0].mxu0
    %v2393 = vpop.f32.mrb[0].mxu0
    %v2394 = vpop.f32.mrb[0].mxu0
    %2395 = vdwg.mxu0
    %v2404 = vunpack.c.l.b16 %v2310
    %v2405 = vunpack.c.l.b16 %v2311
    %v2406 = vunpack.c.l.b16 %v2312
    %v2407 = vunpack.c.l.b16 %v2313
    %v2408 = vunpack.c.l.b16 %v2314
    %v2409 = vunpack.c.l.b16 %v2315
    %v2410 = vunpack.c.l.b16 %v2316
    %v2411 = vunpack.c.l.b16 %v2317
    %v2412 = vpack.c.b16 %v2405, %v2404
    %v2413 = vpack.c.b16 %v2407, %v2406
    %v2414 = vpack.c.b16 %v2409, %v2408
    %v2415 = vpack.c.b16 %v2411, %v2410
    %v2421 = vsel %vm2295, %v2309, 0
    %2423 = vmatprep.subr.bf16.mxu0 0
    %2424 = vmatpush1.bf16.msra.mxu0 %v2412
    %2425 = vmatprep.subr.bf16.mxu0 0
    %2426 = vmatpush1.bf16.msra.mxu0 %v2413
    %2427 = vmatprep.subr.bf16.mxu0 0
    %2428 = vmatpush1.bf16.msra.mxu0 %v2414
    %2429 = vmatprep.subr.bf16.mxu0 0
    %2430 = vmatpush1.bf16.msra.mxu0 %v2415
    %2431 = vmatprep.subr.bf16.mxu0 0
    %2432 = vmatpush1.bf16.msra.mxu0 0
    %2433 = vmatprep.subr.bf16.mxu0 0
    %2434 = vmatpush1.bf16.msra.mxu0 0
    %2435 = vmatprep.subr.bf16.mxu0 0
    %2436 = vmatpush1.bf16.msra.mxu0 0
    %2437 = vmatprep.subr.bf16.mxu0 0
    %2438 = vmatpush1.bf16.msra.mxu0 0
    %2439 = vmatprep.subr.bf16.mxu0 0
    %2440 = vmatpush1.bf16.msra.mxu0 0
    %2441 = vmatprep.subr.bf16.mxu0 0
    %2442 = vmatpush1.bf16.msra.mxu0 0
    %2443 = vmatprep.subr.bf16.mxu0 0
    %2444 = vmatpush1.bf16.msra.mxu0 0
    %2445 = vmatprep.subr.bf16.mxu0 0
    %2446 = vmatpush1.bf16.msra.mxu0 0
    %2447 = vmatprep.subr.bf16.mxu0 0
    %2448 = vmatpush1.bf16.msra.mxu0 0
    %2449 = vmatprep.subr.bf16.mxu0 0
    %2450 = vmatpush1.bf16.msra.mxu0 0
    %2451 = vmatprep.subr.bf16.mxu0 0
    %2452 = vmatpush1.bf16.msra.mxu0 0
    %2453 = vmatprep.subr.bf16.mxu0 0
    %2454 = vmatpush1.bf16.msra.mxu0 0
    %2455 = vmatprep.mubr.bf16.mxu0 0
    %2456 = vmatmul.mubr.bf16.gmra.mrb[0].mxu0 %v2421
    %v2457 = vpop.f32.mrb[0].mxu0
    %v2458 = vadd.f32 %v2391, %v2457
    %v2459 = vpop.f32.mrb[0].mxu0
    %v2460 = vpop.f32.mrb[0].mxu0
    %v2461 = vpop.f32.mrb[0].mxu0
    %2462 = vdwg.mxu0
    %v2463 = vld [vmem:[#allocation4 + $0x1] sm:$0xf]
    %v2464 = vpack.c.bf16 %v2463, %v2463
    %s2465 = scalar_lea.vmem [#allocation7], 64
    %v2466 = vld [vmem:[%s2465] sm:$0xf]
    %v2467 = vld [vmem:[%s2465 + $0x4] sm:$0xf]
    %v2468 = vld [vmem:[%s2465 + $0x8] sm:$0xf]
    %v2469 = vld [vmem:[%s2465 + $0xc] sm:$0xf]
    %v2470 = vld [vmem:[%s2465 + $0x10] sm:$0xf]
    %v2471 = vld [vmem:[%s2465 + $0x14] sm:$0xf]
    %v2472 = vld [vmem:[%s2465 + $0x18] sm:$0xf]
    %v2473 = vld [vmem:[%s2465 + $0x1c] sm:$0xf]
    %v2482 = vunpack.c.l.b16 %v2466
    %v2483 = vunpack.c.l.b16 %v2467
    %v2484 = vunpack.c.l.b16 %v2468
    %v2485 = vunpack.c.l.b16 %v2469
    %v2486 = vunpack.c.l.b16 %v2470
    %v2487 = vunpack.c.l.b16 %v2471
    %v2488 = vunpack.c.l.b16 %v2472
    %v2489 = vunpack.c.l.b16 %v2473
    %v2490 = vpack.c.b16 %v2483, %v2482
    %v2491 = vpack.c.b16 %v2485, %v2484
    %v2492 = vpack.c.b16 %v2487, %v2486
    %v2493 = vpack.c.b16 %v2489, %v2488
    %v2499 = vsel %vm2295, %v2464, 0
    %2501 = vmatprep.subr.bf16.mxu0 0
    %2502 = vmatpush1.bf16.msra.mxu0 %v2490
    %2503 = vmatprep.subr.bf16.mxu0 0
    %2504 = vmatpush1.bf16.msra.mxu0 %v2491
    %2505 = vmatprep.subr.bf16.mxu0 0
    %2506 = vmatpush1.bf16.msra.mxu0 %v2492
    %2507 = vmatprep.subr.bf16.mxu0 0
    %2508 = vmatpush1.bf16.msra.mxu0 %v2493
    %2509 = vmatprep.subr.bf16.mxu0 0
    %2510 = vmatpush1.bf16.msra.mxu0 0
    %2511 = vmatprep.subr.bf16.mxu0 0
    %2512 = vmatpush1.bf16.msra.mxu0 0
    %2513 = vmatprep.subr.bf16.mxu0 0
    %2514 = vmatpush1.bf16.msra.mxu0 0
    %2515 = vmatprep.subr.bf16.mxu0 0
    %2516 = vmatpush1.bf16.msra.mxu0 0
    %2517 = vmatprep.subr.bf16.mxu0 0
    %2518 = vmatpush1.bf16.msra.mxu0 0
    %2519 = vmatprep.subr.bf16.mxu0 0
    %2520 = vmatpush1.bf16.msra.mxu0 0
    %2521 = vmatprep.subr.bf16.mxu0 0
    %2522 = vmatpush1.bf16.msra.mxu0 0
    %2523 = vmatprep.subr.bf16.mxu0 0
    %2524 = vmatpush1.bf16.msra.mxu0 0
    %2525 = vmatprep.subr.bf16.mxu0 0
    %2526 = vmatpush1.bf16.msra.mxu0 0
    %2527 = vmatprep.subr.bf16.mxu0 0
    %2528 = vmatpush1.bf16.msra.mxu0 0
    %2529 = vmatprep.subr.bf16.mxu0 0
    %2530 = vmatpush1.bf16.msra.mxu0 0
    %2531 = vmatprep.subr.bf16.mxu0 0
    %2532 = vmatpush1.bf16.msra.mxu0 0
    %2533 = vmatprep.mubr.bf16.mxu0 0
    %2534 = vmatmul.mubr.bf16.gmra.mrb[0].mxu0 %v2499
    %v2535 = vpop.f32.mrb[0].mxu0
    %v2536 = vadd.f32 0.0, %v2535
    %v2537 = vpop.f32.mrb[0].mxu0
    %v2538 = vpop.f32.mrb[0].mxu0
    %v2539 = vpop.f32.mrb[0].mxu0
    %2540 = vdwg.mxu0
    %v2541 = vadd.f32 %v2458, %v2536
    %v2542 = vld [vmem:[#allocation4 + $0xf] sm:$0xf]
    %v2543 = vpack.c.bf16 %v2542, %v2542
    %s2544 = scalar_lea.vmem [#allocation7], 96
    %v2545 = vld [vmem:[%s2544] sm:$0xf]
    %v2546 = vld [vmem:[%s2544 + $0x4] sm:$0xf]
    %v2547 = vld [vmem:[%s2544 + $0x8] sm:$0xf]
    %v2548 = vld [vmem:[%s2544 + $0xc] sm:$0xf]
    %v2549 = vld [vmem:[%s2544 + $0x10] sm:$0xf]
    %v2550 = vld [vmem:[%s2544 + $0x14] sm:$0xf]
    %v2551 = vld [vmem:[%s2544 + $0x18] sm:$0xf]
    %v2552 = vld [vmem:[%s2544 + $0x1c] sm:$0xf]
    %v2561 = vunpack.c.l.b16 %v2545
    %v2562 = vunpack.c.l.b16 %v2546
    %v2563 = vunpack.c.l.b16 %v2547
    %v2564 = vunpack.c.l.b16 %v2548
    %v2565 = vunpack.c.l.b16 %v2549
    %v2566 = vunpack.c.l.b16 %v2550
    %v2567 = vunpack.c.l.b16 %v2551
    %v2568 = vunpack.c.l.b16 %v2552
    %v2569 = vpack.c.b16 %v2562, %v2561
    %v2570 = vpack.c.b16 %v2564, %v2563
    %v2571 = vpack.c.b16 %v2566, %v2565
    %v2572 = vpack.c.b16 %v2568, %v2567
    %v2578 = vsel %vm2295, %v2543, 0
    %2580 = vmatprep.subr.bf16.mxu0 0
    %2581 = vmatpush1.bf16.msra.mxu0 %v2569
    %2582 = vmatprep.subr.bf16.mxu0 0
    %2583 = vmatpush1.bf16.msra.mxu0 %v2570
    %2584 = vmatprep.subr.bf16.mxu0 0
    %2585 = vmatpush1.bf16.msra.mxu0 %v2571
    %2586 = vmatprep.subr.bf16.mxu0 0
    %2587 = vmatpush1.bf16.msra.mxu0 %v2572
    %2588 = vmatprep.subr.bf16.mxu0 0
    %2589 = vmatpush1.bf16.msra.mxu0 0
    %2590 = vmatprep.subr.bf16.mxu0 0
    %2591 = vmatpush1.bf16.msra.mxu0 0
    %2592 = vmatprep.subr.bf16.mxu0 0
    %2593 = vmatpush1.bf16.msra.mxu0 0
    %2594 = vmatprep.subr.bf16.mxu0 0
    %2595 = vmatpush1.bf16.msra.mxu0 0
    %2596 = vmatprep.subr.bf16.mxu0 0
    %2597 = vmatpush1.bf16.msra.mxu0 0
    %2598 = vmatprep.subr.bf16.mxu0 0
    %2599 = vmatpush1.bf16.msra.mxu0 0
    %2600 = vmatprep.subr.bf16.mxu0 0
    %2601 = vmatpush1.bf16.msra.mxu0 0
    %2602 = vmatprep.subr.bf16.mxu0 0
    %2603 = vmatpush1.bf16.msra.mxu0 0
    %2604 = vmatprep.subr.bf16.mxu0 0
    %2605 = vmatpush1.bf16.msra.mxu0 0
    %2606 = vmatprep.subr.bf16.mxu0 0
    %2607 = vmatpush1.bf16.msra.mxu0 0
    %2608 = vmatprep.subr.bf16.mxu0 0
    %2609 = vmatpush1.bf16.msra.mxu0 0
    %2610 = vmatprep.subr.bf16.mxu0 0
    %2611 = vmatpush1.bf16.msra.mxu0 0
    %2612 = vmatprep.mubr.bf16.mxu0 0
    %2613 = vmatmul.mubr.bf16.gmra.mrb[0].mxu0 %v2578
    %v2614 = vpop.f32.mrb[0].mxu0
    %v2615 = vadd.f32 0.0, %v2614
    %v2616 = vpop.f32.mrb[0].mxu0
    %v2617 = vpop.f32.mrb[0].mxu0
    %v2618 = vpop.f32.mrb[0].mxu0
    %2619 = vdwg.mxu0
    %v2620 = vadd.f32 %v2541, %v2615
    %v2621 = vld [vmem:[#allocation4 + $0x2] sm:$0xf]
    %v2622 = vpack.c.bf16 %v2621, %v2621
    %s2623 = scalar_lea.vmem [#allocation7], 128
    %v2624 = vld [vmem:[%s2623] sm:$0xf]
    %v2625 = vld [vmem:[%s2623 + $0x4] sm:$0xf]
    %v2626 = vld [vmem:[%s2623 + $0x8] sm:$0xf]
    %v2627 = vld [vmem:[%s2623 + $0xc] sm:$0xf]
    %v2628 = vld [vmem:[%s2623 + $0x10] sm:$0xf]
    %v2629 = vld [vmem:[%s2623 + $0x14] sm:$0xf]
    %v2630 = vld [vmem:[%s2623 + $0x18] sm:$0xf]
    %v2631 = vld [vmem:[%s2623 + $0x1c] sm:$0xf]
    %v2640 = vunpack.c.l.b16 %v2624
    %v2641 = vunpack.c.l.b16 %v2625
    %v2642 = vunpack.c.l.b16 %v2626
    %v2643 = vunpack.c.l.b16 %v2627
    %v2644 = vunpack.c.l.b16 %v2628
    %v2645 = vunpack.c.l.b16 %v2629
    %v2646 = vunpack.c.l.b16 %v2630
    %v2647 = vunpack.c.l.b16 %v2631
    %v2648 = vpack.c.b16 %v2641, %v2640
    %v2649 = vpack.c.b16 %v2643, %v2642
    %v2650 = vpack.c.b16 %v2645, %v2644
    %v2651 = vpack.c.b16 %v2647, %v2646
    %v2657 = vsel %vm2295, %v2622, 0
    %2659 = vmatprep.subr.bf16.mxu0 0
    %2660 = vmatpush1.bf16.msra.mxu0 %v2648
    %2661 = vmatprep.subr.bf16.mxu0 0
    %2662 = vmatpush1.bf16.msra.mxu0 %v2649
    %2663 = vmatprep.subr.bf16.mxu0 0
    %2664 = vmatpush1.bf16.msra.mxu0 %v2650
    %2665 = vmatprep.subr.bf16.mxu0 0
    %2666 = vmatpush1.bf16.msra.mxu0 %v2651
    %2667 = vmatprep.subr.bf16.mxu0 0
    %2668 = vmatpush1.bf16.msra.mxu0 0
    %2669 = vmatprep.subr.bf16.mxu0 0
    %2670 = vmatpush1.bf16.msra.mxu0 0
    %2671 = vmatprep.subr.bf16.mxu0 0
    %2672 = vmatpush1.bf16.msra.mxu0 0
    %2673 = vmatprep.subr.bf16.mxu0 0
    %2674 = vmatpush1.bf16.msra.mxu0 0
    %2675 = vmatprep.subr.bf16.mxu0 0
    %2676 = vmatpush1.bf16.msra.mxu0 0
    %2677 = vmatprep.subr.bf16.mxu0 0
    %2678 = vmatpush1.bf16.msra.mxu0 0
    %2679 = vmatprep.subr.bf16.mxu0 0
    %2680 = vmatpush1.bf16.msra.mxu0 0
    %2681 = vmatprep.subr.bf16.mxu0 0
    %2682 = vmatpush1.bf16.msra.mxu0 0
    %2683 = vmatprep.subr.bf16.mxu0 0
    %2684 = vmatpush1.bf16.msra.mxu0 0
    %2685 = vmatprep.subr.bf16.mxu0 0
    %2686 = vmatpush1.bf16.msra.mxu0 0
    %2687 = vmatprep.subr.bf16.mxu0 0
    %2688 = vmatpush1.bf16.msra.mxu0 0
    %2689 = vmatprep.subr.bf16.mxu0 0
    %2690 = vmatpush1.bf16.msra.mxu0 0
    %2691 = vmatprep.mubr.bf16.mxu0 0
    %2692 = vmatmul.mubr.bf16.gmra.mrb[0].mxu0 %v2657
    %v2693 = vpop.f32.mrb[0].mxu0
    %v2694 = vadd.f32 0.0, %v2693
    %v2695 = vpop.f32.mrb[0].mxu0
    %v2696 = vpop.f32.mrb[0].mxu0
    %v2697 = vpop.f32.mrb[0].mxu0
    %2698 = vdwg.mxu0
    %v2699 = vadd.f32 %v2620, %v2694
    %v2700 = vld [vmem:[#allocation4 + $0x10] sm:$0xf]
    %v2701 = vpack.c.bf16 %v2700, %v2700
    %s2702 = scalar_lea.vmem [#allocation7], 160
    %v2703 = vld [vmem:[%s2702] sm:$0xf]
    %v2704 = vld [vmem:[%s2702 + $0x4] sm:$0xf]
    %v2705 = vld [vmem:[%s2702 + $0x8] sm:$0xf]
    %v2706 = vld [vmem:[%s2702 + $0xc] sm:$0xf]
    %v2707 = vld [vmem:[%s2702 + $0x10] sm:$0xf]
    %v2708 = vld [vmem:[%s2702 + $0x14] sm:$0xf]
    %v2709 = vld [vmem:[%s2702 + $0x18] sm:$0xf]
    %v2710 = vld [vmem:[%s2702 + $0x1c] sm:$0xf]
    %v2719 = vunpack.c.l.b16 %v2703
    %v2720 = vunpack.c.l.b16 %v2704
    %v2721 = vunpack.c.l.b16 %v2705
    %v2722 = vunpack.c.l.b16 %v2706
    %v2723 = vunpack.c.l.b16 %v2707
    %v2724 = vunpack.c.l.b16 %v2708
    %v2725 = vunpack.c.l.b16 %v2709
    %v2726 = vunpack.c.l.b16 %v2710
    %v2727 = vpack.c.b16 %v2720, %v2719
    %v2728 = vpack.c.b16 %v2722, %v2721
    %v2729 = vpack.c.b16 %v2724, %v2723
    %v2730 = vpack.c.b16 %v2726, %v2725
    %v2736 = vsel %vm2295, %v2701, 0
    %2738 = vmatprep.subr.bf16.mxu0 0
    %2739 = vmatpush1.bf16.msra.mxu0 %v2727
    %2740 = vmatprep.subr.bf16.mxu0 0
    %2741 = vmatpush1.bf16.msra.mxu0 %v2728
    %2742 = vmatprep.subr.bf16.mxu0 0
    %2743 = vmatpush1.bf16.msra.mxu0 %v2729
    %2744 = vmatprep.subr.bf16.mxu0 0
    %2745 = vmatpush1.bf16.msra.mxu0 %v2730
    %2746 = vmatprep.subr.bf16.mxu0 0
    %2747 = vmatpush1.bf16.msra.mxu0 0
    %2748 = vmatprep.subr.bf16.mxu0 0
    %2749 = vmatpush1.bf16.msra.mxu0 0
    %2750 = vmatprep.subr.bf16.mxu0 0
    %2751 = vmatpush1.bf16.msra.mxu0 0
    %2752 = vmatprep.subr.bf16.mxu0 0
    %2753 = vmatpush1.bf16.msra.mxu0 0
    %2754 = vmatprep.subr.bf16.mxu0 0
    %2755 = vmatpush1.bf16.msra.mxu0 0
    %2756 = vmatprep.subr.bf16.mxu0 0
    %2757 = vmatpush1.bf16.msra.mxu0 0
    %2758 = vmatprep.subr.bf16.mxu0 0
    %2759 = vmatpush1.bf16.msra.mxu0 0
    %2760 = vmatprep.subr.bf16.mxu0 0
    %2761 = vmatpush1.bf16.msra.mxu0 0
    %2762 = vmatprep.subr.bf16.mxu0 0
    %2763 = vmatpush1.bf16.msra.mxu0 0
    %2764 = vmatprep.subr.bf16.mxu0 0
    %2765 = vmatpush1.bf16.msra.mxu0 0
    %2766 = vmatprep.subr.bf16.mxu0 0
    %2767 = vmatpush1.bf16.msra.mxu0 0
    %2768 = vmatprep.subr.bf16.mxu0 0
    %2769 = vmatpush1.bf16.msra.mxu0 0
    %2770 = vmatprep.mubr.bf16.mxu0 0
    %2771 = vmatmul.mubr.bf16.gmra.mrb[0].mxu0 %v2736
    %v2772 = vpop.f32.mrb[0].mxu0
    %v2773 = vadd.f32 0.0, %v2772
    %v2774 = vpop.f32.mrb[0].mxu0
    %v2775 = vpop.f32.mrb[0].mxu0
    %v2776 = vpop.f32.mrb[0].mxu0
    %2777 = vdwg.mxu0
    %v2778 = vadd.f32 %v2699, %v2773
    %v2779 = vld [vmem:[#allocation4 + $0x3] sm:$0xf]
    %v2780 = vpack.c.bf16 %v2779, %v2779
    %s2781 = scalar_lea.vmem [#allocation7], 192
    %v2782 = vld [vmem:[%s2781] sm:$0xf]
    %v2783 = vld [vmem:[%s2781 + $0x4] sm:$0xf]
    %v2784 = vld [vmem:[%s2781 + $0x8] sm:$0xf]
    %v2785 = vld [vmem:[%s2781 + $0xc] sm:$0xf]
    %v2786 = vld [vmem:[%s2781 + $0x10] sm:$0xf]
    %v2787 = vld [vmem:[%s2781 + $0x14] sm:$0xf]
    %v2788 = vld [vmem:[%s2781 + $0x18] sm:$0xf]
    %v2789 = vld [vmem:[%s2781 + $0x1c] sm:$0xf]
    %v2798 = vunpack.c.l.b16 %v2782
    %v2799 = vunpack.c.l.b16 %v2783
    %v2800 = vunpack.c.l.b16 %v2784
    %v2801 = vunpack.c.l.b16 %v2785
    %v2802 = vunpack.c.l.b16 %v2786
    %v2803 = vunpack.c.l.b16 %v2787
    %v2804 = vunpack.c.l.b16 %v2788
    %v2805 = vunpack.c.l.b16 %v2789
    %v2806 = vpack.c.b16 %v2799, %v2798
    %v2807 = vpack.c.b16 %v2801, %v2800
    %v2808 = vpack.c.b16 %v2803, %v2802
    %v2809 = vpack.c.b16 %v2805, %v2804
    %v2815 = vsel %vm2295, %v2780, 0
    %2817 = vmatprep.subr.bf16.mxu0 0
    %2818 = vmatpush1.bf16.msra.mxu0 %v2806
    %2819 = vmatprep.subr.bf16.mxu0 0
    %2820 = vmatpush1.bf16.msra.mxu0 %v2807
    %2821 = vmatprep.subr.bf16.mxu0 0
    %2822 = vmatpush1.bf16.msra.mxu0 %v2808
    %2823 = vmatprep.subr.bf16.mxu0 0
    %2824 = vmatpush1.bf16.msra.mxu0 %v2809
    %2825 = vmatprep.subr.bf16.mxu0 0
    %2826 = vmatpush1.bf16.msra.mxu0 0
    %2827 = vmatprep.subr.bf16.mxu0 0
    %2828 = vmatpush1.bf16.msra.mxu0 0
    %2829 = vmatprep.subr.bf16.mxu0 0
    %2830 = vmatpush1.bf16.msra.mxu0 0
    %2831 = vmatprep.subr.bf16.mxu0 0
    %2832 = vmatpush1.bf16.msra.mxu0 0
    %2833 = vmatprep.subr.bf16.mxu0 0
    %2834 = vmatpush1.bf16.msra.mxu0 0
    %2835 = vmatprep.subr.bf16.mxu0 0
    %2836 = vmatpush1.bf16.msra.mxu0 0
    %2837 = vmatprep.subr.bf16.mxu0 0
    %2838 = vmatpush1.bf16.msra.mxu0 0
    %2839 = vmatprep.subr.bf16.mxu0 0
    %2840 = vmatpush1.bf16.msra.mxu0 0
    %2841 = vmatprep.subr.bf16.mxu0 0
    %2842 = vmatpush1.bf16.msra.mxu0 0
    %2843 = vmatprep.subr.bf16.mxu0 0
    %2844 = vmatpush1.bf16.msra.mxu0 0
    %2845 = vmatprep.subr.bf16.mxu0 0
    %2846 = vmatpush1.bf16.msra.mxu0 0
    %2847 = vmatprep.subr.bf16.mxu0 0
    %2848 = vmatpush1.bf16.msra.mxu0 0
    %2849 = vmatprep.mubr.bf16.mxu0 0
    %2850 = vmatmul.mubr.bf16.gmra.mrb[0].mxu0 %v2815
    %v2851 = vpop.f32.mrb[0].mxu0
    %v2852 = vadd.f32 0.0, %v2851
    %v2853 = vpop.f32.mrb[0].mxu0
    %v2854 = vpop.f32.mrb[0].mxu0
    %v2855 = vpop.f32.mrb[0].mxu0
    %2856 = vdwg.mxu0
    %v2857 = vadd.f32 %v2778, %v2852
    %v2858 = vld [vmem:[#allocation4 + $0x11] sm:$0xf]
    %v2859 = vpack.c.bf16 %v2858, %v2858
    %s2860 = scalar_lea.vmem [#allocation7], 224
    %v2861 = vld [vmem:[%s2860] sm:$0xf]
    %v2862 = vld [vmem:[%s2860 + $0x4] sm:$0xf]
    %v2863 = vld [vmem:[%s2860 + $0x8] sm:$0xf]
    %v2864 = vld [vmem:[%s2860 + $0xc] sm:$0xf]
    %v2865 = vld [vmem:[%s2860 + $0x10] sm:$0xf]
    %v2866 = vld [vmem:[%s2860 + $0x14] sm:$0xf]
    %v2867 = vld [vmem:[%s2860 + $0x18] sm:$0xf]
    %v2868 = vld [vmem:[%s2860 + $0x1c] sm:$0xf]
    %v2877 = vunpack.c.l.b16 %v2861
    %v2878 = vunpack.c.l.b16 %v2862
    %v2879 = vunpack.c.l.b16 %v2863
    %v2880 = vunpack.c.l.b16 %v2864
    %v2881 = vunpack.c.l.b16 %v2865
    %v2882 = vunpack.c.l.b16 %v2866
    %v2883 = vunpack.c.l.b16 %v2867
    %v2884 = vunpack.c.l.b16 %v2868
    %v2885 = vpack.c.b16 %v2878, %v2877
    %v2886 = vpack.c.b16 %v2880, %v2879
    %v2887 = vpack.c.b16 %v2882, %v2881
    %v2888 = vpack.c.b16 %v2884, %v2883
    %v2894 = vsel %vm2295, %v2859, 0
    %2896 = vmatprep.subr.bf16.mxu0 0
    %2897 = vmatpush1.bf16.msra.mxu0 %v2885
    %2898 = vmatprep.subr.bf16.mxu0 0
    %2899 = vmatpush1.bf16.msra.mxu0 %v2886
    %2900 = vmatprep.subr.bf16.mxu0 0
    %2901 = vmatpush1.bf16.msra.mxu0 %v2887
    %2902 = vmatprep.subr.bf16.mxu0 0
    %2903 = vmatpush1.bf16.msra.mxu0 %v2888
    %2904 = vmatprep.subr.bf16.mxu0 0
    %2905 = vmatpush1.bf16.msra.mxu0 0
    %2906 = vmatprep.subr.bf16.mxu0 0
    %2907 = vmatpush1.bf16.msra.mxu0 0
    %2908 = vmatprep.subr.bf16.mxu0 0
    %2909 = vmatpush1.bf16.msra.mxu0 0
    %2910 = vmatprep.subr.bf16.mxu0 0
    %2911 = vmatpush1.bf16.msra.mxu0 0
    %2912 = vmatprep.subr.bf16.mxu0 0
    %2913 = vmatpush1.bf16.msra.mxu0 0
    %2914 = vmatprep.subr.bf16.mxu0 0
    %2915 = vmatpush1.bf16.msra.mxu0 0
    %2916 = vmatprep.subr.bf16.mxu0 0
    %2917 = vmatpush1.bf16.msra.mxu0 0
    %2918 = vmatprep.subr.bf16.mxu0 0
    %2919 = vmatpush1.bf16.msra.mxu0 0
    %2920 = vmatprep.subr.bf16.mxu0 0
    %2921 = vmatpush1.bf16.msra.mxu0 0
    %2922 = vmatprep.subr.bf16.mxu0 0
    %2923 = vmatpush1.bf16.msra.mxu0 0
    %2924 = vmatprep.subr.bf16.mxu0 0
    %2925 = vmatpush1.bf16.msra.mxu0 0
    %2926 = vmatprep.subr.bf16.mxu0 0
    %2927 = vmatpush1.bf16.msra.mxu0 0
    %2928 = vmatprep.mubr.bf16.mxu0 0
    %2929 = vmatmul.mubr.bf16.gmra.mrb[0].mxu0 %v2894
    %v2930 = vpop.f32.mrb[0].mxu0
    %v2931 = vadd.f32 0.0, %v2930
    %v2932 = vpop.f32.mrb[0].mxu0
    %v2933 = vpop.f32.mrb[0].mxu0
    %v2934 = vpop.f32.mrb[0].mxu0
    %2935 = vdwg.mxu0
    %v2936 = vadd.f32 %v2857, %v2931
    %v2937 = vld [vmem:[#allocation4 + $0x4] sm:$0xf]
    %v2938 = vpack.c.bf16 %v2937, %v2937
    %s2939 = scalar_lea.vmem [#allocation7], 256
    %v2940 = vld [vmem:[%s2939] sm:$0xf]
    %v2941 = vld [vmem:[%s2939 + $0x4] sm:$0xf]
    %v2942 = vld [vmem:[%s2939 + $0x8] sm:$0xf]
    %v2943 = vld [vmem:[%s2939 + $0xc] sm:$0xf]
    %v2944 = vld [vmem:[%s2939 + $0x10] sm:$0xf]
    %v2945 = vld [vmem:[%s2939 + $0x14] sm:$0xf]
    %v2946 = vld [vmem:[%s2939 + $0x18] sm:$0xf]
    %v2947 = vld [vmem:[%s2939 + $0x1c] sm:$0xf]
    %v2956 = vunpack.c.l.b16 %v2940
    %v2957 = vunpack.c.l.b16 %v2941
    %v2958 = vunpack.c.l.b16 %v2942
    %v2959 = vunpack.c.l.b16 %v2943
    %v2960 = vunpack.c.l.b16 %v2944
    %v2961 = vunpack.c.l.b16 %v2945
    %v2962 = vunpack.c.l.b16 %v2946
    %v2963 = vunpack.c.l.b16 %v2947
    %v2964 = vpack.c.b16 %v2957, %v2956
    %v2965 = vpack.c.b16 %v2959, %v2958
    %v2966 = vpack.c.b16 %v2961, %v2960
    %v2967 = vpack.c.b16 %v2963, %v2962
    %v2973 = vsel %vm2295, %v2938, 0
    %2975 = vmatprep.subr.bf16.mxu0 0
    %2976 = vmatpush1.bf16.msra.mxu0 %v2964
    %2977 = vmatprep.subr.bf16.mxu0 0
    %2978 = vmatpush1.bf16.msra.mxu0 %v2965
    %2979 = vmatprep.subr.bf16.mxu0 0
    %2980 = vmatpush1.bf16.msra.mxu0 %v2966
    %2981 = vmatprep.subr.bf16.mxu0 0
    %2982 = vmatpush1.bf16.msra.mxu0 %v2967
    %2983 = vmatprep.subr.bf16.mxu0 0
    %2984 = vmatpush1.bf16.msra.mxu0 0
    %2985 = vmatprep.subr.bf16.mxu0 0
    %2986 = vmatpush1.bf16.msra.mxu0 0
    %2987 = vmatprep.subr.bf16.mxu0 0
    %2988 = vmatpush1.bf16.msra.mxu0 0
    %2989 = vmatprep.subr.bf16.mxu0 0
    %2990 = vmatpush1.bf16.msra.mxu0 0
    %2991 = vmatprep.subr.bf16.mxu0 0
    %2992 = vmatpush1.bf16.msra.mxu0 0
    %2993 = vmatprep.subr.bf16.mxu0 0
    %2994 = vmatpush1.bf16.msra.mxu0 0
    %2995 = vmatprep.subr.bf16.mxu0 0
    %2996 = vmatpush1.bf16.msra.mxu0 0
    %2997 = vmatprep.subr.bf16.mxu0 0
    %2998 = vmatpush1.bf16.msra.mxu0 0
    %2999 = vmatprep.subr.bf16.mxu0 0
    %3000 = vmatpush1.bf16.msra.mxu0 0
    %3001 = vmatprep.subr.bf16.mxu0 0
    %3002 = vmatpush1.bf16.msra.mxu0 0
    %3003 = vmatprep.subr.bf16.mxu0 0
    %3004 = vmatpush1.bf16.msra.mxu0 0
    %3005 = vmatprep.subr.bf16.mxu0 0
    %3006 = vmatpush1.bf16.msra.mxu0 0
    %3007 = vmatprep.mubr.bf16.mxu0 0
    %3008 = vmatmul.mubr.bf16.gmra.mrb[0].mxu0 %v2973
    %v3009 = vpop.f32.mrb[0].mxu0
    %v3010 = vadd.f32 0.0, %v3009
    %v3011 = vpop.f32.mrb[0].mxu0
    %v3012 = vpop.f32.mrb[0].mxu0
    %v3013 = vpop.f32.mrb[0].mxu0
    %3014 = vdwg.mxu0
    %v3015 = vadd.f32 %v2936, %v3010
    %v3016 = vld [vmem:[#allocation4 + $0x12] sm:$0xf]
    %v3017 = vpack.c.bf16 %v3016, %v3016
    %s3018 = scalar_lea.vmem [#allocation7], 288
    %v3019 = vld [vmem:[%s3018] sm:$0xf]
    %v3020 = vld [vmem:[%s3018 + $0x4] sm:$0xf]
    %v3021 = vld [vmem:[%s3018 + $0x8] sm:$0xf]
    %v3022 = vld [vmem:[%s3018 + $0xc] sm:$0xf]
    %v3023 = vld [vmem:[%s3018 + $0x10] sm:$0xf]
    %v3024 = vld [vmem:[%s3018 + $0x14] sm:$0xf]
    %v3025 = vld [vmem:[%s3018 + $0x18] sm:$0xf]
    %v3026 = vld [vmem:[%s3018 + $0x1c] sm:$0xf]
    %v3035 = vunpack.c.l.b16 %v3019
    %v3036 = vunpack.c.l.b16 %v3020
    %v3037 = vunpack.c.l.b16 %v3021
    %v3038 = vunpack.c.l.b16 %v3022
    %v3039 = vunpack.c.l.b16 %v3023
    %v3040 = vunpack.c.l.b16 %v3024
    %v3041 = vunpack.c.l.b16 %v3025
    %v3042 = vunpack.c.l.b16 %v3026
    %v3043 = vpack.c.b16 %v3036, %v3035
    %v3044 = vpack.c.b16 %v3038, %v3037
    %v3045 = vpack.c.b16 %v3040, %v3039
    %v3046 = vpack.c.b16 %v3042, %v3041
    %v3052 = vsel %vm2295, %v3017, 0
    %3054 = vmatprep.subr.bf16.mxu0 0
    %3055 = vmatpush1.bf16.msra.mxu0 %v3043
    %3056 = vmatprep.subr.bf16.mxu0 0
    %3057 = vmatpush1.bf16.msra.mxu0 %v3044
    %3058 = vmatprep.subr.bf16.mxu0 0
    %3059 = vmatpush1.bf16.msra.mxu0 %v3045
    %3060 = vmatprep.subr.bf16.mxu0 0
    %3061 = vmatpush1.bf16.msra.mxu0 %v3046
    %3062 = vmatprep.subr.bf16.mxu0 0
    %3063 = vmatpush1.bf16.msra.mxu0 0
    %3064 = vmatprep.subr.bf16.mxu0 0
    %3065 = vmatpush1.bf16.msra.mxu0 0
    %3066 = vmatprep.subr.bf16.mxu0 0
    %3067 = vmatpush1.bf16.msra.mxu0 0
    %3068 = vmatprep.subr.bf16.mxu0 0
    %3069 = vmatpush1.bf16.msra.mxu0 0
    %3070 = vmatprep.subr.bf16.mxu0 0
    %3071 = vmatpush1.bf16.msra.mxu0 0
    %3072 = vmatprep.subr.bf16.mxu0 0
    %3073 = vmatpush1.bf16.msra.mxu0 0
    %3074 = vmatprep.subr.bf16.mxu0 0
    %3075 = vmatpush1.bf16.msra.mxu0 0
    %3076 = vmatprep.subr.bf16.mxu0 0
    %3077 = vmatpush1.bf16.msra.mxu0 0
    %3078 = vmatprep.subr.bf16.mxu0 0
    %3079 = vmatpush1.bf16.msra.mxu0 0
    %3080 = vmatprep.subr.bf16.mxu0 0
    %3081 = vmatpush1.bf16.msra.mxu0 0
    %3082 = vmatprep.subr.bf16.mxu0 0
    %3083 = vmatpush1.bf16.msra.mxu0 0
    %3084 = vmatprep.subr.bf16.mxu0 0
    %3085 = vmatpush1.bf16.msra.mxu0 0
    %3086 = vmatprep.mubr.bf16.mxu0 0
    %3087 = vmatmul.mubr.bf16.gmra.mrb[0].mxu0 %v3052
    %v3088 = vpop.f32.mrb[0].mxu0
    %v3089 = vadd.f32 0.0, %v3088
    %v3090 = vpop.f32.mrb[0].mxu0
    %v3091 = vpop.f32.mrb[0].mxu0
    %v3092 = vpop.f32.mrb[0].mxu0
    %3093 = vdwg.mxu0
    %v3094 = vadd.f32 %v3015, %v3089
    %v3095 = vld [vmem:[#allocation4 + $0x5] sm:$0xf]
    %v3096 = vpack.c.bf16 %v3095, %v3095
    %s3097 = scalar_lea.vmem [#allocation7], 320
    %v3098 = vld [vmem:[%s3097] sm:$0xf]
    %v3099 = vld [vmem:[%s3097 + $0x4] sm:$0xf]
    %v3100 = vld [vmem:[%s3097 + $0x8] sm:$0xf]
    %v3101 = vld [vmem:[%s3097 + $0xc] sm:$0xf]
    %v3102 = vld [vmem:[%s3097 + $0x10] sm:$0xf]
    %v3103 = vld [vmem:[%s3097 + $0x14] sm:$0xf]
    %v3104 = vld [vmem:[%s3097 + $0x18] sm:$0xf]
    %v3105 = vld [vmem:[%s3097 + $0x1c] sm:$0xf]
    %v3114 = vunpack.c.l.b16 %v3098
    %v3115 = vunpack.c.l.b16 %v3099
    %v3116 = vunpack.c.l.b16 %v3100
    %v3117 = vunpack.c.l.b16 %v3101
    %v3118 = vunpack.c.l.b16 %v3102
    %v3119 = vunpack.c.l.b16 %v3103
    %v3120 = vunpack.c.l.b16 %v3104
    %v3121 = vunpack.c.l.b16 %v3105
    %v3122 = vpack.c.b16 %v3115, %v3114
    %v3123 = vpack.c.b16 %v3117, %v3116
    %v3124 = vpack.c.b16 %v3119, %v3118
    %v3125 = vpack.c.b16 %v3121, %v3120
    %v3131 = vsel %vm2295, %v3096, 0
    %3133 = vmatprep.subr.bf16.mxu0 0
    %3134 = vmatpush1.bf16.msra.mxu0 %v3122
    %3135 = vmatprep.subr.bf16.mxu0 0
    %3136 = vmatpush1.bf16.msra.mxu0 %v3123
    %3137 = vmatprep.subr.bf16.mxu0 0
    %3138 = vmatpush1.bf16.msra.mxu0 %v3124
    %3139 = vmatprep.subr.bf16.mxu0 0
    %3140 = vmatpush1.bf16.msra.mxu0 %v3125
    %3141 = vmatprep.subr.bf16.mxu0 0
    %3142 = vmatpush1.bf16.msra.mxu0 0
    %3143 = vmatprep.subr.bf16.mxu0 0
    %3144 = vmatpush1.bf16.msra.mxu0 0
    %3145 = vmatprep.subr.bf16.mxu0 0
    %3146 = vmatpush1.bf16.msra.mxu0 0
    %3147 = vmatprep.subr.bf16.mxu0 0
    %3148 = vmatpush1.bf16.msra.mxu0 0
    %3149 = vmatprep.subr.bf16.mxu0 0
    %3150 = vmatpush1.bf16.msra.mxu0 0
    %3151 = vmatprep.subr.bf16.mxu0 0
    %3152 = vmatpush1.bf16.msra.mxu0 0
    %3153 = vmatprep.subr.bf16.mxu0 0
    %3154 = vmatpush1.bf16.msra.mxu0 0
    %3155 = vmatprep.subr.bf16.mxu0 0
    %3156 = vmatpush1.bf16.msra.mxu0 0
    %3157 = vmatprep.subr.bf16.mxu0 0
    %3158 = vmatpush1.bf16.msra.mxu0 0
    %3159 = vmatprep.subr.bf16.mxu0 0
    %3160 = vmatpush1.bf16.msra.mxu0 0
    %3161 = vmatprep.subr.bf16.mxu0 0
    %3162 = vmatpush1.bf16.msra.mxu0 0
    %3163 = vmatprep.subr.bf16.mxu0 0
    %3164 = vmatpush1.bf16.msra.mxu0 0
    %3165 = vmatprep.mubr.bf16.mxu0 0
    %3166 = vmatmul.mubr.bf16.gmra.mrb[0].mxu0 %v3131
    %v3167 = vpop.f32.mrb[0].mxu0
    %v3168 = vadd.f32 0.0, %v3167
    %v3169 = vpop.f32.mrb[0].mxu0
    %v3170 = vpop.f32.mrb[0].mxu0
    %v3171 = vpop.f32.mrb[0].mxu0
    %3172 = vdwg.mxu0
    %v3173 = vadd.f32 %v3094, %v3168
    %v3174 = vld [vmem:[#allocation4 + $0x13] sm:$0xf]
    %v3175 = vpack.c.bf16 %v3174, %v3174
    %s3176 = scalar_lea.vmem [#allocation7], 352
    %v3177 = vld [vmem:[%s3176] sm:$0xf]
    %v3178 = vld [vmem:[%s3176 + $0x4] sm:$0xf]
    %v3179 = vld [vmem:[%s3176 + $0x8] sm:$0xf]
    %v3180 = vld [vmem:[%s3176 + $0xc] sm:$0xf]
    %v3181 = vld [vmem:[%s3176 + $0x10] sm:$0xf]
    %v3182 = vld [vmem:[%s3176 + $0x14] sm:$0xf]
    %v3183 = vld [vmem:[%s3176 + $0x18] sm:$0xf]
    %v3184 = vld [vmem:[%s3176 + $0x1c] sm:$0xf]
    %v3193 = vunpack.c.l.b16 %v3177
    %v3194 = vunpack.c.l.b16 %v3178
    %v3195 = vunpack.c.l.b16 %v3179
    %v3196 = vunpack.c.l.b16 %v3180
    %v3197 = vunpack.c.l.b16 %v3181
    %v3198 = vunpack.c.l.b16 %v3182
    %v3199 = vunpack.c.l.b16 %v3183
    %v3200 = vunpack.c.l.b16 %v3184
    %v3201 = vpack.c.b16 %v3194, %v3193
    %v3202 = vpack.c.b16 %v3196, %v3195
    %v3203 = vpack.c.b16 %v3198, %v3197
    %v3204 = vpack.c.b16 %v3200, %v3199
    %v3210 = vsel %vm2295, %v3175, 0
    %3212 = vmatprep.subr.bf16.mxu0 0
    %3213 = vmatpush1.bf16.msra.mxu0 %v3201
    %3214 = vmatprep.subr.bf16.mxu0 0
    %3215 = vmatpush1.bf16.msra.mxu0 %v3202
    %3216 = vmatprep.subr.bf16.mxu0 0
    %3217 = vmatpush1.bf16.msra.mxu0 %v3203
    %3218 = vmatprep.subr.bf16.mxu0 0
    %3219 = vmatpush1.bf16.msra.mxu0 %v3204
    %3220 = vmatprep.subr.bf16.mxu0 0
    %3221 = vmatpush1.bf16.msra.mxu0 0
    %3222 = vmatprep.subr.bf16.mxu0 0
    %3223 = vmatpush1.bf16.msra.mxu0 0
    %3224 = vmatprep.subr.bf16.mxu0 0
    %3225 = vmatpush1.bf16.msra.mxu0 0
    %3226 = vmatprep.subr.bf16.mxu0 0
    %3227 = vmatpush1.bf16.msra.mxu0 0
    %3228 = vmatprep.subr.bf16.mxu0 0
    %3229 = vmatpush1.bf16.msra.mxu0 0
    %3230 = vmatprep.subr.bf16.mxu0 0
    %3231 = vmatpush1.bf16.msra.mxu0 0
    %3232 = vmatprep.subr.bf16.mxu0 0
    %3233 = vmatpush1.bf16.msra.mxu0 0
    %3234 = vmatprep.subr.bf16.mxu0 0
    %3235 = vmatpush1.bf16.msra.mxu0 0
    %3236 = vmatprep.subr.bf16.mxu0 0
    %3237 = vmatpush1.bf16.msra.mxu0 0
    %3238 = vmatprep.subr.bf16.mxu0 0
    %3239 = vmatpush1.bf16.msra.mxu0 0
    %3240 = vmatprep.subr.bf16.mxu0 0
    %3241 = vmatpush1.bf16.msra.mxu0 0
    %3242 = vmatprep.subr.bf16.mxu0 0
    %3243 = vmatpush1.bf16.msra.mxu0 0
    %3244 = vmatprep.mubr.bf16.mxu0 0
    %3245 = vmatmul.mubr.bf16.gmra.mrb[0].mxu0 %v3210
    %v3246 = vpop.f32.mrb[0].mxu0
    %v3247 = vadd.f32 0.0, %v3246
    %v3248 = vpop.f32.mrb[0].mxu0
    %v3249 = vpop.f32.mrb[0].mxu0
    %v3250 = vpop.f32.mrb[0].mxu0
    %3251 = vdwg.mxu0
    %v3252 = vadd.f32 %v3173, %v3247
    %v3253 = vld [vmem:[#allocation4 + $0x6] sm:$0xf]
    %v3254 = vpack.c.bf16 %v3253, %v3253
    %s3255 = scalar_lea.vmem [#allocation7], 384
    %v3256 = vld [vmem:[%s3255] sm:$0xf]
    %v3257 = vld [vmem:[%s3255 + $0x4] sm:$0xf]
    %v3258 = vld [vmem:[%s3255 + $0x8] sm:$0xf]
    %v3259 = vld [vmem:[%s3255 + $0xc] sm:$0xf]
    %v3260 = vld [vmem:[%s3255 + $0x10] sm:$0xf]
    %v3261 = vld [vmem:[%s3255 + $0x14] sm:$0xf]
    %v3262 = vld [vmem:[%s3255 + $0x18] sm:$0xf]
    %v3263 = vld [vmem:[%s3255 + $0x1c] sm:$0xf]
    %v3272 = vunpack.c.l.b16 %v3256
    %v3273 = vunpack.c.l.b16 %v3257
    %v3274 = vunpack.c.l.b16 %v3258
    %v3275 = vunpack.c.l.b16 %v3259
    %v3276 = vunpack.c.l.b16 %v3260
    %v3277 = vunpack.c.l.b16 %v3261
    %v3278 = vunpack.c.l.b16 %v3262
    %v3279 = vunpack.c.l.b16 %v3263
    %v3280 = vpack.c.b16 %v3273, %v3272
    %v3281 = vpack.c.b16 %v3275, %v3274
    %v3282 = vpack.c.b16 %v3277, %v3276
    %v3283 = vpack.c.b16 %v3279, %v3278
    %v3289 = vsel %vm2295, %v3254, 0
    %3291 = vmatprep.subr.bf16.mxu0 0
    %3292 = vmatpush1.bf16.msra.mxu0 %v3280
    %3293 = vmatprep.subr.bf16.mxu0 0
    %3294 = vmatpush1.bf16.msra.mxu0 %v3281
    %3295 = vmatprep.subr.bf16.mxu0 0
    %3296 = vmatpush1.bf16.msra.mxu0 %v3282
    %3297 = vmatprep.subr.bf16.mxu0 0
    %3298 = vmatpush1.bf16.msra.mxu0 %v3283
    %3299 = vmatprep.subr.bf16.mxu0 0
    %3300 = vmatpush1.bf16.msra.mxu0 0
    %3301 = vmatprep.subr.bf16.mxu0 0
    %3302 = vmatpush1.bf16.msra.mxu0 0
    %3303 = vmatprep.subr.bf16.mxu0 0
    %3304 = vmatpush1.bf16.msra.mxu0 0
    %3305 = vmatprep.subr.bf16.mxu0 0
    %3306 = vmatpush1.bf16.msra.mxu0 0
    %3307 = vmatprep.subr.bf16.mxu0 0
    %3308 = vmatpush1.bf16.msra.mxu0 0
    %3309 = vmatprep.subr.bf16.mxu0 0
    %3310 = vmatpush1.bf16.msra.mxu0 0
    %3311 = vmatprep.subr.bf16.mxu0 0
    %3312 = vmatpush1.bf16.msra.mxu0 0
    %3313 = vmatprep.subr.bf16.mxu0 0
    %3314 = vmatpush1.bf16.msra.mxu0 0
    %3315 = vmatprep.subr.bf16.mxu0 0
    %3316 = vmatpush1.bf16.msra.mxu0 0
    %3317 = vmatprep.subr.bf16.mxu0 0
    %3318 = vmatpush1.bf16.msra.mxu0 0
    %3319 = vmatprep.subr.bf16.mxu0 0
    %3320 = vmatpush1.bf16.msra.mxu0 0
    %3321 = vmatprep.subr.bf16.mxu0 0
    %3322 = vmatpush1.bf16.msra.mxu0 0
    %3323 = vmatprep.mubr.bf16.mxu0 0
    %3324 = vmatmul.mubr.bf16.gmra.mrb[0].mxu0 %v3289
    %v3325 = vpop.f32.mrb[0].mxu0
    %v3326 = vadd.f32 0.0, %v3325
    %v3327 = vpop.f32.mrb[0].mxu0
    %v3328 = vpop.f32.mrb[0].mxu0
    %v3329 = vpop.f32.mrb[0].mxu0
    %3330 = vdwg.mxu0
    %v3331 = vadd.f32 %v3252, %v3326
    %v3332 = vld [vmem:[#allocation4 + $0x14] sm:$0xf]
    %v3333 = vpack.c.bf16 %v3332, %v3332
    %s3334 = scalar_lea.vmem [#allocation7], 416
    %v3335 = vld [vmem:[%s3334] sm:$0xf]
    %v3336 = vld [vmem:[%s3334 + $0x4] sm:$0xf]
    %v3337 = vld [vmem:[%s3334 + $0x8] sm:$0xf]
    %v3338 = vld [vmem:[%s3334 + $0xc] sm:$0xf]
    %v3339 = vld [vmem:[%s3334 + $0x10] sm:$0xf]
    %v3340 = vld [vmem:[%s3334 + $0x14] sm:$0xf]
    %v3341 = vld [vmem:[%s3334 + $0x18] sm:$0xf]
    %v3342 = vld [vmem:[%s3334 + $0x1c] sm:$0xf]
    %v3351 = vunpack.c.l.b16 %v3335
    %v3352 = vunpack.c.l.b16 %v3336
    %v3353 = vunpack.c.l.b16 %v3337
    %v3354 = vunpack.c.l.b16 %v3338
    %v3355 = vunpack.c.l.b16 %v3339
    %v3356 = vunpack.c.l.b16 %v3340
    %v3357 = vunpack.c.l.b16 %v3341
    %v3358 = vunpack.c.l.b16 %v3342
    %v3359 = vpack.c.b16 %v3352, %v3351
    %v3360 = vpack.c.b16 %v3354, %v3353
    %v3361 = vpack.c.b16 %v3356, %v3355
    %v3362 = vpack.c.b16 %v3358, %v3357
    %v3368 = vsel %vm2295, %v3333, 0
    %3370 = vmatprep.subr.bf16.mxu0 0
    %3371 = vmatpush1.bf16.msra.mxu0 %v3359
    %3372 = vmatprep.subr.bf16.mxu0 0
    %3373 = vmatpush1.bf16.msra.mxu0 %v3360
    %3374 = vmatprep.subr.bf16.mxu0 0
    %3375 = vmatpush1.bf16.msra.mxu0 %v3361
    %3376 = vmatprep.subr.bf16.mxu0 0
    %3377 = vmatpush1.bf16.msra.mxu0 %v3362
    %3378 = vmatprep.subr.bf16.mxu0 0
    %3379 = vmatpush1.bf16.msra.mxu0 0
    %3380 = vmatprep.subr.bf16.mxu0 0
    %3381 = vmatpush1.bf16.msra.mxu0 0
    %3382 = vmatprep.subr.bf16.mxu0 0
    %3383 = vmatpush1.bf16.msra.mxu0 0
    %3384 = vmatprep.subr.bf16.mxu0 0
    %3385 = vmatpush1.bf16.msra.mxu0 0
    %3386 = vmatprep.subr.bf16.mxu0 0
    %3387 = vmatpush1.bf16.msra.mxu0 0
    %3388 = vmatprep.subr.bf16.mxu0 0
    %3389 = vmatpush1.bf16.msra.mxu0 0
    %3390 = vmatprep.subr.bf16.mxu0 0
    %3391 = vmatpush1.bf16.msra.mxu0 0
    %3392 = vmatprep.subr.bf16.mxu0 0
    %3393 = vmatpush1.bf16.msra.mxu0 0
    %3394 = vmatprep.subr.bf16.mxu0 0
    %3395 = vmatpush1.bf16.msra.mxu0 0
    %3396 = vmatprep.subr.bf16.mxu0 0
    %3397 = vmatpush1.bf16.msra.mxu0 0
    %3398 = vmatprep.subr.bf16.mxu0 0
    %3399 = vmatpush1.bf16.msra.mxu0 0
    %3400 = vmatprep.subr.bf16.mxu0 0
    %3401 = vmatpush1.bf16.msra.mxu0 0
    %3402 = vmatprep.mubr.bf16.mxu0 0
    %3403 = vmatmul.mubr.bf16.gmra.mrb[0].mxu0 %v3368
    %v3404 = vpop.f32.mrb[0].mxu0
    %v3405 = vadd.f32 0.0, %v3404
    %v3406 = vpop.f32.mrb[0].mxu0
    %v3407 = vpop.f32.mrb[0].mxu0
    %v3408 = vpop.f32.mrb[0].mxu0
    %3409 = vdwg.mxu0
    %v3410 = vadd.f32 %v3331, %v3405
    %v3411 = vld [vmem:[#allocation4 + $0x7] sm:$0xf]
    %v3412 = vpack.c.bf16 %v3411, %v3411
    %s3413 = scalar_lea.vmem [#allocation7], 448
    %v3414 = vld [vmem:[%s3413] sm:$0xf]
    %v3415 = vld [vmem:[%s3413 + $0x4] sm:$0xf]
    %v3416 = vld [vmem:[%s3413 + $0x8] sm:$0xf]
    %v3417 = vld [vmem:[%s3413 + $0xc] sm:$0xf]
    %v3418 = vld [vmem:[%s3413 + $0x10] sm:$0xf]
    %v3419 = vld [vmem:[%s3413 + $0x14] sm:$0xf]
    %v3420 = vld [vmem:[%s3413 + $0x18] sm:$0xf]
    %v3421 = vld [vmem:[%s3413 + $0x1c] sm:$0xf]
    %v3430 = vunpack.c.l.b16 %v3414
    %v3431 = vunpack.c.l.b16 %v3415
    %v3432 = vunpack.c.l.b16 %v3416
    %v3433 = vunpack.c.l.b16 %v3417
    %v3434 = vunpack.c.l.b16 %v3418
    %v3435 = vunpack.c.l.b16 %v3419
    %v3436 = vunpack.c.l.b16 %v3420
    %v3437 = vunpack.c.l.b16 %v3421
    %v3438 = vpack.c.b16 %v3431, %v3430
    %v3439 = vpack.c.b16 %v3433, %v3432
    %v3440 = vpack.c.b16 %v3435, %v3434
    %v3441 = vpack.c.b16 %v3437, %v3436
    %v3447 = vsel %vm2295, %v3412, 0
    %3449 = vmatprep.subr.bf16.mxu0 0
    %3450 = vmatpush1.bf16.msra.mxu0 %v3438
    %3451 = vmatprep.subr.bf16.mxu0 0
    %3452 = vmatpush1.bf16.msra.mxu0 %v3439
    %3453 = vmatprep.subr.bf16.mxu0 0
    %3454 = vmatpush1.bf16.msra.mxu0 %v3440
    %3455 = vmatprep.subr.bf16.mxu0 0
    %3456 = vmatpush1.bf16.msra.mxu0 %v3441
    %3457 = vmatprep.subr.bf16.mxu0 0
    %3458 = vmatpush1.bf16.msra.mxu0 0
    %3459 = vmatprep.subr.bf16.mxu0 0
    %3460 = vmatpush1.bf16.msra.mxu0 0
    %3461 = vmatprep.subr.bf16.mxu0 0
    %3462 = vmatpush1.bf16.msra.mxu0 0
    %3463 = vmatprep.subr.bf16.mxu0 0
    %3464 = vmatpush1.bf16.msra.mxu0 0
    %3465 = vmatprep.subr.bf16.mxu0 0
    %3466 = vmatpush1.bf16.msra.mxu0 0
    %3467 = vmatprep.subr.bf16.mxu0 0
    %3468 = vmatpush1.bf16.msra.mxu0 0
    %3469 = vmatprep.subr.bf16.mxu0 0
    %3470 = vmatpush1.bf16.msra.mxu0 0
    %3471 = vmatprep.subr.bf16.mxu0 0
    %3472 = vmatpush1.bf16.msra.mxu0 0
    %3473 = vmatprep.subr.bf16.mxu0 0
    %3474 = vmatpush1.bf16.msra.mxu0 0
    %3475 = vmatprep.subr.bf16.mxu0 0
    %3476 = vmatpush1.bf16.msra.mxu0 0
    %3477 = vmatprep.subr.bf16.mxu0 0
    %3478 = vmatpush1.bf16.msra.mxu0 0
    %3479 = vmatprep.subr.bf16.mxu0 0
    %3480 = vmatpush1.bf16.msra.mxu0 0
    %3481 = vmatprep.mubr.bf16.mxu0 0
    %3482 = vmatmul.mubr.bf16.gmra.mrb[0].mxu0 %v3447
    %v3483 = vpop.f32.mrb[0].mxu0
    %v3484 = vadd.f32 0.0, %v3483
    %v3485 = vpop.f32.mrb[0].mxu0
    %v3486 = vpop.f32.mrb[0].mxu0
    %v3487 = vpop.f32.mrb[0].mxu0
    %3488 = vdwg.mxu0
    %v3489 = vadd.f32 %v3410, %v3484
    %v3490 = vld [vmem:[#allocation4 + $0x15] sm:$0xf]
    %v3491 = vpack.c.bf16 %v3490, %v3490
    %s3492 = scalar_lea.vmem [#allocation7], 480
    %v3493 = vld [vmem:[%s3492] sm:$0xf]
    %v3494 = vld [vmem:[%s3492 + $0x4] sm:$0xf]
    %v3495 = vld [vmem:[%s3492 + $0x8] sm:$0xf]
    %v3496 = vld [vmem:[%s3492 + $0xc] sm:$0xf]
    %v3497 = vld [vmem:[%s3492 + $0x10] sm:$0xf]
    %v3498 = vld [vmem:[%s3492 + $0x14] sm:$0xf]
    %v3499 = vld [vmem:[%s3492 + $0x18] sm:$0xf]
    %v3500 = vld [vmem:[%s3492 + $0x1c] sm:$0xf]
    %v3509 = vunpack.c.l.b16 %v3493
    %v3510 = vunpack.c.l.b16 %v3494
    %v3511 = vunpack.c.l.b16 %v3495
    %v3512 = vunpack.c.l.b16 %v3496
    %v3513 = vunpack.c.l.b16 %v3497
    %v3514 = vunpack.c.l.b16 %v3498
    %v3515 = vunpack.c.l.b16 %v3499
    %v3516 = vunpack.c.l.b16 %v3500
    %v3517 = vpack.c.b16 %v3510, %v3509
    %v3518 = vpack.c.b16 %v3512, %v3511
    %v3519 = vpack.c.b16 %v3514, %v3513
    %v3520 = vpack.c.b16 %v3516, %v3515
    %v3526 = vsel %vm2295, %v3491, 0
    %3528 = vmatprep.subr.bf16.mxu0 0
    %3529 = vmatpush1.bf16.msra.mxu0 %v3517
    %3530 = vmatprep.subr.bf16.mxu0 0
    %3531 = vmatpush1.bf16.msra.mxu0 %v3518
    %3532 = vmatprep.subr.bf16.mxu0 0
    %3533 = vmatpush1.bf16.msra.mxu0 %v3519
    %3534 = vmatprep.subr.bf16.mxu0 0
    %3535 = vmatpush1.bf16.msra.mxu0 %v3520
    %3536 = vmatprep.subr.bf16.mxu0 0
    %3537 = vmatpush1.bf16.msra.mxu0 0
    %3538 = vmatprep.subr.bf16.mxu0 0
    %3539 = vmatpush1.bf16.msra.mxu0 0
    %3540 = vmatprep.subr.bf16.mxu0 0
    %3541 = vmatpush1.bf16.msra.mxu0 0
    %3542 = vmatprep.subr.bf16.mxu0 0
    %3543 = vmatpush1.bf16.msra.mxu0 0
    %3544 = vmatprep.subr.bf16.mxu0 0
    %3545 = vmatpush1.bf16.msra.mxu0 0
    %3546 = vmatprep.subr.bf16.mxu0 0
    %3547 = vmatpush1.bf16.msra.mxu0 0
    %3548 = vmatprep.subr.bf16.mxu0 0
    %3549 = vmatpush1.bf16.msra.mxu0 0
    %3550 = vmatprep.subr.bf16.mxu0 0
    %3551 = vmatpush1.bf16.msra.mxu0 0
    %3552 = vmatprep.subr.bf16.mxu0 0
    %3553 = vmatpush1.bf16.msra.mxu0 0
    %3554 = vmatprep.subr.bf16.mxu0 0
    %3555 = vmatpush1.bf16.msra.mxu0 0
    %3556 = vmatprep.subr.bf16.mxu0 0
    %3557 = vmatpush1.bf16.msra.mxu0 0
    %3558 = vmatprep.subr.bf16.mxu0 0
    %3559 = vmatpush1.bf16.msra.mxu0 0
    %3560 = vmatprep.mubr.bf16.mxu0 0
    %3561 = vmatmul.mubr.bf16.gmra.mrb[0].mxu0 %v3526
    %v3562 = vpop.f32.mrb[0].mxu0
    %v3563 = vadd.f32 0.0, %v3562
    %v3564 = vpop.f32.mrb[0].mxu0
    %v3565 = vpop.f32.mrb[0].mxu0
    %v3566 = vpop.f32.mrb[0].mxu0
    %3567 = vdwg.mxu0
    %v3568 = vadd.f32 %v3489, %v3563
    %v3569 = vld [vmem:[#allocation4 + $0x8] sm:$0xf]
    %v3570 = vpack.c.bf16 %v3569, %v3569
    %s3571 = scalar_lea.vmem [#allocation7], 512
    %v3572 = vld [vmem:[%s3571] sm:$0xf]
    %v3573 = vld [vmem:[%s3571 + $0x4] sm:$0xf]
    %v3574 = vld [vmem:[%s3571 + $0x8] sm:$0xf]
    %v3575 = vld [vmem:[%s3571 + $0xc] sm:$0xf]
    %v3576 = vld [vmem:[%s3571 + $0x10] sm:$0xf]
    %v3577 = vld [vmem:[%s3571 + $0x14] sm:$0xf]
    %v3578 = vld [vmem:[%s3571 + $0x18] sm:$0xf]
    %v3579 = vld [vmem:[%s3571 + $0x1c] sm:$0xf]
    %v3588 = vunpack.c.l.b16 %v3572
    %v3589 = vunpack.c.l.b16 %v3573
    %v3590 = vunpack.c.l.b16 %v3574
    %v3591 = vunpack.c.l.b16 %v3575
    %v3592 = vunpack.c.l.b16 %v3576
    %v3593 = vunpack.c.l.b16 %v3577
    %v3594 = vunpack.c.l.b16 %v3578
    %v3595 = vunpack.c.l.b16 %v3579
    %v3596 = vpack.c.b16 %v3589, %v3588
    %v3597 = vpack.c.b16 %v3591, %v3590
    %v3598 = vpack.c.b16 %v3593, %v3592
    %v3599 = vpack.c.b16 %v3595, %v3594
    %v3605 = vsel %vm2295, %v3570, 0
    %3607 = vmatprep.subr.bf16.mxu0 0
    %3608 = vmatpush1.bf16.msra.mxu0 %v3596
    %3609 = vmatprep.subr.bf16.mxu0 0
    %3610 = vmatpush1.bf16.msra.mxu0 %v3597
    %3611 = vmatprep.subr.bf16.mxu0 0
    %3612 = vmatpush1.bf16.msra.mxu0 %v3598
    %3613 = vmatprep.subr.bf16.mxu0 0
    %3614 = vmatpush1.bf16.msra.mxu0 %v3599
    %3615 = vmatprep.subr.bf16.mxu0 0
    %3616 = vmatpush1.bf16.msra.mxu0 0
    %3617 = vmatprep.subr.bf16.mxu0 0
    %3618 = vmatpush1.bf16.msra.mxu0 0
    %3619 = vmatprep.subr.bf16.mxu0 0
    %3620 = vmatpush1.bf16.msra.mxu0 0
    %3621 = vmatprep.subr.bf16.mxu0 0
    %3622 = vmatpush1.bf16.msra.mxu0 0
    %3623 = vmatprep.subr.bf16.mxu0 0
    %3624 = vmatpush1.bf16.msra.mxu0 0
    %3625 = vmatprep.subr.bf16.mxu0 0
    %3626 = vmatpush1.bf16.msra.mxu0 0
    %3627 = vmatprep.subr.bf16.mxu0 0
    %3628 = vmatpush1.bf16.msra.mxu0 0
    %3629 = vmatprep.subr.bf16.mxu0 0
    %3630 = vmatpush1.bf16.msra.mxu0 0
    %3631 = vmatprep.subr.bf16.mxu0 0
    %3632 = vmatpush1.bf16.msra.mxu0 0
    %3633 = vmatprep.subr.bf16.mxu0 0
    %3634 = vmatpush1.bf16.msra.mxu0 0
    %3635 = vmatprep.subr.bf16.mxu0 0
    %3636 = vmatpush1.bf16.msra.mxu0 0
    %3637 = vmatprep.subr.bf16.mxu0 0
    %3638 = vmatpush1.bf16.msra.mxu0 0
    %3639 = vmatprep.mubr.bf16.mxu0 0
    %3640 = vmatmul.mubr.bf16.gmra.mrb[0].mxu0 %v3605
    %v3641 = vpop.f32.mrb[0].mxu0
    %v3642 = vadd.f32 0.0, %v3641
    %v3643 = vpop.f32.mrb[0].mxu0
    %v3644 = vpop.f32.mrb[0].mxu0
    %v3645 = vpop.f32.mrb[0].mxu0
    %3646 = vdwg.mxu0
    %v3647 = vadd.f32 %v3568, %v3642
    %v3648 = vld [vmem:[#allocation4 + $0x16] sm:$0xf]
    %v3649 = vpack.c.bf16 %v3648, %v3648
    %s3650 = scalar_lea.vmem [#allocation7], 544
    %v3651 = vld [vmem:[%s3650] sm:$0xf]
    %v3652 = vld [vmem:[%s3650 + $0x4] sm:$0xf]
    %v3653 = vld [vmem:[%s3650 + $0x8] sm:$0xf]
    %v3654 = vld [vmem:[%s3650 + $0xc] sm:$0xf]
    %v3655 = vld [vmem:[%s3650 + $0x10] sm:$0xf]
    %v3656 = vld [vmem:[%s3650 + $0x14] sm:$0xf]
    %v3657 = vld [vmem:[%s3650 + $0x18] sm:$0xf]
    %v3658 = vld [vmem:[%s3650 + $0x1c] sm:$0xf]
    %v3667 = vunpack.c.l.b16 %v3651
    %v3668 = vunpack.c.l.b16 %v3652
    %v3669 = vunpack.c.l.b16 %v3653
    %v3670 = vunpack.c.l.b16 %v3654
    %v3671 = vunpack.c.l.b16 %v3655
    %v3672 = vunpack.c.l.b16 %v3656
    %v3673 = vunpack.c.l.b16 %v3657
    %v3674 = vunpack.c.l.b16 %v3658
    %v3675 = vpack.c.b16 %v3668, %v3667
    %v3676 = vpack.c.b16 %v3670, %v3669
    %v3677 = vpack.c.b16 %v3672, %v3671
    %v3678 = vpack.c.b16 %v3674, %v3673
    %v3684 = vsel %vm2295, %v3649, 0
    %3686 = vmatprep.subr.bf16.mxu0 0
    %3687 = vmatpush1.bf16.msra.mxu0 %v3675
    %3688 = vmatprep.subr.bf16.mxu0 0
    %3689 = vmatpush1.bf16.msra.mxu0 %v3676
    %3690 = vmatprep.subr.bf16.mxu0 0
    %3691 = vmatpush1.bf16.msra.mxu0 %v3677
    %3692 = vmatprep.subr.bf16.mxu0 0
    %3693 = vmatpush1.bf16.msra.mxu0 %v3678
    %3694 = vmatprep.subr.bf16.mxu0 0
    %3695 = vmatpush1.bf16.msra.mxu0 0
    %3696 = vmatprep.subr.bf16.mxu0 0
    %3697 = vmatpush1.bf16.msra.mxu0 0
    %3698 = vmatprep.subr.bf16.mxu0 0
    %3699 = vmatpush1.bf16.msra.mxu0 0
    %3700 = vmatprep.subr.bf16.mxu0 0
    %3701 = vmatpush1.bf16.msra.mxu0 0
    %3702 = vmatprep.subr.bf16.mxu0 0
    %3703 = vmatpush1.bf16.msra.mxu0 0
    %3704 = vmatprep.subr.bf16.mxu0 0
    %3705 = vmatpush1.bf16.msra.mxu0 0
    %3706 = vmatprep.subr.bf16.mxu0 0
    %3707 = vmatpush1.bf16.msra.mxu0 0
    %3708 = vmatprep.subr.bf16.mxu0 0
    %3709 = vmatpush1.bf16.msra.mxu0 0
    %3710 = vmatprep.subr.bf16.mxu0 0
    %3711 = vmatpush1.bf16.msra.mxu0 0
    %3712 = vmatprep.subr.bf16.mxu0 0
    %3713 = vmatpush1.bf16.msra.mxu0 0
    %3714 = vmatprep.subr.bf16.mxu0 0
    %3715 = vmatpush1.bf16.msra.mxu0 0
    %3716 = vmatprep.subr.bf16.mxu0 0
    %3717 = vmatpush1.bf16.msra.mxu0 0
    %3718 = vmatprep.mubr.bf16.mxu0 0
    %3719 = vmatmul.mubr.bf16.gmra.mrb[0].mxu0 %v3684
    %v3720 = vpop.f32.mrb[0].mxu0
    %v3721 = vadd.f32 0.0, %v3720
    %v3722 = vpop.f32.mrb[0].mxu0
    %v3723 = vpop.f32.mrb[0].mxu0
    %v3724 = vpop.f32.mrb[0].mxu0
    %3725 = vdwg.mxu0
    %v3726 = vadd.f32 %v3647, %v3721
    %v3727 = vld [vmem:[#allocation4 + $0x9] sm:$0xf]
    %v3728 = vpack.c.bf16 %v3727, %v3727
    %s3729 = scalar_lea.vmem [#allocation7], 576
    %v3730 = vld [vmem:[%s3729] sm:$0xf]
    %v3731 = vld [vmem:[%s3729 + $0x4] sm:$0xf]
    %v3732 = vld [vmem:[%s3729 + $0x8] sm:$0xf]
    %v3733 = vld [vmem:[%s3729 + $0xc] sm:$0xf]
    %v3734 = vld [vmem:[%s3729 + $0x10] sm:$0xf]
    %v3735 = vld [vmem:[%s3729 + $0x14] sm:$0xf]
    %v3736 = vld [vmem:[%s3729 + $0x18] sm:$0xf]
    %v3737 = vld [vmem:[%s3729 + $0x1c] sm:$0xf]
    %v3746 = vunpack.c.l.b16 %v3730
    %v3747 = vunpack.c.l.b16 %v3731
    %v3748 = vunpack.c.l.b16 %v3732
    %v3749 = vunpack.c.l.b16 %v3733
    %v3750 = vunpack.c.l.b16 %v3734
    %v3751 = vunpack.c.l.b16 %v3735
    %v3752 = vunpack.c.l.b16 %v3736
    %v3753 = vunpack.c.l.b16 %v3737
    %v3754 = vpack.c.b16 %v3747, %v3746
    %v3755 = vpack.c.b16 %v3749, %v3748
    %v3756 = vpack.c.b16 %v3751, %v3750
    %v3757 = vpack.c.b16 %v3753, %v3752
    %v3763 = vsel %vm2295, %v3728, 0
    %3765 = vmatprep.subr.bf16.mxu0 0
    %3766 = vmatpush1.bf16.msra.mxu0 %v3754
    %3767 = vmatprep.subr.bf16.mxu0 0
    %3768 = vmatpush1.bf16.msra.mxu0 %v3755
    %3769 = vmatprep.subr.bf16.mxu0 0
    %3770 = vmatpush1.bf16.msra.mxu0 %v3756
    %3771 = vmatprep.subr.bf16.mxu0 0
    %3772 = vmatpush1.bf16.msra.mxu0 %v3757
    %3773 = vmatprep.subr.bf16.mxu0 0
    %3774 = vmatpush1.bf16.msra.mxu0 0
    %3775 = vmatprep.subr.bf16.mxu0 0
    %3776 = vmatpush1.bf16.msra.mxu0 0
    %3777 = vmatprep.subr.bf16.mxu0 0
    %3778 = vmatpush1.bf16.msra.mxu0 0
    %3779 = vmatprep.subr.bf16.mxu0 0
    %3780 = vmatpush1.bf16.msra.mxu0 0
    %3781 = vmatprep.subr.bf16.mxu0 0
    %3782 = vmatpush1.bf16.msra.mxu0 0
    %3783 = vmatprep.subr.bf16.mxu0 0
    %3784 = vmatpush1.bf16.msra.mxu0 0
    %3785 = vmatprep.subr.bf16.mxu0 0
    %3786 = vmatpush1.bf16.msra.mxu0 0
    %3787 = vmatprep.subr.bf16.mxu0 0
    %3788 = vmatpush1.bf16.msra.mxu0 0
    %3789 = vmatprep.subr.bf16.mxu0 0
    %3790 = vmatpush1.bf16.msra.mxu0 0
    %3791 = vmatprep.subr.bf16.mxu0 0
    %3792 = vmatpush1.bf16.msra.mxu0 0
    %3793 = vmatprep.subr.bf16.mxu0 0
    %3794 = vmatpush1.bf16.msra.mxu0 0
    %3795 = vmatprep.subr.bf16.mxu0 0
    %3796 = vmatpush1.bf16.msra.mxu0 0
    %3797 = vmatprep.mubr.bf16.mxu0 0
    %3798 = vmatmul.mubr.bf16.gmra.mrb[0].mxu0 %v3763
    %v3799 = vpop.f32.mrb[0].mxu0
    %v3800 = vadd.f32 0.0, %v3799
    %v3801 = vpop.f32.mrb[0].mxu0
    %v3802 = vpop.f32.mrb[0].mxu0
    %v3803 = vpop.f32.mrb[0].mxu0
    %3804 = vdwg.mxu0
    %v3805 = vadd.f32 %v3726, %v3800
    %v3806 = vld [vmem:[#allocation4 + $0x17] sm:$0xf]
    %v3807 = vpack.c.bf16 %v3806, %v3806
    %s3808 = scalar_lea.vmem [#allocation7], 608
    %v3809 = vld [vmem:[%s3808] sm:$0xf]
    %v3810 = vld [vmem:[%s3808 + $0x4] sm:$0xf]
    %v3811 = vld [vmem:[%s3808 + $0x8] sm:$0xf]
    %v3812 = vld [vmem:[%s3808 + $0xc] sm:$0xf]
    %v3813 = vld [vmem:[%s3808 + $0x10] sm:$0xf]
    %v3814 = vld [vmem:[%s3808 + $0x14] sm:$0xf]
    %v3815 = vld [vmem:[%s3808 + $0x18] sm:$0xf]
    %v3816 = vld [vmem:[%s3808 + $0x1c] sm:$0xf]
    %v3825 = vunpack.c.l.b16 %v3809
    %v3826 = vunpack.c.l.b16 %v3810
    %v3827 = vunpack.c.l.b16 %v3811
    %v3828 = vunpack.c.l.b16 %v3812
    %v3829 = vunpack.c.l.b16 %v3813
    %v3830 = vunpack.c.l.b16 %v3814
    %v3831 = vunpack.c.l.b16 %v3815
    %v3832 = vunpack.c.l.b16 %v3816
    %v3833 = vpack.c.b16 %v3826, %v3825
    %v3834 = vpack.c.b16 %v3828, %v3827
    %v3835 = vpack.c.b16 %v3830, %v3829
    %v3836 = vpack.c.b16 %v3832, %v3831
    %v3842 = vsel %vm2295, %v3807, 0
    %3844 = vmatprep.subr.bf16.mxu0 0
    %3845 = vmatpush1.bf16.msra.mxu0 %v3833
    %3846 = vmatprep.subr.bf16.mxu0 0
    %3847 = vmatpush1.bf16.msra.mxu0 %v3834
    %3848 = vmatprep.subr.bf16.mxu0 0
    %3849 = vmatpush1.bf16.msra.mxu0 %v3835
    %3850 = vmatprep.subr.bf16.mxu0 0
    %3851 = vmatpush1.bf16.msra.mxu0 %v3836
    %3852 = vmatprep.subr.bf16.mxu0 0
    %3853 = vmatpush1.bf16.msra.mxu0 0
    %3854 = vmatprep.subr.bf16.mxu0 0
    %3855 = vmatpush1.bf16.msra.mxu0 0
    %3856 = vmatprep.subr.bf16.mxu0 0
    %3857 = vmatpush1.bf16.msra.mxu0 0
    %3858 = vmatprep.subr.bf16.mxu0 0
    %3859 = vmatpush1.bf16.msra.mxu0 0
    %3860 = vmatprep.subr.bf16.mxu0 0
    %3861 = vmatpush1.bf16.msra.mxu0 0
    %3862 = vmatprep.subr.bf16.mxu0 0
    %3863 = vmatpush1.bf16.msra.mxu0 0
    %3864 = vmatprep.subr.bf16.mxu0 0
    %3865 = vmatpush1.bf16.msra.mxu0 0
    %3866 = vmatprep.subr.bf16.mxu0 0
    %3867 = vmatpush1.bf16.msra.mxu0 0
    %3868 = vmatprep.subr.bf16.mxu0 0
    %3869 = vmatpush1.bf16.msra.mxu0 0
    %3870 = vmatprep.subr.bf16.mxu0 0
    %3871 = vmatpush1.bf16.msra.mxu0 0
    %3872 = vmatprep.subr.bf16.mxu0 0
    %3873 = vmatpush1.bf16.msra.mxu0 0
    %3874 = vmatprep.subr.bf16.mxu0 0
    %3875 = vmatpush1.bf16.msra.mxu0 0
    %3876 = vmatprep.mubr.bf16.mxu0 0
    %3877 = vmatmul.mubr.bf16.gmra.mrb[0].mxu0 %v3842
    %v3878 = vpop.f32.mrb[0].mxu0
    %v3879 = vadd.f32 0.0, %v3878
    %v3880 = vpop.f32.mrb[0].mxu0
    %v3881 = vpop.f32.mrb[0].mxu0
    %v3882 = vpop.f32.mrb[0].mxu0
    %3883 = vdwg.mxu0
    %v3884 = vadd.f32 %v3805, %v3879
    %v3885 = vld [vmem:[#allocation4 + $0xa] sm:$0xf]
    %v3886 = vpack.c.bf16 %v3885, %v3885
    %s3887 = scalar_lea.vmem [#allocation7], 640
    %v3888 = vld [vmem:[%s3887] sm:$0xf]
    %v3889 = vld [vmem:[%s3887 + $0x4] sm:$0xf]
    %v3890 = vld [vmem:[%s3887 + $0x8] sm:$0xf]
    %v3891 = vld [vmem:[%s3887 + $0xc] sm:$0xf]
    %v3892 = vld [vmem:[%s3887 + $0x10] sm:$0xf]
    %v3893 = vld [vmem:[%s3887 + $0x14] sm:$0xf]
    %v3894 = vld [vmem:[%s3887 + $0x18] sm:$0xf]
    %v3895 = vld [vmem:[%s3887 + $0x1c] sm:$0xf]
    %v3904 = vunpack.c.l.b16 %v3888
    %v3905 = vunpack.c.l.b16 %v3889
    %v3906 = vunpack.c.l.b16 %v3890
    %v3907 = vunpack.c.l.b16 %v3891
    %v3908 = vunpack.c.l.b16 %v3892
    %v3909 = vunpack.c.l.b16 %v3893
    %v3910 = vunpack.c.l.b16 %v3894
    %v3911 = vunpack.c.l.b16 %v3895
    %v3912 = vpack.c.b16 %v3905, %v3904
    %v3913 = vpack.c.b16 %v3907, %v3906
    %v3914 = vpack.c.b16 %v3909, %v3908
    %v3915 = vpack.c.b16 %v3911, %v3910
    %v3921 = vsel %vm2295, %v3886, 0
    %3923 = vmatprep.subr.bf16.mxu0 0
    %3924 = vmatpush1.bf16.msra.mxu0 %v3912
    %3925 = vmatprep.subr.bf16.mxu0 0
    %3926 = vmatpush1.bf16.msra.mxu0 %v3913
    %3927 = vmatprep.subr.bf16.mxu0 0
    %3928 = vmatpush1.bf16.msra.mxu0 %v3914
    %3929 = vmatprep.subr.bf16.mxu0 0
    %3930 = vmatpush1.bf16.msra.mxu0 %v3915
    %3931 = vmatprep.subr.bf16.mxu0 0
    %3932 = vmatpush1.bf16.msra.mxu0 0
    %3933 = vmatprep.subr.bf16.mxu0 0
    %3934 = vmatpush1.bf16.msra.mxu0 0
    %3935 = vmatprep.subr.bf16.mxu0 0
    %3936 = vmatpush1.bf16.msra.mxu0 0
    %3937 = vmatprep.subr.bf16.mxu0 0
    %3938 = vmatpush1.bf16.msra.mxu0 0
    %3939 = vmatprep.subr.bf16.mxu0 0
    %3940 = vmatpush1.bf16.msra.mxu0 0
    %3941 = vmatprep.subr.bf16.mxu0 0
    %3942 = vmatpush1.bf16.msra.mxu0 0
    %3943 = vmatprep.subr.bf16.mxu0 0
    %3944 = vmatpush1.bf16.msra.mxu0 0
    %3945 = vmatprep.subr.bf16.mxu0 0
    %3946 = vmatpush1.bf16.msra.mxu0 0
    %3947 = vmatprep.subr.bf16.mxu0 0
    %3948 = vmatpush1.bf16.msra.mxu0 0
    %3949 = vmatprep.subr.bf16.mxu0 0
    %3950 = vmatpush1.bf16.msra.mxu0 0
    %3951 = vmatprep.subr.bf16.mxu0 0
    %3952 = vmatpush1.bf16.msra.mxu0 0
    %3953 = vmatprep.subr.bf16.mxu0 0
    %3954 = vmatpush1.bf16.msra.mxu0 0
    %3955 = vmatprep.mubr.bf16.mxu0 0
    %3956 = vmatmul.mubr.bf16.gmra.mrb[0].mxu0 %v3921
    %v3957 = vpop.f32.mrb[0].mxu0
    %v3958 = vadd.f32 0.0, %v3957
    %v3959 = vpop.f32.mrb[0].mxu0
    %v3960 = vpop.f32.mrb[0].mxu0
    %v3961 = vpop.f32.mrb[0].mxu0
    %3962 = vdwg.mxu0
    %v3963 = vadd.f32 %v3884, %v3958
    %v3964 = vld [vmem:[%s6] sm:$0x1]
    %v3966 = vlaneseq
    %v3967 = vshrl.u32 %v3966, 7
    %v3968 = vsub.s32 0, %v3967
    %v3969 = vrot.slane %v3964, %v3968
    %v3971 = vadd.f32 %v3963, %v3969
    %v3972 = vmul.f32 %v3971, 0.2
    %v3973 = vmax.f32 %v3971, %v3972
    %3974 = vst [vmem:[%s13] sm:$0x3] 0.0
    %3975 = vst [vmem:[%s13 + $0x6] sm:$0x3] 0.0
    %3976 = vst [vmem:[%s13 + $0x2] sm:$0xf] %v3973
    %v3977 = vld [vmem:[%s13] sm:$0xf]
    %v3978 = vpack.c.bf16 %v3977, %v3977
    %v3979 = vld [vmem:[#allocation9] sm:$0xf]
    %v3980 = vld [vmem:[#allocation9 + $0x4] sm:$0xf]
    %v3981 = vld [vmem:[#allocation9 + $0x8] sm:$0xf]
    %v3982 = vld [vmem:[#allocation9 + $0xc] sm:$0xf]
    %v3983 = vld [vmem:[#allocation9 + $0x10] sm:$0xf]
    %v3984 = vld [vmem:[#allocation9 + $0x14] sm:$0xf]
    %v3985 = vld [vmem:[#allocation9 + $0x18] sm:$0xf]
    %v3986 = vld [vmem:[#allocation9 + $0x1c] sm:$0xf]
    %v3987 = vld [vmem:[#allocation9 + $0x20] sm:$0xf]
    %v3988 = vld [vmem:[#allocation9 + $0x24] sm:$0xf]
    %v3989 = vld [vmem:[#allocation9 + $0x28] sm:$0xf]
    %v3990 = vld [vmem:[#allocation9 + $0x2c] sm:$0xf]
    %v3991 = vld [vmem:[#allocation9 + $0x30] sm:$0xf]
    %v3992 = vld [vmem:[#allocation9 + $0x34] sm:$0xf]
    %v3993 = vld [vmem:[#allocation9 + $0x38] sm:$0xf]
    %v3994 = vld [vmem:[#allocation9 + $0x3c] sm:$0xf]
    %v3995 = vld [vmem:[%s13 + $0x1] sm:$0xf]
    %v3996 = vpack.c.bf16 %v3995, %v3995
    %s3997 = scalar_lea.vmem [#allocation9], 64
    %v3998 = vld [vmem:[%s3997] sm:$0xf]
    %v3999 = vld [vmem:[%s3997 + $0x4] sm:$0xf]
    %v4000 = vld [vmem:[%s3997 + $0x8] sm:$0xf]
    %v4001 = vld [vmem:[%s3997 + $0xc] sm:$0xf]
    %v4002 = vld [vmem:[%s3997 + $0x10] sm:$0xf]
    %v4003 = vld [vmem:[%s3997 + $0x14] sm:$0xf]
    %v4004 = vld [vmem:[%s3997 + $0x18] sm:$0xf]
    %v4005 = vld [vmem:[%s3997 + $0x1c] sm:$0xf]
    %v4006 = vld [vmem:[%s3997 + $0x20] sm:$0xf]
    %v4007 = vld [vmem:[%s3997 + $0x24] sm:$0xf]
    %v4008 = vld [vmem:[%s3997 + $0x28] sm:$0xf]
    %v4009 = vld [vmem:[%s3997 + $0x2c] sm:$0xf]
    %v4010 = vld [vmem:[%s3997 + $0x30] sm:$0xf]
    %v4011 = vld [vmem:[%s3997 + $0x34] sm:$0xf]
    %v4012 = vld [vmem:[%s3997 + $0x38] sm:$0xf]
    %v4013 = vld [vmem:[%s3997 + $0x3c] sm:$0xf]
    %v4030 = vunpack.c.l.b16 %v3998
    %v4031 = vunpack.c.l.b16 %v3999
    %v4032 = vunpack.c.l.b16 %v4000
    %v4033 = vunpack.c.l.b16 %v4001
    %v4034 = vunpack.c.l.b16 %v4002
    %v4035 = vunpack.c.l.b16 %v4003
    %v4036 = vunpack.c.l.b16 %v4004
    %v4037 = vunpack.c.l.b16 %v4005
    %v4038 = vunpack.c.l.b16 %v4006
    %v4039 = vunpack.c.l.b16 %v4007
    %v4040 = vunpack.c.l.b16 %v4008
    %v4041 = vunpack.c.l.b16 %v4009
    %v4042 = vunpack.c.l.b16 %v4010
    %v4043 = vunpack.c.l.b16 %v4011
    %v4044 = vunpack.c.l.b16 %v4012
    %v4045 = vunpack.c.l.b16 %v4013
    %v4046 = vpack.c.b16 %v4031, %v4030
    %v4047 = vpack.c.b16 %v4033, %v4032
    %v4048 = vpack.c.b16 %v4035, %v4034
    %v4049 = vpack.c.b16 %v4037, %v4036
    %v4050 = vpack.c.b16 %v4039, %v4038
    %v4051 = vpack.c.b16 %v4041, %v4040
    %v4052 = vpack.c.b16 %v4043, %v4042
    %v4053 = vpack.c.b16 %v4045, %v4044
    %4062 = vmatprep.subr.bf16.mxu0 0
    %4063 = vmatpush1.bf16.msra.mxu0 %v4046
    %4064 = vmatprep.subr.bf16.mxu0 0
    %4065 = vmatpush1.bf16.msra.mxu0 %v4047
    %4066 = vmatprep.subr.bf16.mxu0 0
    %4067 = vmatpush1.bf16.msra.mxu0 %v4048
    %4068 = vmatprep.subr.bf16.mxu0 0
    %4069 = vmatpush1.bf16.msra.mxu0 %v4049
    %4070 = vmatprep.subr.bf16.mxu0 0
    %4071 = vmatpush1.bf16.msra.mxu0 %v4050
    %4072 = vmatprep.subr.bf16.mxu0 0
    %4073 = vmatpush1.bf16.msra.mxu0 %v4051
    %4074 = vmatprep.subr.bf16.mxu0 0
    %4075 = vmatpush1.bf16.msra.mxu0 %v4052
    %4076 = vmatprep.subr.bf16.mxu0 0
    %4077 = vmatpush1.bf16.msra.mxu0 %v4053
    %4078 = vmatprep.subr.bf16.mxu0 0
    %4079 = vmatpush1.bf16.msra.mxu0 0
    %4080 = vmatprep.subr.bf16.mxu0 0
    %4081 = vmatpush1.bf16.msra.mxu0 0
    %4082 = vmatprep.subr.bf16.mxu0 0
    %4083 = vmatpush1.bf16.msra.mxu0 0
    %4084 = vmatprep.subr.bf16.mxu0 0
    %4085 = vmatpush1.bf16.msra.mxu0 0
    %4086 = vmatprep.subr.bf16.mxu0 0
    %4087 = vmatpush1.bf16.msra.mxu0 0
    %4088 = vmatprep.subr.bf16.mxu0 0
    %4089 = vmatpush1.bf16.msra.mxu0 0
    %4090 = vmatprep.subr.bf16.mxu0 0
    %4091 = vmatpush1.bf16.msra.mxu0 0
    %4092 = vmatprep.subr.bf16.mxu0 0
    %4093 = vmatpush1.bf16.msra.mxu0 0
    %4094 = vmatprep.mubr.bf16.mxu0 0
    %4095 = vmatmul.mubr.bf16.gmra.mrb[0].mxu0 %v3996
    %v4096 = vpop.f32.mrb[0].mxu0
    %v4097 = vadd.f32 0.0, %v4096
    %v4098 = vpop.f32.mrb[0].mxu0
    %v4099 = vpop.f32.mrb[0].mxu0
    %v4100 = vpop.f32.mrb[0].mxu0
    %4101 = vdwg.mxu0
    %v4118 = vunpack.c.l.b16 %v3979
    %v4119 = vunpack.c.l.b16 %v3980
    %v4120 = vunpack.c.l.b16 %v3981
    %v4121 = vunpack.c.l.b16 %v3982
    %v4122 = vunpack.c.l.b16 %v3983
    %v4123 = vunpack.c.l.b16 %v3984
    %v4124 = vunpack.c.l.b16 %v3985
    %v4125 = vunpack.c.l.b16 %v3986
    %v4126 = vunpack.c.l.b16 %v3987
    %v4127 = vunpack.c.l.b16 %v3988
    %v4128 = vunpack.c.l.b16 %v3989
    %v4129 = vunpack.c.l.b16 %v3990
    %v4130 = vunpack.c.l.b16 %v3991
    %v4131 = vunpack.c.l.b16 %v3992
    %v4132 = vunpack.c.l.b16 %v3993
    %v4133 = vunpack.c.l.b16 %v3994
    %v4134 = vpack.c.b16 %v4119, %v4118
    %v4135 = vpack.c.b16 %v4121, %v4120
    %v4136 = vpack.c.b16 %v4123, %v4122
    %v4137 = vpack.c.b16 %v4125, %v4124
    %v4138 = vpack.c.b16 %v4127, %v4126
    %v4139 = vpack.c.b16 %v4129, %v4128
    %v4140 = vpack.c.b16 %v4131, %v4130
    %v4141 = vpack.c.b16 %v4133, %v4132
    %4150 = vmatprep.subr.bf16.mxu0 0
    %4151 = vmatpush1.bf16.msra.mxu0 %v4134
    %4152 = vmatprep.subr.bf16.mxu0 0
    %4153 = vmatpush1.bf16.msra.mxu0 %v4135
    %4154 = vmatprep.subr.bf16.mxu0 0
    %4155 = vmatpush1.bf16.msra.mxu0 %v4136
    %4156 = vmatprep.subr.bf16.mxu0 0
    %4157 = vmatpush1.bf16.msra.mxu0 %v4137
    %4158 = vmatprep.subr.bf16.mxu0 0
    %4159 = vmatpush1.bf16.msra.mxu0 %v4138
    %4160 = vmatprep.subr.bf16.mxu0 0
    %4161 = vmatpush1.bf16.msra.mxu0 %v4139
    %4162 = vmatprep.subr.bf16.mxu0 0
    %4163 = vmatpush1.bf16.msra.mxu0 %v4140
    %4164 = vmatprep.subr.bf16.mxu0 0
    %4165 = vmatpush1.bf16.msra.mxu0 %v4141
    %4166 = vmatprep.subr.bf16.mxu0 0
    %4167 = vmatpush1.bf16.msra.mxu0 0
    %4168 = vmatprep.subr.bf16.mxu0 0
    %4169 = vmatpush1.bf16.msra.mxu0 0
    %4170 = vmatprep.subr.bf16.mxu0 0
    %4171 = vmatpush1.bf16.msra.mxu0 0
    %4172 = vmatprep.subr.bf16.mxu0 0
    %4173 = vmatpush1.bf16.msra.mxu0 0
    %4174 = vmatprep.subr.bf16.mxu0 0
    %4175 = vmatpush1.bf16.msra.mxu0 0
    %4176 = vmatprep.subr.bf16.mxu0 0
    %4177 = vmatpush1.bf16.msra.mxu0 0
    %4178 = vmatprep.subr.bf16.mxu0 0
    %4179 = vmatpush1.bf16.msra.mxu0 0
    %4180 = vmatprep.subr.bf16.mxu0 0
    %4181 = vmatpush1.bf16.msra.mxu0 0
    %4182 = vmatprep.mubr.bf16.mxu0 0
    %4183 = vmatmul.mubr.bf16.gmra.mrb[0].mxu0 %v3978
    %v4184 = vpop.f32.mrb[0].mxu0
    %v4185 = vadd.f32 %v4097, %v4184
    %v4186 = vpop.f32.mrb[0].mxu0
    %v4187 = vpop.f32.mrb[0].mxu0
    %v4188 = vpop.f32.mrb[0].mxu0
    %4189 = vdwg.mxu0
    %v4190 = vld [vmem:[%s13 + $0x2] sm:$0xf]
    %v4191 = vpack.c.bf16 %v4190, %v4190
    %s4192 = scalar_lea.vmem [#allocation9], 128
    %v4193 = vld [vmem:[%s4192] sm:$0xf]
    %v4194 = vld [vmem:[%s4192 + $0x4] sm:$0xf]
    %v4195 = vld [vmem:[%s4192 + $0x8] sm:$0xf]
    %v4196 = vld [vmem:[%s4192 + $0xc] sm:$0xf]
    %v4197 = vld [vmem:[%s4192 + $0x10] sm:$0xf]
    %v4198 = vld [vmem:[%s4192 + $0x14] sm:$0xf]
    %v4199 = vld [vmem:[%s4192 + $0x18] sm:$0xf]
    %v4200 = vld [vmem:[%s4192 + $0x1c] sm:$0xf]
    %v4201 = vld [vmem:[%s4192 + $0x20] sm:$0xf]
    %v4202 = vld [vmem:[%s4192 + $0x24] sm:$0xf]
    %v4203 = vld [vmem:[%s4192 + $0x28] sm:$0xf]
    %v4204 = vld [vmem:[%s4192 + $0x2c] sm:$0xf]
    %v4205 = vld [vmem:[%s4192 + $0x30] sm:$0xf]
    %v4206 = vld [vmem:[%s4192 + $0x34] sm:$0xf]
    %v4207 = vld [vmem:[%s4192 + $0x38] sm:$0xf]
    %v4208 = vld [vmem:[%s4192 + $0x3c] sm:$0xf]
    %v4225 = vunpack.c.l.b16 %v4193
    %v4226 = vunpack.c.l.b16 %v4194
    %v4227 = vunpack.c.l.b16 %v4195
    %v4228 = vunpack.c.l.b16 %v4196
    %v4229 = vunpack.c.l.b16 %v4197
    %v4230 = vunpack.c.l.b16 %v4198
    %v4231 = vunpack.c.l.b16 %v4199
    %v4232 = vunpack.c.l.b16 %v4200
    %v4233 = vunpack.c.l.b16 %v4201
    %v4234 = vunpack.c.l.b16 %v4202
    %v4235 = vunpack.c.l.b16 %v4203
    %v4236 = vunpack.c.l.b16 %v4204
    %v4237 = vunpack.c.l.b16 %v4205
    %v4238 = vunpack.c.l.b16 %v4206
    %v4239 = vunpack.c.l.b16 %v4207
    %v4240 = vunpack.c.l.b16 %v4208
    %v4241 = vpack.c.b16 %v4226, %v4225
    %v4242 = vpack.c.b16 %v4228, %v4227
    %v4243 = vpack.c.b16 %v4230, %v4229
    %v4244 = vpack.c.b16 %v4232, %v4231
    %v4245 = vpack.c.b16 %v4234, %v4233
    %v4246 = vpack.c.b16 %v4236, %v4235
    %v4247 = vpack.c.b16 %v4238, %v4237
    %v4248 = vpack.c.b16 %v4240, %v4239
    %4257 = vmatprep.subr.bf16.mxu0 0
    %4258 = vmatpush1.bf16.msra.mxu0 %v4241
    %4259 = vmatprep.subr.bf16.mxu0 0
    %4260 = vmatpush1.bf16.msra.mxu0 %v4242
    %4261 = vmatprep.subr.bf16.mxu0 0
    %4262 = vmatpush1.bf16.msra.mxu0 %v4243
    %4263 = vmatprep.subr.bf16.mxu0 0
    %4264 = vmatpush1.bf16.msra.mxu0 %v4244
    %4265 = vmatprep.subr.bf16.mxu0 0
    %4266 = vmatpush1.bf16.msra.mxu0 %v4245
    %4267 = vmatprep.subr.bf16.mxu0 0
    %4268 = vmatpush1.bf16.msra.mxu0 %v4246
    %4269 = vmatprep.subr.bf16.mxu0 0
    %4270 = vmatpush1.bf16.msra.mxu0 %v4247
    %4271 = vmatprep.subr.bf16.mxu0 0
    %4272 = vmatpush1.bf16.msra.mxu0 %v4248
    %4273 = vmatprep.subr.bf16.mxu0 0
    %4274 = vmatpush1.bf16.msra.mxu0 0
    %4275 = vmatprep.subr.bf16.mxu0 0
    %4276 = vmatpush1.bf16.msra.mxu0 0
    %4277 = vmatprep.subr.bf16.mxu0 0
    %4278 = vmatpush1.bf16.msra.mxu0 0
    %4279 = vmatprep.subr.bf16.mxu0 0
    %4280 = vmatpush1.bf16.msra.mxu0 0
    %4281 = vmatprep.subr.bf16.mxu0 0
    %4282 = vmatpush1.bf16.msra.mxu0 0
    %4283 = vmatprep.subr.bf16.mxu0 0
    %4284 = vmatpush1.bf16.msra.mxu0 0
    %4285 = vmatprep.subr.bf16.mxu0 0
    %4286 = vmatpush1.bf16.msra.mxu0 0
    %4287 = vmatprep.subr.bf16.mxu0 0
    %4288 = vmatpush1.bf16.msra.mxu0 0
    %4289 = vmatprep.mubr.bf16.mxu0 0
    %4290 = vmatmul.mubr.bf16.gmra.mrb[0].mxu0 %v4191
    %v4291 = vpop.f32.mrb[0].mxu0
    %v4292 = vadd.f32 0.0, %v4291
    %v4293 = vpop.f32.mrb[0].mxu0
    %v4294 = vpop.f32.mrb[0].mxu0
    %v4295 = vpop.f32.mrb[0].mxu0
    %4296 = vdwg.mxu0
    %v4297 = vadd.f32 %v4185, %v4292
    %v4298 = vld [vmem:[%s13 + $0x3] sm:$0xf]
    %v4299 = vpack.c.bf16 %v4298, %v4298
    %s4300 = scalar_lea.vmem [#allocation9], 192
    %v4301 = vld [vmem:[%s4300] sm:$0xf]
    %v4302 = vld [vmem:[%s4300 + $0x4] sm:$0xf]
    %v4303 = vld [vmem:[%s4300 + $0x8] sm:$0xf]
    %v4304 = vld [vmem:[%s4300 + $0xc] sm:$0xf]
    %v4305 = vld [vmem:[%s4300 + $0x10] sm:$0xf]
    %v4306 = vld [vmem:[%s4300 + $0x14] sm:$0xf]
    %v4307 = vld [vmem:[%s4300 + $0x18] sm:$0xf]
    %v4308 = vld [vmem:[%s4300 + $0x1c] sm:$0xf]
    %v4309 = vld [vmem:[%s4300 + $0x20] sm:$0xf]
    %v4310 = vld [vmem:[%s4300 + $0x24] sm:$0xf]
    %v4311 = vld [vmem:[%s4300 + $0x28] sm:$0xf]
    %v4312 = vld [vmem:[%s4300 + $0x2c] sm:$0xf]
    %v4313 = vld [vmem:[%s4300 + $0x30] sm:$0xf]
    %v4314 = vld [vmem:[%s4300 + $0x34] sm:$0xf]
    %v4315 = vld [vmem:[%s4300 + $0x38] sm:$0xf]
    %v4316 = vld [vmem:[%s4300 + $0x3c] sm:$0xf]
    %v4333 = vunpack.c.l.b16 %v4301
    %v4334 = vunpack.c.l.b16 %v4302
    %v4335 = vunpack.c.l.b16 %v4303
    %v4336 = vunpack.c.l.b16 %v4304
    %v4337 = vunpack.c.l.b16 %v4305
    %v4338 = vunpack.c.l.b16 %v4306
    %v4339 = vunpack.c.l.b16 %v4307
    %v4340 = vunpack.c.l.b16 %v4308
    %v4341 = vunpack.c.l.b16 %v4309
    %v4342 = vunpack.c.l.b16 %v4310
    %v4343 = vunpack.c.l.b16 %v4311
    %v4344 = vunpack.c.l.b16 %v4312
    %v4345 = vunpack.c.l.b16 %v4313
    %v4346 = vunpack.c.l.b16 %v4314
    %v4347 = vunpack.c.l.b16 %v4315
    %v4348 = vunpack.c.l.b16 %v4316
    %v4349 = vpack.c.b16 %v4334, %v4333
    %v4350 = vpack.c.b16 %v4336, %v4335
    %v4351 = vpack.c.b16 %v4338, %v4337
    %v4352 = vpack.c.b16 %v4340, %v4339
    %v4353 = vpack.c.b16 %v4342, %v4341
    %v4354 = vpack.c.b16 %v4344, %v4343
    %v4355 = vpack.c.b16 %v4346, %v4345
    %v4356 = vpack.c.b16 %v4348, %v4347
    %4365 = vmatprep.subr.bf16.mxu0 0
    %4366 = vmatpush1.bf16.msra.mxu0 %v4349
    %4367 = vmatprep.subr.bf16.mxu0 0
    %4368 = vmatpush1.bf16.msra.mxu0 %v4350
    %4369 = vmatprep.subr.bf16.mxu0 0
    %4370 = vmatpush1.bf16.msra.mxu0 %v4351
    %4371 = vmatprep.subr.bf16.mxu0 0
    %4372 = vmatpush1.bf16.msra.mxu0 %v4352
    %4373 = vmatprep.subr.bf16.mxu0 0
    %4374 = vmatpush1.bf16.msra.mxu0 %v4353
    %4375 = vmatprep.subr.bf16.mxu0 0
    %4376 = vmatpush1.bf16.msra.mxu0 %v4354
    %4377 = vmatprep.subr.bf16.mxu0 0
    %4378 = vmatpush1.bf16.msra.mxu0 %v4355
    %4379 = vmatprep.subr.bf16.mxu0 0
    %4380 = vmatpush1.bf16.msra.mxu0 %v4356
    %4381 = vmatprep.subr.bf16.mxu0 0
    %4382 = vmatpush1.bf16.msra.mxu0 0
    %4383 = vmatprep.subr.bf16.mxu0 0
    %4384 = vmatpush1.bf16.msra.mxu0 0
    %4385 = vmatprep.subr.bf16.mxu0 0
    %4386 = vmatpush1.bf16.msra.mxu0 0
    %4387 = vmatprep.subr.bf16.mxu0 0
    %4388 = vmatpush1.bf16.msra.mxu0 0
    %4389 = vmatprep.subr.bf16.mxu0 0
    %4390 = vmatpush1.bf16.msra.mxu0 0
    %4391 = vmatprep.subr.bf16.mxu0 0
    %4392 = vmatpush1.bf16.msra.mxu0 0
    %4393 = vmatprep.subr.bf16.mxu0 0
    %4394 = vmatpush1.bf16.msra.mxu0 0
    %4395 = vmatprep.subr.bf16.mxu0 0
    %4396 = vmatpush1.bf16.msra.mxu0 0
    %4397 = vmatprep.mubr.bf16.mxu0 0
    %4398 = vmatmul.mubr.bf16.gmra.mrb[0].mxu0 %v4299
    %v4399 = vpop.f32.mrb[0].mxu0
    %v4400 = vadd.f32 0.0, %v4399
    %v4401 = vpop.f32.mrb[0].mxu0
    %v4402 = vpop.f32.mrb[0].mxu0
    %v4403 = vpop.f32.mrb[0].mxu0
    %4404 = vdwg.mxu0
    %v4405 = vadd.f32 %v4297, %v4400
    %v4406 = vld [vmem:[%s13 + $0x4] sm:$0xf]
    %v4407 = vpack.c.bf16 %v4406, %v4406
    %s4408 = scalar_lea.vmem [#allocation9], 256
    %v4409 = vld [vmem:[%s4408] sm:$0xf]
    %v4410 = vld [vmem:[%s4408 + $0x4] sm:$0xf]
    %v4411 = vld [vmem:[%s4408 + $0x8] sm:$0xf]
    %v4412 = vld [vmem:[%s4408 + $0xc] sm:$0xf]
    %v4413 = vld [vmem:[%s4408 + $0x10] sm:$0xf]
    %v4414 = vld [vmem:[%s4408 + $0x14] sm:$0xf]
    %v4415 = vld [vmem:[%s4408 + $0x18] sm:$0xf]
    %v4416 = vld [vmem:[%s4408 + $0x1c] sm:$0xf]
    %v4417 = vld [vmem:[%s4408 + $0x20] sm:$0xf]
    %v4418 = vld [vmem:[%s4408 + $0x24] sm:$0xf]
    %v4419 = vld [vmem:[%s4408 + $0x28] sm:$0xf]
    %v4420 = vld [vmem:[%s4408 + $0x2c] sm:$0xf]
    %v4421 = vld [vmem:[%s4408 + $0x30] sm:$0xf]
    %v4422 = vld [vmem:[%s4408 + $0x34] sm:$0xf]
    %v4423 = vld [vmem:[%s4408 + $0x38] sm:$0xf]
    %v4424 = vld [vmem:[%s4408 + $0x3c] sm:$0xf]
    %v4441 = vunpack.c.l.b16 %v4409
    %v4442 = vunpack.c.l.b16 %v4410
    %v4443 = vunpack.c.l.b16 %v4411
    %v4444 = vunpack.c.l.b16 %v4412
    %v4445 = vunpack.c.l.b16 %v4413
    %v4446 = vunpack.c.l.b16 %v4414
    %v4447 = vunpack.c.l.b16 %v4415
    %v4448 = vunpack.c.l.b16 %v4416
    %v4449 = vunpack.c.l.b16 %v4417
    %v4450 = vunpack.c.l.b16 %v4418
    %v4451 = vunpack.c.l.b16 %v4419
    %v4452 = vunpack.c.l.b16 %v4420
    %v4453 = vunpack.c.l.b16 %v4421
    %v4454 = vunpack.c.l.b16 %v4422
    %v4455 = vunpack.c.l.b16 %v4423
    %v4456 = vunpack.c.l.b16 %v4424
    %v4457 = vpack.c.b16 %v4442, %v4441
    %v4458 = vpack.c.b16 %v4444, %v4443
    %v4459 = vpack.c.b16 %v4446, %v4445
    %v4460 = vpack.c.b16 %v4448, %v4447
    %v4461 = vpack.c.b16 %v4450, %v4449
    %v4462 = vpack.c.b16 %v4452, %v4451
    %v4463 = vpack.c.b16 %v4454, %v4453
    %v4464 = vpack.c.b16 %v4456, %v4455
    %4473 = vmatprep.subr.bf16.mxu0 0
    %4474 = vmatpush1.bf16.msra.mxu0 %v4457
    %4475 = vmatprep.subr.bf16.mxu0 0
    %4476 = vmatpush1.bf16.msra.mxu0 %v4458
    %4477 = vmatprep.subr.bf16.mxu0 0
    %4478 = vmatpush1.bf16.msra.mxu0 %v4459
    %4479 = vmatprep.subr.bf16.mxu0 0
    %4480 = vmatpush1.bf16.msra.mxu0 %v4460
    %4481 = vmatprep.subr.bf16.mxu0 0
    %4482 = vmatpush1.bf16.msra.mxu0 %v4461
    %4483 = vmatprep.subr.bf16.mxu0 0
    %4484 = vmatpush1.bf16.msra.mxu0 %v4462
    %4485 = vmatprep.subr.bf16.mxu0 0
    %4486 = vmatpush1.bf16.msra.mxu0 %v4463
    %4487 = vmatprep.subr.bf16.mxu0 0
    %4488 = vmatpush1.bf16.msra.mxu0 %v4464
    %4489 = vmatprep.subr.bf16.mxu0 0
    %4490 = vmatpush1.bf16.msra.mxu0 0
    %4491 = vmatprep.subr.bf16.mxu0 0
    %4492 = vmatpush1.bf16.msra.mxu0 0
    %4493 = vmatprep.subr.bf16.mxu0 0
    %4494 = vmatpush1.bf16.msra.mxu0 0
    %4495 = vmatprep.subr.bf16.mxu0 0
    %4496 = vmatpush1.bf16.msra.mxu0 0
    %4497 = vmatprep.subr.bf16.mxu0 0
    %4498 = vmatpush1.bf16.msra.mxu0 0
    %4499 = vmatprep.subr.bf16.mxu0 0
    %4500 = vmatpush1.bf16.msra.mxu0 0
    %4501 = vmatprep.subr.bf16.mxu0 0
    %4502 = vmatpush1.bf16.msra.mxu0 0
    %4503 = vmatprep.subr.bf16.mxu0 0
    %4504 = vmatpush1.bf16.msra.mxu0 0
    %4505 = vmatprep.mubr.bf16.mxu0 0
    %4506 = vmatmul.mubr.bf16.gmra.mrb[0].mxu0 %v4407
    %v4507 = vpop.f32.mrb[0].mxu0
    %v4508 = vadd.f32 0.0, %v4507
    %v4509 = vpop.f32.mrb[0].mxu0
    %v4510 = vpop.f32.mrb[0].mxu0
    %v4511 = vpop.f32.mrb[0].mxu0
    %4512 = vdwg.mxu0
    %v4513 = vadd.f32 %v4405, %v4508
    %v4514 = vld [vmem:[%s8] sm:$0x1]
    %v4516 = vlaneseq
    %v4517 = vshrl.u32 %v4516, 7
    %v4518 = vsub.s32 0, %v4517
    %v4519 = vrot.slane %v4514, %v4518
    %v4521 = vadd.f32 %v4513, %v4519
    %v4522 = vmul.f32 %v4521, 0.2
    %v4523 = vmax.f32 %v4521, %v4522
    %4524 = vst [vmem:[%s14] sm:$0x1] 0.0
    %4525 = vst [vmem:[%s14 + $0x5] sm:$0x1] 0.0
    %4526 = vst [vmem:[%s14 + $0x1] sm:$0xf] %v4523
    %v4527 = vld [vmem:[%s14] sm:$0xf]
    %v4528 = vpack.c.bf16 %v4527, %v4527
    %v4529 = vld [vmem:[#allocation10] sm:$0xf]
    %v4530 = vld [vmem:[#allocation10 + $0x4] sm:$0xf]
    %v4531 = vld [vmem:[#allocation10 + $0x8] sm:$0xf]
    %v4532 = vld [vmem:[#allocation10 + $0xc] sm:$0xf]
    %v4533 = vld [vmem:[#allocation10 + $0x10] sm:$0xf]
    %v4534 = vld [vmem:[#allocation10 + $0x14] sm:$0xf]
    %v4535 = vld [vmem:[#allocation10 + $0x18] sm:$0xf]
    %v4536 = vld [vmem:[#allocation10 + $0x1c] sm:$0xf]
    %v4537 = vld [vmem:[#allocation10 + $0x20] sm:$0xf]
    %v4538 = vld [vmem:[#allocation10 + $0x24] sm:$0xf]
    %v4539 = vld [vmem:[#allocation10 + $0x28] sm:$0xf]
    %v4540 = vld [vmem:[#allocation10 + $0x2c] sm:$0xf]
    %v4541 = vld [vmem:[#allocation10 + $0x30] sm:$0xf]
    %v4542 = vld [vmem:[#allocation10 + $0x34] sm:$0xf]
    %v4543 = vld [vmem:[#allocation10 + $0x38] sm:$0xf]
    %v4544 = vld [vmem:[#allocation10 + $0x3c] sm:$0xf]
    %v4545 = vld [vmem:[%s14 + $0x1] sm:$0xf]
    %v4546 = vpack.c.bf16 %v4545, %v4545
    %s4547 = scalar_lea.vmem [#allocation10], 64
    %v4548 = vld [vmem:[%s4547] sm:$0xf]
    %v4549 = vld [vmem:[%s4547 + $0x4] sm:$0xf]
    %v4550 = vld [vmem:[%s4547 + $0x8] sm:$0xf]
    %v4551 = vld [vmem:[%s4547 + $0xc] sm:$0xf]
    %v4552 = vld [vmem:[%s4547 + $0x10] sm:$0xf]
    %v4553 = vld [vmem:[%s4547 + $0x14] sm:$0xf]
    %v4554 = vld [vmem:[%s4547 + $0x18] sm:$0xf]
    %v4555 = vld [vmem:[%s4547 + $0x1c] sm:$0xf]
    %v4556 = vld [vmem:[%s4547 + $0x20] sm:$0xf]
    %v4557 = vld [vmem:[%s4547 + $0x24] sm:$0xf]
    %v4558 = vld [vmem:[%s4547 + $0x28] sm:$0xf]
    %v4559 = vld [vmem:[%s4547 + $0x2c] sm:$0xf]
    %v4560 = vld [vmem:[%s4547 + $0x30] sm:$0xf]
    %v4561 = vld [vmem:[%s4547 + $0x34] sm:$0xf]
    %v4562 = vld [vmem:[%s4547 + $0x38] sm:$0xf]
    %v4563 = vld [vmem:[%s4547 + $0x3c] sm:$0xf]
    %v4580 = vunpack.c.l.b16 %v4548
    %v4581 = vunpack.c.l.b16 %v4549
    %v4582 = vunpack.c.l.b16 %v4550
    %v4583 = vunpack.c.l.b16 %v4551
    %v4584 = vunpack.c.l.b16 %v4552
    %v4585 = vunpack.c.l.b16 %v4553
    %v4586 = vunpack.c.l.b16 %v4554
    %v4587 = vunpack.c.l.b16 %v4555
    %v4588 = vunpack.c.l.b16 %v4556
    %v4589 = vunpack.c.l.b16 %v4557
    %v4590 = vunpack.c.l.b16 %v4558
    %v4591 = vunpack.c.l.b16 %v4559
    %v4592 = vunpack.c.l.b16 %v4560
    %v4593 = vunpack.c.l.b16 %v4561
    %v4594 = vunpack.c.l.b16 %v4562
    %v4595 = vunpack.c.l.b16 %v4563
    %v4596 = vpack.c.b16 %v4581, %v4580
    %v4597 = vpack.c.b16 %v4583, %v4582
    %v4598 = vpack.c.b16 %v4585, %v4584
    %v4599 = vpack.c.b16 %v4587, %v4586
    %v4600 = vpack.c.b16 %v4589, %v4588
    %v4601 = vpack.c.b16 %v4591, %v4590
    %v4602 = vpack.c.b16 %v4593, %v4592
    %v4603 = vpack.c.b16 %v4595, %v4594
    %4612 = vmatprep.subr.bf16.mxu0 0
    %4613 = vmatpush1.bf16.msra.mxu0 %v4596
    %4614 = vmatprep.subr.bf16.mxu0 0
    %4615 = vmatpush1.bf16.msra.mxu0 %v4597
    %4616 = vmatprep.subr.bf16.mxu0 0
    %4617 = vmatpush1.bf16.msra.mxu0 %v4598
    %4618 = vmatprep.subr.bf16.mxu0 0
    %4619 = vmatpush1.bf16.msra.mxu0 %v4599
    %4620 = vmatprep.subr.bf16.mxu0 0
    %4621 = vmatpush1.bf16.msra.mxu0 %v4600
    %4622 = vmatprep.subr.bf16.mxu0 0
    %4623 = vmatpush1.bf16.msra.mxu0 %v4601
    %4624 = vmatprep.subr.bf16.mxu0 0
    %4625 = vmatpush1.bf16.msra.mxu0 %v4602
    %4626 = vmatprep.subr.bf16.mxu0 0
    %4627 = vmatpush1.bf16.msra.mxu0 %v4603
    %4628 = vmatprep.subr.bf16.mxu0 0
    %4629 = vmatpush1.bf16.msra.mxu0 0
    %4630 = vmatprep.subr.bf16.mxu0 0
    %4631 = vmatpush1.bf16.msra.mxu0 0
    %4632 = vmatprep.subr.bf16.mxu0 0
    %4633 = vmatpush1.bf16.msra.mxu0 0
    %4634 = vmatprep.subr.bf16.mxu0 0
    %4635 = vmatpush1.bf16.msra.mxu0 0
    %4636 = vmatprep.subr.bf16.mxu0 0
    %4637 = vmatpush1.bf16.msra.mxu0 0
    %4638 = vmatprep.subr.bf16.mxu0 0
    %4639 = vmatpush1.bf16.msra.mxu0 0
    %4640 = vmatprep.subr.bf16.mxu0 0
    %4641 = vmatpush1.bf16.msra.mxu0 0
    %4642 = vmatprep.subr.bf16.mxu0 0
    %4643 = vmatpush1.bf16.msra.mxu0 0
    %4644 = vmatprep.mubr.bf16.mxu0 0
    %4645 = vmatmul.mubr.bf16.gmra.mrb[0].mxu0 %v4546
    %v4646 = vpop.f32.mrb[0].mxu0
    %v4647 = vadd.f32 0.0, %v4646
    %v4648 = vpop.f32.mrb[0].mxu0
    %v4649 = vpop.f32.mrb[0].mxu0
    %v4650 = vpop.f32.mrb[0].mxu0
    %4651 = vdwg.mxu0
    %v4668 = vunpack.c.l.b16 %v4529
    %v4669 = vunpack.c.l.b16 %v4530
    %v4670 = vunpack.c.l.b16 %v4531
    %v4671 = vunpack.c.l.b16 %v4532
    %v4672 = vunpack.c.l.b16 %v4533
    %v4673 = vunpack.c.l.b16 %v4534
    %v4674 = vunpack.c.l.b16 %v4535
    %v4675 = vunpack.c.l.b16 %v4536
    %v4676 = vunpack.c.l.b16 %v4537
    %v4677 = vunpack.c.l.b16 %v4538
    %v4678 = vunpack.c.l.b16 %v4539
    %v4679 = vunpack.c.l.b16 %v4540
    %v4680 = vunpack.c.l.b16 %v4541
    %v4681 = vunpack.c.l.b16 %v4542
    %v4682 = vunpack.c.l.b16 %v4543
    %v4683 = vunpack.c.l.b16 %v4544
    %v4684 = vpack.c.b16 %v4669, %v4668
    %v4685 = vpack.c.b16 %v4671, %v4670
    %v4686 = vpack.c.b16 %v4673, %v4672
    %v4687 = vpack.c.b16 %v4675, %v4674
    %v4688 = vpack.c.b16 %v4677, %v4676
    %v4689 = vpack.c.b16 %v4679, %v4678
    %v4690 = vpack.c.b16 %v4681, %v4680
    %v4691 = vpack.c.b16 %v4683, %v4682
    %4700 = vmatprep.subr.bf16.mxu0 0
    %4701 = vmatpush1.bf16.msra.mxu0 %v4684
    %4702 = vmatprep.subr.bf16.mxu0 0
    %4703 = vmatpush1.bf16.msra.mxu0 %v4685
    %4704 = vmatprep.subr.bf16.mxu0 0
    %4705 = vmatpush1.bf16.msra.mxu0 %v4686
    %4706 = vmatprep.subr.bf16.mxu0 0
    %4707 = vmatpush1.bf16.msra.mxu0 %v4687
    %4708 = vmatprep.subr.bf16.mxu0 0
    %4709 = vmatpush1.bf16.msra.mxu0 %v4688
    %4710 = vmatprep.subr.bf16.mxu0 0
    %4711 = vmatpush1.bf16.msra.mxu0 %v4689
    %4712 = vmatprep.subr.bf16.mxu0 0
    %4713 = vmatpush1.bf16.msra.mxu0 %v4690
    %4714 = vmatprep.subr.bf16.mxu0 0
    %4715 = vmatpush1.bf16.msra.mxu0 %v4691
    %4716 = vmatprep.subr.bf16.mxu0 0
    %4717 = vmatpush1.bf16.msra.mxu0 0
    %4718 = vmatprep.subr.bf16.mxu0 0
    %4719 = vmatpush1.bf16.msra.mxu0 0
    %4720 = vmatprep.subr.bf16.mxu0 0
    %4721 = vmatpush1.bf16.msra.mxu0 0
    %4722 = vmatprep.subr.bf16.mxu0 0
    %4723 = vmatpush1.bf16.msra.mxu0 0
    %4724 = vmatprep.subr.bf16.mxu0 0
    %4725 = vmatpush1.bf16.msra.mxu0 0
    %4726 = vmatprep.subr.bf16.mxu0 0
    %4727 = vmatpush1.bf16.msra.mxu0 0
    %4728 = vmatprep.subr.bf16.mxu0 0
    %4729 = vmatpush1.bf16.msra.mxu0 0
    %4730 = vmatprep.subr.bf16.mxu0 0
    %4731 = vmatpush1.bf16.msra.mxu0 0
    %4732 = vmatprep.mubr.bf16.mxu0 0
    %4733 = vmatmul.mubr.bf16.gmra.mrb[0].mxu0 %v4528
    %v4734 = vpop.f32.mrb[0].mxu0
    %v4735 = vadd.f32 %v4647, %v4734
    %v4736 = vpop.f32.mrb[0].mxu0
    %v4737 = vpop.f32.mrb[0].mxu0
    %v4738 = vpop.f32.mrb[0].mxu0
    %4739 = vdwg.mxu0
    %v4740 = vld [vmem:[%s14 + $0x2] sm:$0xf]
    %v4741 = vpack.c.bf16 %v4740, %v4740
    %s4742 = scalar_lea.vmem [#allocation10], 128
    %v4743 = vld [vmem:[%s4742] sm:$0xf]
    %v4744 = vld [vmem:[%s4742 + $0x4] sm:$0xf]
    %v4745 = vld [vmem:[%s4742 + $0x8] sm:$0xf]
    %v4746 = vld [vmem:[%s4742 + $0xc] sm:$0xf]
    %v4747 = vld [vmem:[%s4742 + $0x10] sm:$0xf]
    %v4748 = vld [vmem:[%s4742 + $0x14] sm:$0xf]
    %v4749 = vld [vmem:[%s4742 + $0x18] sm:$0xf]
    %v4750 = vld [vmem:[%s4742 + $0x1c] sm:$0xf]
    %v4751 = vld [vmem:[%s4742 + $0x20] sm:$0xf]
    %v4752 = vld [vmem:[%s4742 + $0x24] sm:$0xf]
    %v4753 = vld [vmem:[%s4742 + $0x28] sm:$0xf]
    %v4754 = vld [vmem:[%s4742 + $0x2c] sm:$0xf]
    %v4755 = vld [vmem:[%s4742 + $0x30] sm:$0xf]
    %v4756 = vld [vmem:[%s4742 + $0x34] sm:$0xf]
    %v4757 = vld [vmem:[%s4742 + $0x38] sm:$0xf]
    %v4758 = vld [vmem:[%s4742 + $0x3c] sm:$0xf]
    %v4775 = vunpack.c.l.b16 %v4743
    %v4776 = vunpack.c.l.b16 %v4744
    %v4777 = vunpack.c.l.b16 %v4745
    %v4778 = vunpack.c.l.b16 %v4746
    %v4779 = vunpack.c.l.b16 %v4747
    %v4780 = vunpack.c.l.b16 %v4748
    %v4781 = vunpack.c.l.b16 %v4749
    %v4782 = vunpack.c.l.b16 %v4750
    %v4783 = vunpack.c.l.b16 %v4751
    %v4784 = vunpack.c.l.b16 %v4752
    %v4785 = vunpack.c.l.b16 %v4753
    %v4786 = vunpack.c.l.b16 %v4754
    %v4787 = vunpack.c.l.b16 %v4755
    %v4788 = vunpack.c.l.b16 %v4756
    %v4789 = vunpack.c.l.b16 %v4757
    %v4790 = vunpack.c.l.b16 %v4758
    %v4791 = vpack.c.b16 %v4776, %v4775
    %v4792 = vpack.c.b16 %v4778, %v4777
    %v4793 = vpack.c.b16 %v4780, %v4779
    %v4794 = vpack.c.b16 %v4782, %v4781
    %v4795 = vpack.c.b16 %v4784, %v4783
    %v4796 = vpack.c.b16 %v4786, %v4785
    %v4797 = vpack.c.b16 %v4788, %v4787
    %v4798 = vpack.c.b16 %v4790, %v4789
    %4807 = vmatprep.subr.bf16.mxu0 0
    %4808 = vmatpush1.bf16.msra.mxu0 %v4791
    %4809 = vmatprep.subr.bf16.mxu0 0
    %4810 = vmatpush1.bf16.msra.mxu0 %v4792
    %4811 = vmatprep.subr.bf16.mxu0 0
    %4812 = vmatpush1.bf16.msra.mxu0 %v4793
    %4813 = vmatprep.subr.bf16.mxu0 0
    %4814 = vmatpush1.bf16.msra.mxu0 %v4794
    %4815 = vmatprep.subr.bf16.mxu0 0
    %4816 = vmatpush1.bf16.msra.mxu0 %v4795
    %4817 = vmatprep.subr.bf16.mxu0 0
    %4818 = vmatpush1.bf16.msra.mxu0 %v4796
    %4819 = vmatprep.subr.bf16.mxu0 0
    %4820 = vmatpush1.bf16.msra.mxu0 %v4797
    %4821 = vmatprep.subr.bf16.mxu0 0
    %4822 = vmatpush1.bf16.msra.mxu0 %v4798
    %4823 = vmatprep.subr.bf16.mxu0 0
    %4824 = vmatpush1.bf16.msra.mxu0 0
    %4825 = vmatprep.subr.bf16.mxu0 0
    %4826 = vmatpush1.bf16.msra.mxu0 0
    %4827 = vmatprep.subr.bf16.mxu0 0
    %4828 = vmatpush1.bf16.msra.mxu0 0
    %4829 = vmatprep.subr.bf16.mxu0 0
    %4830 = vmatpush1.bf16.msra.mxu0 0
    %4831 = vmatprep.subr.bf16.mxu0 0
    %4832 = vmatpush1.bf16.msra.mxu0 0
    %4833 = vmatprep.subr.bf16.mxu0 0
    %4834 = vmatpush1.bf16.msra.mxu0 0
    %4835 = vmatprep.subr.bf16.mxu0 0
    %4836 = vmatpush1.bf16.msra.mxu0 0
    %4837 = vmatprep.subr.bf16.mxu0 0
    %4838 = vmatpush1.bf16.msra.mxu0 0
    %4839 = vmatprep.mubr.bf16.mxu0 0
    %4840 = vmatmul.mubr.bf16.gmra.mrb[0].mxu0 %v4741
    %v4841 = vpop.f32.mrb[0].mxu0
    %v4842 = vadd.f32 0.0, %v4841
    %v4843 = vpop.f32.mrb[0].mxu0
    %v4844 = vpop.f32.mrb[0].mxu0
    %v4845 = vpop.f32.mrb[0].mxu0
    %4846 = vdwg.mxu0
    %v4847 = vadd.f32 %v4735, %v4842
    %v4848 = vld [vmem:[%s10] sm:$0x1]
    %v4850 = vlaneseq
    %v4851 = vshrl.u32 %v4850, 7
    %v4852 = vsub.s32 0, %v4851
    %v4853 = vrot.slane %v4848, %v4852
    %v4855 = vadd.f32 %v4847, %v4853
    %vm4856 = vcmask 60416
    %4857 = vst.msk [vmem:[%s15] sm:$0xf] %vm4856, %v4855
    // Predicated region
    $region62: #{forward.1} parent=1 // pred_check
      _
    $region63: #{forward.1} parent=1 // pred_check_branch
      %4859 = sbr.rel (0) target = $region65
    $region64: #{forward.1} parent=1 // pred_region
      _
    $region65: #{forward.1} parent=1 // pred_fallthru
      _
    // Predicated region
    $region66: #{forward.1} parent=1 // pred_check
      _
    $region67: #{forward.1} parent=1 // pred_check_branch
      %4861 = sbr.rel (0) target = $region69
    $region68: #{forward.1} parent=1 // pred_region
      _
    $region69: #{forward.1} parent=1 // pred_fallthru
      _
    // Predicated region
    $region70: #{forward.1} parent=1 // pred_check
      _
    $region71: #{forward.1} parent=1 // pred_check_branch
      %4863 = sbr.rel (0) target = $region73
    $region72: #{forward.1} parent=1 // pred_region
      _
    $region73: #{forward.1} parent=1 // pred_fallthru
      _
    // Predicated region
    $region74: #{forward.1} parent=1 // pred_check
      _
    $region75: #{forward.1} parent=1 // pred_check_branch
      %4865 = sbr.rel (0) target = $region77
    $region76: #{forward.1} parent=1 // pred_region
      _
    $region77: #{forward.1} parent=1 // pred_fallthru
      _
    // Predicated region
    $region78: #{forward.1} parent=1 // pred_check
      _
    $region79: #{forward.1} parent=1 // pred_check_branch
      %4867 = sbr.rel (0) target = $region81
    $region80: #{forward.1} parent=1 // pred_region
      _
    $region81: #{forward.1} parent=1 // pred_fallthru
      _
    // Predicated region
    $region82: #{forward.1} parent=1 // pred_check
      _
    $region83: #{forward.1} parent=1 // pred_check_branch
      %4869 = sbr.rel (0) target = $region85
    $region84: #{forward.1} parent=1 // pred_region
      _
    $region85: #{forward.1} parent=1 // pred_fallthru
      _
    // Predicated region
    $region86: #{forward.1} parent=1 // pred_check
      _
    $region87: #{forward.1} parent=1 // pred_check_branch
      %4871 = sbr.rel (0) target = $region89
    $region88: #{forward.1} parent=1 // pred_region
      _
    $region89: #{forward.1} parent=1 // pred_fallthru
      _
    // Predicated region
    $region90: #{forward.1} parent=1 // pred_check
      _
    $region91: #{forward.1} parent=1 // pred_check_branch
      %4873 = sbr.rel (0) target = $region93
    $region92: #{forward.1} parent=1 // pred_region
      _
    $region93: #{forward.1} parent=1 // pred_fallthru
      _
    // Predicated region
    $region94: #{forward.1} parent=1 // pred_check
      _
    $region95: #{forward.1} parent=1 // pred_check_branch
      %4875 = sbr.rel (0) target = $region97
    $region96: #{forward.1} parent=1 // pred_region
      _
    $region97: #{forward.1} parent=1 // pred_fallthru
      _
    // Predicated region
    $region98: #{forward.1} parent=1 // pred_check
      _
    $region99: #{forward.1} parent=1 // pred_check_branch
      %4877 = sbr.rel (0) target = $region101
    $region100: #{forward.1} parent=1 // pred_region
      _
    $region101: #{forward.1} parent=1 // pred_fallthru
      _
    %4878 = vsyncpa [#allocation6], 1
    %4879 = vsyncpa [#allocation8], 1
    %4880 = vsyncpa [#allocation11], 1

</llo_original>
